<compile_context>
chip_gen: v5e
topology: v5e:2x2
jax: 0.10.0
libtpu: 0.0.40
codegen_flags: <defaults>
</compile_context>

<pallas_src>
import functools
import math

import jax
import jax.numpy as jnp
import numpy as np
from jax.experimental import pallas as pl
from jax.experimental.pallas import tpu as pltpu


# ----------------------------------------------------------------------------
# Pallas kernel: one batch element (grid step) end-to-end.
# ----------------------------------------------------------------------------
def ac_kernel(state_ref, w_attn_ref, w_ff1_ref, w_ff2_ref, w_misc_ref,
              w_heads_ref, pf_ref, action_ref, value_ref, *, cfg, offs):
    d_state = cfg["d_state"]
    d_model = cfg["d_model"]
    d_action = cfg["d_action"]
    n_heads = cfg["n_heads"]
    n_layers = cfg["n_layers"]
    S = cfg["S"]
    dh = d_model // n_heads

    f32 = jnp.float32
    bf16 = jnp.bfloat16

    # ---- packed f32 parameter slab: static, lane-aligned slices --------------
    def p(name):
        start, n = offs[name]
        return pf_ref[:, start:start + n]                       # (1, n) f32

    def layer_norm(x, name):                                    # PyTorch LN, eps=1e-5
        w = p(name + "_w")
        b = p(name + "_b")
        mu = jnp.mean(x, axis=-1, keepdims=True)
        var = jnp.mean(jnp.square(x - mu), axis=-1, keepdims=True)
        return (x - mu) * jax.lax.rsqrt(var + 1e-5) * w + b

    def erf(z):
        # Abramowitz & Stegun 7.1.26 (|err| < 1.5e-7): only exp/mul/add/where,
        # guaranteed to lower on every TPU generation.
        az = jnp.abs(z)
        t = 1.0 / (1.0 + 0.3275911 * az)
        poly = ((((1.061405429 * t - 1.453152027) * t + 1.421413741) * t
                 - 0.284496736) * t + 0.254829592) * t
        y = 1.0 - poly * jnp.exp(-az * az)
        return jnp.where(z < 0.0, -y, y)

    def gelu(x):                                                # exact (erf) GELU
        return 0.5 * x * (1.0 + erf(x * 0.7071067811865476))

    def softmax_last(x):                                        # f32, along lanes
        m = jnp.max(x, axis=-1, keepdims=True)
        e = jnp.exp(x - m)
        return e / jnp.sum(e, axis=-1, keepdims=True)

    def matmul(x, w):                                           # bf16 MXU, f32 acc
        return jnp.dot(x.astype(bf16), w, preferred_element_type=f32)

    # ---- multi-head attention (scale pre-folded into Wq) ---------------------
    def attention(xq, xkv, a, mask, fused):
        b_qkv = p(f"qkv_{a}_b")                                 # (1, 3*d_model)
        if fused:                                               # self-attn: one projection
            qkv = matmul(xq, w_attn_ref[a, :, :3 * d_model]) + b_qkv
            q = qkv[:, :d_model]
            k = qkv[:, d_model:2 * d_model]
            v = qkv[:, 2 * d_model:]
        else:                                                   # cross-attn: q from x, kv from memory
            q = matmul(xq, w_attn_ref[a, :, :d_model]) + b_qkv[:, :d_model]
            kv = matmul(xkv, w_attn_ref[a, :, d_model:3 * d_model]) + b_qkv[:, d_model:]
            k = kv[:, :d_model]
            v = kv[:, d_model:]
        out = None
        for h in range(n_heads):                                # unrolled (n_heads = 2)
            sl = slice(h * dh, (h + 1) * dh)
            s = jax.lax.dot_general(q[:, sl].astype(bf16), k[:, sl].astype(bf16),
                                    (((1,), (1,)), ((), ())),
                                    preferred_element_type=f32)
            if mask is not None:
                s = s + mask
            pr = softmax_last(s)                                # (S, S) f32
            oh = matmul(pr, v[:, sl].astype(bf16))              # (S, dh)
            part = matmul(oh, w_attn_ref[a, sl, 3 * d_model:])  # per-head partial out-proj
            out = part if out is None else out + part
        return out + p(f"o_{a}_b")                              # == concat(heads) @ Wo + bo

    # ---- causal mask (per batch element, S x S) -------------------------------
    row = jax.lax.broadcasted_iota(jnp.int32, (S, S), 0)
    col = jax.lax.broadcasted_iota(jnp.int32, (S, S), 1)
    causal = jnp.where(col <= row, f32(0.0), f32(-1e30))

    # ---- state embedding ------------------------------------------------------
    x_in = state_ref[0]                                         # (S, d_state) f32
    emb = gelu(matmul(layer_norm(x_in, "ln0"),
                      w_misc_ref[0:d_state, :]) + p("emb_b"))   # (S, d_model)

    # ---- transformer decoder (norm_first, relu FF, dropout = identity) --------
    x = emb
    for l in range(n_layers):
        xn = layer_norm(x, f"n1_{l}")
        x = x + attention(xn, xn, 2 * l, causal, fused=True)          # self-attn
        xn = layer_norm(x, f"n2_{l}")
        x = x + attention(xn, emb, 2 * l + 1, None, fused=False)      # cross-attn (memory = emb)
        xn = layer_norm(x, f"n3_{l}")
        hid = jnp.maximum(matmul(xn, w_ff1_ref[l]) + p(f"f1_{l}_b"), 0.0)
        x = x + matmul(hid, w_ff2_ref[l]) + p(f"f2_{l}_b")

    dec_bf = x.astype(bf16)                                     # reused by all heads

    # packed head-weight slab row layout
    r1 = d_model
    r2 = r1 + 128
    r3 = r2 + d_model
    r4 = r3 + 128
    r5 = r4 + 128

    # ---- actor head (direct store) --------------------------------------------
    h = gelu(matmul(dec_bf, w_heads_ref[0:r1, :]) + p("a1_b"))
    h = gelu(matmul(h, w_heads_ref[r1:r2, :]) + p("a2_b"))
    h = layer_norm(h, "aln")
    action_ref[0] = matmul(h, w_heads_ref[r4:r5, 0:d_action]) + p("a3_b")   # (S, d_action)

    # ---- value pooling: softmax over the sequence ------------------------------
    logits = jax.lax.dot_general(w_misc_ref[d_state:d_state + 1, :], dec_bf,
                                 (((1,), (1,)), ((), ())),
                                 preferred_element_type=f32) + p("pool_b")   # (1, S)
    pooled = matmul(softmax_last(logits), dec_bf)               # (1, d_model)

    # ---- value head (direct store) ---------------------------------------------
    h = gelu(matmul(pooled, w_heads_ref[r2:r3, :]) + p("v1_b"))
    h = gelu(matmul(h, w_heads_ref[r3:r4, :]) + p("v2_b"))
    h = layer_norm(h, "vln")
    value_ref[0] = matmul(h, w_heads_ref[r4:r5, d_action:d_action + 1]) + p("v3_b")  # (1, 1)


# ----------------------------------------------------------------------------
# Host-side parameter construction + packing into lane-dense slabs.
# ----------------------------------------------------------------------------
def _pack_f32(entries, align=128):
    """Pack named 1-D f32 params into a single (1, L) slab; offsets lane-aligned."""
    parts, offs, cur = [], {}, 0
    for name, arr in entries:
        arr = np.asarray(arr, np.float32).reshape(-1)
        pad = (-cur) % align
        if pad:
            parts.append(np.zeros(pad, np.float32))
            cur += pad
        offs[name] = (cur, arr.size)
        parts.append(arr)
        cur += arr.size
    pad = (-cur) % align
    if pad:
        parts.append(np.zeros(pad, np.float32))
    return np.concatenate(parts)[None, :], offs


def init_params(key, cfg):
    d_state, d_model = cfg["d_state"], cfg["d_model"]
    d_action, d_ff = cfg["d_action"], cfg["d_ff"]
    n_layers, n_heads = cfg["n_layers"], cfg["n_heads"]
    d_hidden = 128
    dh = d_model // n_heads
    keys = iter(jax.random.split(key, 256))

    def rnd(shape, scl):
        return (scl * np.asarray(jax.random.normal(next(keys), shape, jnp.float32))).astype(np.float32)

    def torch_linear(in_f, out_f):      # PyTorch layout: weight (out, in), bias (out,)
        return rnd((out_f, in_f), 1.0 / np.sqrt(in_f)), rnd((out_f,), 0.02)

    def ln_init(n):                     # randomized so the packed-offset check is meaningful
        return (1.0 + rnd((n,), 0.1)).astype(np.float32), rnd((n,), 0.1)

    # ----------------- raw parameters (torch layout) -> reference dict ---------
    R = {}
    R["ln0_w"], R["ln0_b"] = ln_init(d_state)
    R["emb_w"], R["emb_b"] = torch_linear(d_state, d_model)
    R["layers"] = []
    for _ in range(n_layers):
        L = {}
        L["n1_w"], L["n1_b"] = ln_init(d_model)
        L["sa"] = dict(zip(("in_w", "in_b"), torch_linear(d_model, 3 * d_model)))
        L["sa"]["out_w"], L["sa"]["out_b"] = torch_linear(d_model, d_model)
        L["n2_w"], L["n2_b"] = ln_init(d_model)
        L["ca"] = dict(zip(("in_w", "in_b"), torch_linear(d_model, 3 * d_model)))
        L["ca"]["out_w"], L["ca"]["out_b"] = torch_linear(d_model, d_model)
        L["n3_w"], L["n3_b"] = ln_init(d_model)
        L["f1_w"], L["f1_b"] = torch_linear(d_model, d_ff)
        L["f2_w"], L["f2_b"] = torch_linear(d_ff, d_model)
        R["layers"].append(L)
    R["a1_w"], R["a1_b"] = torch_linear(d_model, d_hidden)
    R["a2_w"], R["a2_b"] = torch_linear(d_hidden, d_hidden)
    R["aln_w"], R["aln_b"] = ln_init(d_hidden)
    R["a3_w"], R["a3_b"] = torch_linear(d_hidden, d_action)
    R["v1_w"], R["v1_b"] = torch_linear(d_model, d_hidden)
    R["v2_w"], R["v2_b"] = torch_linear(d_hidden, d_hidden)
    R["vln_w"], R["vln_b"] = ln_init(d_hidden)
    R["v3_w"], R["v3_b"] = torch_linear(d_hidden, 1)
    R["pool_w"], R["pool_b"] = torch_linear(d_model, 1)

    # ----------------- pack into a few lane-dense slabs ------------------------
    scale = 1.0 / np.sqrt(dh)           # folded into Wq / bq on the host
    attn_slabs, ff1_slabs, ff2_slabs = [], [], []
    f32_entries = [("ln0_w", R["ln0_w"]), ("ln0_b", R["ln0_b"]), ("emb_b", R["emb_b"])]
    for l, L in enumerate(R["layers"]):
        f32_entries += [(f"n1_{l}_w", L["n1_w"]), (f"n1_{l}_b", L["n1_b"]),
                        (f"n2_{l}_w", L["n2_w"]), (f"n2_{l}_b", L["n2_b"]),
                        (f"n3_{l}_w", L["n3_w"]), (f"n3_{l}_b", L["n3_b"]),
                        (f"f1_{l}_b", L["f1_b"]), (f"f2_{l}_b", L["f2_b"])]
        for a, A in ((2 * l, L["sa"]), (2 * l + 1, L["ca"])):
            wq = A["in_w"][:d_model].T * scale                  # (d_model, d_model)
            wkv = A["in_w"][d_model:].T                         # (d_model, 2*d_model)
            attn_slabs.append(np.concatenate([wq, wkv, A["out_w"].T], axis=1))  # (d_model, 4*d_model)
            b_qkv = np.concatenate([A["in_b"][:d_model] * scale, A["in_b"][d_model:]])
            f32_entries += [(f"qkv_{a}_b", b_qkv), (f"o_{a}_b", A["out_b"])]
        ff1_slabs.append(L["f1_w"].T)                           # (d_model, d_ff)
        ff2_slabs.append(L["f2_w"].T)                           # (d_ff, d_model)
    f32_entries += [("a1_b", R["a1_b"]), ("a2_b", R["a2_b"]),
                    ("aln_w", R["aln_w"]), ("aln_b", R["aln_b"]), ("a3_b", R["a3_b"]),
                    ("v1_b", R["v1_b"]), ("v2_b", R["v2_b"]),
                    ("vln_w", R["vln_w"]), ("vln_b", R["vln_b"]), ("v3_b", R["v3_b"]),
                    ("pool_b", R["pool_b"])]

    out_blk = np.zeros((d_hidden, d_hidden), np.float32)        # actor3 cols 0:3, value3 col 3
    out_blk[:, :d_action] = R["a3_w"].T
    out_blk[:, d_action:d_action + 1] = R["v3_w"].T
    w_heads = np.concatenate([R["a1_w"].T, R["a2_w"].T, R["v1_w"].T, R["v2_w"].T, out_blk], axis=0)
    w_misc = np.concatenate([R["emb_w"].T, R["pool_w"]], axis=0)  # (d_state + 1, d_model)

    p_f32, offs = _pack_f32(f32_entries)

    return dict(
        w_attn=jnp.asarray(np.stack(attn_slabs), jnp.bfloat16),   # (2*n_layers, d_model, 4*d_model)
        w_ff1=jnp.asarray(np.stack(ff1_slabs), jnp.bfloat16),     # (n_layers, d_model, d_ff)
        w_ff2=jnp.asarray(np.stack(ff2_slabs), jnp.bfloat16),     # (n_layers, d_ff, d_model)
        w_misc=jnp.asarray(w_misc, jnp.bfloat16),                 # (d_state+1, d_model)
        w_heads=jnp.asarray(w_heads, jnp.bfloat16),               # (2*d_model+3*128, 128)
        p_f32=jnp.asarray(p_f32, jnp.float32),                    # (1, L)
        offs=offs,
        ref=R,
    )


# ----------------------------------------------------------------------------
# Wrapper
# ----------------------------------------------------------------------------
def actor_critic_forward(state, params, cfg):
    B, S, d_state = state.shape
    d_action = cfg["d_action"]
    kernel = functools.partial(ac_kernel, cfg=dict(cfg, S=S), offs=params["offs"])

    def full_spec(arr):                     # weights: whole array resident, never re-fetched
        zeros = (0,) * arr.ndim
        return pl.BlockSpec(arr.shape, lambda b: zeros)

    weights = (params["w_attn"], params["w_ff1"], params["w_ff2"],
               params["w_misc"], params["w_heads"], params["p_f32"])

    action, value = pl.pallas_call(
        kernel,
        grid=(B,),
        in_specs=[pl.BlockSpec((1, S, d_state), lambda b: (b, 0, 0))]
                 + [full_spec(w) for w in weights],
        out_specs=(pl.BlockSpec((1, S, d_action), lambda b: (b, 0, 0)),
                   pl.BlockSpec((1, 1, 1), lambda b: (b, 0, 0))),
        out_shape=(jax.ShapeDtypeStruct((B, S, d_action), jnp.float32),
                   jax.ShapeDtypeStruct((B, 1, 1), jnp.float32)),
        compiler_params=pltpu.CompilerParams(dimension_semantics=("parallel",)),
    )(state, *weights)
    return action, value.reshape(B, 1)


# ----------------------------------------------------------------------------
# Pure numpy (float64) reference mirroring the PyTorch module's forward.
# ----------------------------------------------------------------------------
def reference_forward(state, R, cfg):
    d_model, n_heads = cfg["d_model"], cfg["n_heads"]
    dh = d_model // n_heads
    B, S, _ = state.shape
    erf_np = np.vectorize(math.erf)

    def gelu(x): return 0.5 * x * (1.0 + erf_np(x / math.sqrt(2.0)))

    def lnorm(x, w, b):
        mu = x.mean(-1, keepdims=True)
        var = ((x - mu) ** 2).mean(-1, keepdims=True)
        return (x - mu) / np.sqrt(var + 1e-5) * w + b

    def softmax(x):
        m = x.max(-1, keepdims=True)
        e = np.exp(x - m)
        return e / e.sum(-1, keepdims=True)

    def lin(x, w, b): return x @ w.T + b

    def mha(xq, xkv, A, mask):
        q = lin(xq, A["in_w"][:d_model], A["in_b"][:d_model])
        k = lin(xkv, A["in_w"][d_model:2 * d_model], A["in_b"][d_model:2 * d_model])
        v = lin(xkv, A["in_w"][2 * d_model:], A["in_b"][2 * d_model:])
        heads = []
        for h in range(n_heads):
            sl = slice(h * dh, (h + 1) * dh)
            s = q[:, sl] @ k[:, sl].T / math.sqrt(dh)
            if mask is not None:
                s = s + mask
            heads.append(softmax(s) @ v[:, sl])
        return lin(np.concatenate(heads, axis=-1), A["out_w"], A["out_b"])

    mask = np.where(np.tril(np.ones((S, S))) > 0.0, 0.0, -np.inf)
    actions, values = [], []
    for b in range(B):
        xb = np.asarray(state[b], np.float64)
        emb = gelu(lin(lnorm(xb, R["ln0_w"], R["ln0_b"]), R["emb_w"], R["emb_b"]))
        x = emb
        for L in R["layers"]:
            xn = lnorm(x, L["n1_w"], L["n1_b"])
            x = x + mha(xn, xn, L["sa"], mask)
            xn = lnorm(x, L["n2_w"], L["n2_b"])
            x = x + mha(xn, emb, L["ca"], None)
            xn = lnorm(x, L["n3_w"], L["n3_b"])
            x = x + lin(np.maximum(lin(xn, L["f1_w"], L["f1_b"]), 0.0), L["f2_w"], L["f2_b"])
        h = gelu(lin(x, R["a1_w"], R["a1_b"]))
        h = gelu(lin(h, R["a2_w"], R["a2_b"]))
        h = lnorm(h, R["aln_w"], R["aln_b"])
        actions.append(lin(h, R["a3_w"], R["a3_b"]))
        logits = lin(x, R["pool_w"], R["pool_b"])[:, 0]
        wp = np.exp(logits - logits.max())
        wp = wp / wp.sum()
        h = gelu(lin(wp @ x, R["v1_w"], R["v1_b"]))
        h = gelu(lin(h, R["v2_w"], R["v2_b"]))
        h = lnorm(h, R["vln_w"], R["vln_b"])
        values.append(lin(h, R["v3_w"], R["v3_b"]))
    return np.stack(actions), np.stack(values)


if __name__ == "__main__":
    # small shapes: batch=2, n_agents(seq)=8, d_state=12, d_action=3
    B, S = 2, 8
    cfg = dict(d_state=12, d_action=3, d_model=64, n_heads=2, n_layers=2, d_ff=1024)

    key = jax.random.PRNGKey(0)
    pkey, skey = jax.random.split(key)
    params = init_params(pkey, cfg)
    state = jax.random.normal(skey, (B, S, cfg["d_state"]), jnp.float32)

    action_mean, value = actor_critic_forward(state, params, cfg)
    jax.block_until_ready((action_mean, value))

    assert action_mean.shape == (B, S, cfg["d_action"])
    assert value.shape == (B, 1)
    assert bool(jnp.all(jnp.isfinite(action_mean))) and bool(jnp.all(jnp.isfinite(value)))

    # tolerance check vs float64 reference (kernel runs bf16 MXU matmuls).
    ref_a, ref_v = reference_forward(np.asarray(state), params["ref"], cfg)
    assert float(np.max(np.abs(np.asarray(action_mean, np.float64) - ref_a))) < 0.25
    assert float(np.max(np.abs(np.asarray(value, np.float64) - ref_v))) < 0.25

    print("KERNEL_OK")
</pallas_src>

<mosaic_0001>
module attributes {stable_mosaic.version = 11 : i64} {
  func.func @ac_kernel(%arg0: i32, %arg1: memref<1x8x12xf32, #tpu.memory_space<vmem>>, %arg2: memref<4x64x256xbf16, #tpu.memory_space<vmem>>, %arg3: memref<2x64x1024xbf16, #tpu.memory_space<vmem>>, %arg4: memref<2x1024x64xbf16, #tpu.memory_space<vmem>>, %arg5: memref<13x64xbf16, #tpu.memory_space<vmem>>, %arg6: memref<512x128xbf16, #tpu.memory_space<vmem>>, %arg7: memref<1x7168xf32, #tpu.memory_space<vmem>>, %arg8: memref<1x8x3xf32, #tpu.memory_space<vmem>>, %arg9: memref<1x1x1xf32, #tpu.memory_space<vmem>>) attributes {dimension_semantics = [#tpu.dimension_semantics<parallel>], iteration_bounds = array<i64: 2>, scalar_prefetch = 0 : i64, scratch_operands = 0 : i64, tpu.core_type = #tpu.core_type<tc>, window_params = [{transform_indices = @transform_0, window_bounds = array<i64: 1, 8, 12>}, {pipeline_mode = #tpu.pipeline_mode<synchronous>, transform_indices = @transform_1, window_bounds = array<i64: 4, 64, 256>}, {pipeline_mode = #tpu.pipeline_mode<synchronous>, transform_indices = @transform_2, window_bounds = array<i64: 2, 64, 1024>}, {pipeline_mode = #tpu.pipeline_mode<synchronous>, transform_indices = @transform_3, window_bounds = array<i64: 2, 1024, 64>}, {pipeline_mode = #tpu.pipeline_mode<synchronous>, transform_indices = @transform_4, window_bounds = array<i64: 13, 64>}, {pipeline_mode = #tpu.pipeline_mode<synchronous>, transform_indices = @transform_5, window_bounds = array<i64: 512, 128>}, {pipeline_mode = #tpu.pipeline_mode<synchronous>, transform_indices = @transform_6, window_bounds = array<i64: 1, 7168>}, {transform_indices = @transform_7, window_bounds = array<i64: 1, 8, 3>}, {transform_indices = @transform_8, window_bounds = array<i64: 1, 1, 1>}]} {
    %0 = tpu.iota {dimensions = array<i32: 0>} : vector<8x8xi32>
    %1 = tpu.iota {dimensions = array<i32: 1>} : vector<8x8xi32>
    %2 = arith.cmpi sle, %1, %0 : vector<8x8xi32>
    %cst = arith.constant 0.000000e+00 : f32
    %cst_0 = arith.constant -1.000000e+30 : f32
    %3 = vector.broadcast %cst : f32 to vector<8x8xf32>
    %4 = vector.broadcast %cst_0 : f32 to vector<8x8xf32>
    %5 = arith.select %2, %3, %4 : vector<8x8xi1>, vector<8x8xf32>
    %c0 = arith.constant 0 : index
    %c0_1 = arith.constant 0 : index
    %c0_2 = arith.constant 0 : index
    %6 = vector.load %arg1[%c0, %c0_1, %c0_2] : memref<1x8x12xf32, #tpu.memory_space<vmem>>, vector<1x8x12xf32>
    %7 = vector.shape_cast %6 : vector<1x8x12xf32> to vector<8x12xf32>
    %c0_3 = arith.constant 0 : index
    %c0_4 = arith.constant 0 : index
    %8 = vector.load %arg7[%c0_3, %c0_4] : memref<1x7168xf32, #tpu.memory_space<vmem>>, vector<1x12xf32>
    %c0_5 = arith.constant 0 : index
    %c128 = arith.constant 128 : index
    %9 = vector.load %arg7[%c0_5, %c128] : memref<1x7168xf32, #tpu.memory_space<vmem>>, vector<1x12xf32>
    %cst_6 = arith.constant dense<0.000000e+00> : vector<8xf32>
    %10 = vector.multi_reduction <add>, %7, %cst_6 [1] : vector<8x12xf32> to vector<8xf32>
    %11 = vector.shape_cast %10 : vector<8xf32> to vector<8x1xf32>
    %cst_7 = arith.constant 1.200000e+01 : f32
    %12 = vector.broadcast %cst_7 : f32 to vector<8x1xf32>
    %13 = arith.divf %11, %12 : vector<8x1xf32>
    %14 = vector.broadcast %13 : vector<8x1xf32> to vector<8x12xf32>
    %15 = arith.subf %7, %14 : vector<8x12xf32>
    %16 = arith.mulf %15, %15 : vector<8x12xf32>
    %cst_8 = arith.constant dense<0.000000e+00> : vector<8xf32>
    %17 = vector.multi_reduction <add>, %16, %cst_8 [1] : vector<8x12xf32> to vector<8xf32>
    %18 = vector.shape_cast %17 : vector<8xf32> to vector<8x1xf32>
    %cst_9 = arith.constant 1.200000e+01 : f32
    %19 = vector.broadcast %cst_9 : f32 to vector<8x1xf32>
    %20 = arith.divf %18, %19 : vector<8x1xf32>
    %21 = vector.broadcast %13 : vector<8x1xf32> to vector<8x12xf32>
    %22 = arith.subf %7, %21 : vector<8x12xf32>
    %cst_10 = arith.constant 9.99999974E-6 : f32
    %23 = vector.broadcast %cst_10 : f32 to vector<8x1xf32>
    %24 = arith.addf %20, %23 : vector<8x1xf32>
    %25 = math.rsqrt %24 : vector<8x1xf32>
    %26 = vector.broadcast %25 : vector<8x1xf32> to vector<8x12xf32>
    %27 = arith.mulf %22, %26 : vector<8x12xf32>
    %28 = vector.broadcast %8 : vector<1x12xf32> to vector<8x12xf32>
    %29 = arith.mulf %27, %28 : vector<8x12xf32>
    %30 = vector.broadcast %9 : vector<1x12xf32> to vector<8x12xf32>
    %31 = arith.addf %29, %30 : vector<8x12xf32>
    %c0_11 = arith.constant 0 : index
    %c0_12 = arith.constant 0 : index
    %32 = vector.load %arg5[%c0_11, %c0_12] : memref<13x64xbf16, #tpu.memory_space<vmem>>, vector<12x64xbf16>
    %33 = arith.truncf %31 : vector<8x12xf32> to vector<8x12xbf16>
    %cst_13 = arith.constant dense<0.000000e+00> : vector<8x64xf32>
    %34 = tpu.matmul %33, %32, %cst_13 {dimension_numbers = #tpu.dot_dimension_numbers<[1], [0], [0], [1], [0, 0, 1, 1], [], []>} : vector<8x12xbf16>, vector<12x64xbf16>, vector<8x64xf32> -> vector<8x64xf32>
    %c0_14 = arith.constant 0 : index
    %c256 = arith.constant 256 : index
    %35 = vector.load %arg7[%c0_14, %c256] : memref<1x7168xf32, #tpu.memory_space<vmem>>, vector<1x64xf32>
    %36 = vector.broadcast %35 : vector<1x64xf32> to vector<8x64xf32>
    %37 = arith.addf %34, %36 : vector<8x64xf32>
    %cst_15 = arith.constant 5.000000e-01 : f32
    %38 = vector.broadcast %cst_15 : f32 to vector<8x64xf32>
    %39 = arith.mulf %38, %37 : vector<8x64xf32>
    %cst_16 = arith.constant 0.707106769 : f32
    %40 = vector.broadcast %cst_16 : f32 to vector<8x64xf32>
    %41 = arith.mulf %37, %40 : vector<8x64xf32>
    %42 = math.absf %41 : vector<8x64xf32>
    %cst_17 = arith.constant 0.327591091 : f32
    %43 = vector.broadcast %cst_17 : f32 to vector<8x64xf32>
    %44 = arith.mulf %43, %42 : vector<8x64xf32>
    %cst_18 = arith.constant 1.000000e+00 : f32
    %45 = vector.broadcast %cst_18 : f32 to vector<8x64xf32>
    %46 = arith.addf %45, %44 : vector<8x64xf32>
    %cst_19 = arith.constant 1.000000e+00 : f32
    %47 = vector.broadcast %cst_19 : f32 to vector<8x64xf32>
    %48 = arith.divf %47, %46 : vector<8x64xf32>
    %cst_20 = arith.constant 1.06140542 : f32
    %49 = vector.broadcast %cst_20 : f32 to vector<8x64xf32>
    %50 = arith.mulf %49, %48 : vector<8x64xf32>
    %cst_21 = arith.constant 1.45315206 : f32
    %51 = vector.broadcast %cst_21 : f32 to vector<8x64xf32>
    %52 = arith.subf %50, %51 : vector<8x64xf32>
    %53 = arith.mulf %52, %48 : vector<8x64xf32>
    %cst_22 = arith.constant 1.42141378 : f32
    %54 = vector.broadcast %cst_22 : f32 to vector<8x64xf32>
    %55 = arith.addf %53, %54 : vector<8x64xf32>
    %56 = arith.mulf %55, %48 : vector<8x64xf32>
    %cst_23 = arith.constant 0.284496725 : f32
    %57 = vector.broadcast %cst_23 : f32 to vector<8x64xf32>
    %58 = arith.subf %56, %57 : vector<8x64xf32>
    %59 = arith.mulf %58, %48 : vector<8x64xf32>
    %cst_24 = arith.constant 0.254829586 : f32
    %60 = vector.broadcast %cst_24 : f32 to vector<8x64xf32>
    %61 = arith.addf %59, %60 : vector<8x64xf32>
    %62 = arith.mulf %61, %48 : vector<8x64xf32>
    %cst_25 = arith.constant 0.000000e+00 : f32
    %63 = vector.broadcast %cst_25 : f32 to vector<8x64xf32>
    %64 = arith.subf %63, %42 : vector<8x64xf32>
    %65 = arith.mulf %64, %42 : vector<8x64xf32>
    %66 = math.exp %65 : vector<8x64xf32>
    %67 = arith.mulf %62, %66 : vector<8x64xf32>
    %cst_26 = arith.constant 1.000000e+00 : f32
    %68 = vector.broadcast %cst_26 : f32 to vector<8x64xf32>
    %69 = arith.subf %68, %67 : vector<8x64xf32>
    %cst_27 = arith.constant 0.000000e+00 : f32
    %70 = vector.broadcast %cst_27 : f32 to vector<8x64xf32>
    %71 = arith.cmpf olt, %41, %70 : vector<8x64xf32>
    %cst_28 = arith.constant 0.000000e+00 : f32
    %72 = vector.broadcast %cst_28 : f32 to vector<8x64xf32>
    %73 = arith.subf %72, %69 : vector<8x64xf32>
    %74 = arith.select %71, %73, %69 : vector<8x64xi1>, vector<8x64xf32>
    %cst_29 = arith.constant 1.000000e+00 : f32
    %75 = vector.broadcast %cst_29 : f32 to vector<8x64xf32>
    %76 = arith.addf %75, %74 : vector<8x64xf32>
    %77 = arith.mulf %39, %76 : vector<8x64xf32>
    %c0_30 = arith.constant 0 : index
    %c384 = arith.constant 384 : index
    %78 = vector.load %arg7[%c0_30, %c384] : memref<1x7168xf32, #tpu.memory_space<vmem>>, vector<1x64xf32>
    %c0_31 = arith.constant 0 : index
    %c512 = arith.constant 512 : index
    %79 = vector.load %arg7[%c0_31, %c512] : memref<1x7168xf32, #tpu.memory_space<vmem>>, vector<1x64xf32>
    %cst_32 = arith.constant dense<0.000000e+00> : vector<8xf32>
    %80 = vector.multi_reduction <add>, %77, %cst_32 [1] : vector<8x64xf32> to vector<8xf32>
    %81 = vector.shape_cast %80 : vector<8xf32> to vector<8x1xf32>
    %cst_33 = arith.constant 6.400000e+01 : f32
    %82 = vector.broadcast %cst_33 : f32 to vector<8x1xf32>
    %83 = arith.divf %81, %82 : vector<8x1xf32>
    %84 = vector.broadcast %83 : vector<8x1xf32> to vector<8x64xf32>
    %85 = arith.subf %77, %84 : vector<8x64xf32>
    %86 = arith.mulf %85, %85 : vector<8x64xf32>
    %cst_34 = arith.constant dense<0.000000e+00> : vector<8xf32>
    %87 = vector.multi_reduction <add>, %86, %cst_34 [1] : vector<8x64xf32> to vector<8xf32>
    %88 = vector.shape_cast %87 : vector<8xf32> to vector<8x1xf32>
    %cst_35 = arith.constant 6.400000e+01 : f32
    %89 = vector.broadcast %cst_35 : f32 to vector<8x1xf32>
    %90 = arith.divf %88, %89 : vector<8x1xf32>
    %91 = vector.broadcast %83 : vector<8x1xf32> to vector<8x64xf32>
    %92 = arith.subf %77, %91 : vector<8x64xf32>
    %cst_36 = arith.constant 9.99999974E-6 : f32
    %93 = vector.broadcast %cst_36 : f32 to vector<8x1xf32>
    %94 = arith.addf %90, %93 : vector<8x1xf32>
    %95 = math.rsqrt %94 : vector<8x1xf32>
    %96 = vector.broadcast %95 : vector<8x1xf32> to vector<8x64xf32>
    %97 = arith.mulf %92, %96 : vector<8x64xf32>
    %98 = vector.broadcast %78 : vector<1x64xf32> to vector<8x64xf32>
    %99 = arith.mulf %97, %98 : vector<8x64xf32>
    %100 = vector.broadcast %79 : vector<1x64xf32> to vector<8x64xf32>
    %101 = arith.addf %99, %100 : vector<8x64xf32>
    %c0_37 = arith.constant 0 : index
    %c2304 = arith.constant 2304 : index
    %102 = vector.load %arg7[%c0_37, %c2304] : memref<1x7168xf32, #tpu.memory_space<vmem>>, vector<1x192xf32>
    %c0_38 = arith.constant 0 : index
    %c0_39 = arith.constant 0 : index
    %c0_40 = arith.constant 0 : index
    %103 = vector.load %arg2[%c0_38, %c0_39, %c0_40] : memref<4x64x256xbf16, #tpu.memory_space<vmem>>, vector<1x64x192xbf16>
    %104 = vector.shape_cast %103 : vector<1x64x192xbf16> to vector<64x192xbf16>
    %105 = arith.truncf %101 : vector<8x64xf32> to vector<8x64xbf16>
    %cst_41 = arith.constant dense<0.000000e+00> : vector<8x192xf32>
    %106 = tpu.matmul %105, %104, %cst_41 {dimension_numbers = #tpu.dot_dimension_numbers<[1], [0], [0], [1], [0, 0, 1, 1], [], []>} : vector<8x64xbf16>, vector<64x192xbf16>, vector<8x192xf32> -> vector<8x192xf32>
    %107 = vector.broadcast %102 : vector<1x192xf32> to vector<8x192xf32>
    %108 = arith.addf %106, %107 : vector<8x192xf32>
    %109 = vector.extract_strided_slice %108 {offsets = [0, 0], sizes = [8, 64], strides = [1, 1]} : vector<8x192xf32> to vector<8x64xf32>
    %110 = vector.extract_strided_slice %108 {offsets = [0, 64], sizes = [8, 64], strides = [1, 1]} : vector<8x192xf32> to vector<8x64xf32>
    %111 = vector.extract_strided_slice %108 {offsets = [0, 128], sizes = [8, 64], strides = [1, 1]} : vector<8x192xf32> to vector<8x64xf32>
    %112 = vector.extract_strided_slice %109 {offsets = [0, 0], sizes = [8, 32], strides = [1, 1]} : vector<8x64xf32> to vector<8x32xf32>
    %113 = arith.truncf %112 : vector<8x32xf32> to vector<8x32xbf16>
    %114 = vector.extract_strided_slice %110 {offsets = [0, 0], sizes = [8, 32], strides = [1, 1]} : vector<8x64xf32> to vector<8x32xf32>
    %115 = arith.truncf %114 : vector<8x32xf32> to vector<8x32xbf16>
    %cst_42 = arith.constant dense<0.000000e+00> : vector<8x8xf32>
    %116 = tpu.matmul %113, %115, %cst_42 {dimension_numbers = #tpu.dot_dimension_numbers<[1], [1], [0], [0], [0, 0, 1, 0], [], []>} : vector<8x32xbf16>, vector<8x32xbf16>, vector<8x8xf32> -> vector<8x8xf32>
    %117 = arith.addf %116, %5 : vector<8x8xf32>
    %cst_43 = arith.constant dense<0xFF800000> : vector<8xf32>
    %118 = vector.multi_reduction <maximumf>, %117, %cst_43 [1] : vector<8x8xf32> to vector<8xf32>
    %119 = vector.shape_cast %118 : vector<8xf32> to vector<8x1xf32>
    %120 = vector.broadcast %119 : vector<8x1xf32> to vector<8x8xf32>
    %121 = arith.subf %117, %120 : vector<8x8xf32>
    %122 = math.exp %121 : vector<8x8xf32>
    %cst_44 = arith.constant dense<0.000000e+00> : vector<8xf32>
    %123 = vector.multi_reduction <add>, %122, %cst_44 [1] : vector<8x8xf32> to vector<8xf32>
    %124 = vector.shape_cast %123 : vector<8xf32> to vector<8x1xf32>
    %125 = vector.broadcast %124 : vector<8x1xf32> to vector<8x8xf32>
    %126 = arith.divf %122, %125 : vector<8x8xf32>
    %127 = vector.extract_strided_slice %111 {offsets = [0, 0], sizes = [8, 32], strides = [1, 1]} : vector<8x64xf32> to vector<8x32xf32>
    %128 = arith.truncf %127 : vector<8x32xf32> to vector<8x32xbf16>
    %129 = arith.truncf %126 : vector<8x8xf32> to vector<8x8xbf16>
    %cst_45 = arith.constant dense<0.000000e+00> : vector<8x32xf32>
    %130 = tpu.matmul %129, %128, %cst_45 {dimension_numbers = #tpu.dot_dimension_numbers<[1], [0], [0], [1], [0, 0, 1, 1], [], []>} : vector<8x8xbf16>, vector<8x32xbf16>, vector<8x32xf32> -> vector<8x32xf32>
    %c0_46 = arith.constant 0 : index
    %c0_47 = arith.constant 0 : index
    %c192 = arith.constant 192 : index
    %131 = vector.load %arg2[%c0_46, %c0_47, %c192] : memref<4x64x256xbf16, #tpu.memory_space<vmem>>, vector<1x32x64xbf16>
    %132 = vector.shape_cast %131 : vector<1x32x64xbf16> to vector<32x64xbf16>
    %133 = arith.truncf %130 : vector<8x32xf32> to vector<8x32xbf16>
    %cst_48 = arith.constant dense<0.000000e+00> : vector<8x64xf32>
    %134 = tpu.matmul %133, %132, %cst_48 {dimension_numbers = #tpu.dot_dimension_numbers<[1], [0], [0], [1], [0, 0, 1, 1], [], []>} : vector<8x32xbf16>, vector<32x64xbf16>, vector<8x64xf32> -> vector<8x64xf32>
    %135 = vector.extract_strided_slice %109 {offsets = [0, 32], sizes = [8, 32], strides = [1, 1]} : vector<8x64xf32> to vector<8x32xf32>
    %136 = arith.truncf %135 : vector<8x32xf32> to vector<8x32xbf16>
    %137 = vector.extract_strided_slice %110 {offsets = [0, 32], sizes = [8, 32], strides = [1, 1]} : vector<8x64xf32> to vector<8x32xf32>
    %138 = arith.truncf %137 : vector<8x32xf32> to vector<8x32xbf16>
    %cst_49 = arith.constant dense<0.000000e+00> : vector<8x8xf32>
    %139 = tpu.matmul %136, %138, %cst_49 {dimension_numbers = #tpu.dot_dimension_numbers<[1], [1], [0], [0], [0, 0, 1, 0], [], []>} : vector<8x32xbf16>, vector<8x32xbf16>, vector<8x8xf32> -> vector<8x8xf32>
    %140 = arith.addf %139, %5 : vector<8x8xf32>
    %cst_50 = arith.constant dense<0xFF800000> : vector<8xf32>
    %141 = vector.multi_reduction <maximumf>, %140, %cst_50 [1] : vector<8x8xf32> to vector<8xf32>
    %142 = vector.shape_cast %141 : vector<8xf32> to vector<8x1xf32>
    %143 = vector.broadcast %142 : vector<8x1xf32> to vector<8x8xf32>
    %144 = arith.subf %140, %143 : vector<8x8xf32>
    %145 = math.exp %144 : vector<8x8xf32>
    %cst_51 = arith.constant dense<0.000000e+00> : vector<8xf32>
    %146 = vector.multi_reduction <add>, %145, %cst_51 [1] : vector<8x8xf32> to vector<8xf32>
    %147 = vector.shape_cast %146 : vector<8xf32> to vector<8x1xf32>
    %148 = vector.broadcast %147 : vector<8x1xf32> to vector<8x8xf32>
    %149 = arith.divf %145, %148 : vector<8x8xf32>
    %150 = vector.extract_strided_slice %111 {offsets = [0, 32], sizes = [8, 32], strides = [1, 1]} : vector<8x64xf32> to vector<8x32xf32>
    %151 = arith.truncf %150 : vector<8x32xf32> to vector<8x32xbf16>
    %152 = arith.truncf %149 : vector<8x8xf32> to vector<8x8xbf16>
    %cst_52 = arith.constant dense<0.000000e+00> : vector<8x32xf32>
    %153 = tpu.matmul %152, %151, %cst_52 {dimension_numbers = #tpu.dot_dimension_numbers<[1], [0], [0], [1], [0, 0, 1, 1], [], []>} : vector<8x8xbf16>, vector<8x32xbf16>, vector<8x32xf32> -> vector<8x32xf32>
    %c0_53 = arith.constant 0 : index
    %c32 = arith.constant 32 : index
    %c192_54 = arith.constant 192 : index
    %154 = vector.load %arg2[%c0_53, %c32, %c192_54] : memref<4x64x256xbf16, #tpu.memory_space<vmem>>, vector<1x32x64xbf16>
    %155 = vector.shape_cast %154 : vector<1x32x64xbf16> to vector<32x64xbf16>
    %156 = arith.truncf %153 : vector<8x32xf32> to vector<8x32xbf16>
    %cst_55 = arith.constant dense<0.000000e+00> : vector<8x64xf32>
    %157 = tpu.matmul %156, %155, %cst_55 {dimension_numbers = #tpu.dot_dimension_numbers<[1], [0], [0], [1], [0, 0, 1, 1], [], []>} : vector<8x32xbf16>, vector<32x64xbf16>, vector<8x64xf32> -> vector<8x64xf32>
    %158 = arith.addf %134, %157 : vector<8x64xf32>
    %c0_56 = arith.constant 0 : index
    %c2560 = arith.constant 2560 : index
    %159 = vector.load %arg7[%c0_56, %c2560] : memref<1x7168xf32, #tpu.memory_space<vmem>>, vector<1x64xf32>
    %160 = vector.broadcast %159 : vector<1x64xf32> to vector<8x64xf32>
    %161 = arith.addf %158, %160 : vector<8x64xf32>
    %162 = arith.addf %77, %161 : vector<8x64xf32>
    %c0_57 = arith.constant 0 : index
    %c640 = arith.constant 640 : index
    %163 = vector.load %arg7[%c0_57, %c640] : memref<1x7168xf32, #tpu.memory_space<vmem>>, vector<1x64xf32>
    %c0_58 = arith.constant 0 : index
    %c768 = arith.constant 768 : index
    %164 = vector.load %arg7[%c0_58, %c768] : memref<1x7168xf32, #tpu.memory_space<vmem>>, vector<1x64xf32>
    %cst_59 = arith.constant dense<0.000000e+00> : vector<8xf32>
    %165 = vector.multi_reduction <add>, %162, %cst_59 [1] : vector<8x64xf32> to vector<8xf32>
    %166 = vector.shape_cast %165 : vector<8xf32> to vector<8x1xf32>
    %cst_60 = arith.constant 6.400000e+01 : f32
    %167 = vector.broadcast %cst_60 : f32 to vector<8x1xf32>
    %168 = arith.divf %166, %167 : vector<8x1xf32>
    %169 = vector.broadcast %168 : vector<8x1xf32> to vector<8x64xf32>
    %170 = arith.subf %162, %169 : vector<8x64xf32>
    %171 = arith.mulf %170, %170 : vector<8x64xf32>
    %cst_61 = arith.constant dense<0.000000e+00> : vector<8xf32>
    %172 = vector.multi_reduction <add>, %171, %cst_61 [1] : vector<8x64xf32> to vector<8xf32>
    %173 = vector.shape_cast %172 : vector<8xf32> to vector<8x1xf32>
    %cst_62 = arith.constant 6.400000e+01 : f32
    %174 = vector.broadcast %cst_62 : f32 to vector<8x1xf32>
    %175 = arith.divf %173, %174 : vector<8x1xf32>
    %176 = vector.broadcast %168 : vector<8x1xf32> to vector<8x64xf32>
    %177 = arith.subf %162, %176 : vector<8x64xf32>
    %cst_63 = arith.constant 9.99999974E-6 : f32
    %178 = vector.broadcast %cst_63 : f32 to vector<8x1xf32>
    %179 = arith.addf %175, %178 : vector<8x1xf32>
    %180 = math.rsqrt %179 : vector<8x1xf32>
    %181 = vector.broadcast %180 : vector<8x1xf32> to vector<8x64xf32>
    %182 = arith.mulf %177, %181 : vector<8x64xf32>
    %183 = vector.broadcast %163 : vector<1x64xf32> to vector<8x64xf32>
    %184 = arith.mulf %182, %183 : vector<8x64xf32>
    %185 = vector.broadcast %164 : vector<1x64xf32> to vector<8x64xf32>
    %186 = arith.addf %184, %185 : vector<8x64xf32>
    %c0_64 = arith.constant 0 : index
    %c2688 = arith.constant 2688 : index
    %187 = vector.load %arg7[%c0_64, %c2688] : memref<1x7168xf32, #tpu.memory_space<vmem>>, vector<1x192xf32>
    %c1 = arith.constant 1 : index
    %c0_65 = arith.constant 0 : index
    %c0_66 = arith.constant 0 : index
    %188 = vector.load %arg2[%c1, %c0_65, %c0_66] : memref<4x64x256xbf16, #tpu.memory_space<vmem>>, vector<1x64x64xbf16>
    %189 = vector.shape_cast %188 : vector<1x64x64xbf16> to vector<64x64xbf16>
    %190 = arith.truncf %186 : vector<8x64xf32> to vector<8x64xbf16>
    %cst_67 = arith.constant dense<0.000000e+00> : vector<8x64xf32>
    %191 = tpu.matmul %190, %189, %cst_67 {dimension_numbers = #tpu.dot_dimension_numbers<[1], [0], [0], [1], [0, 0, 1, 1], [], []>} : vector<8x64xbf16>, vector<64x64xbf16>, vector<8x64xf32> -> vector<8x64xf32>
    %192 = vector.extract_strided_slice %187 {offsets = [0, 0], sizes = [1, 64], strides = [1, 1]} : vector<1x192xf32> to vector<1x64xf32>
    %193 = vector.broadcast %192 : vector<1x64xf32> to vector<8x64xf32>
    %194 = arith.addf %191, %193 : vector<8x64xf32>
    %c1_68 = arith.constant 1 : index
    %c0_69 = arith.constant 0 : index
    %c64 = arith.constant 64 : index
    %195 = vector.load %arg2[%c1_68, %c0_69, %c64] : memref<4x64x256xbf16, #tpu.memory_space<vmem>>, vector<1x64x128xbf16>
    %196 = vector.shape_cast %195 : vector<1x64x128xbf16> to vector<64x128xbf16>
    %197 = arith.truncf %77 : vector<8x64xf32> to vector<8x64xbf16>
    %cst_70 = arith.constant dense<0.000000e+00> : vector<8x128xf32>
    %198 = tpu.matmul %197, %196, %cst_70 {dimension_numbers = #tpu.dot_dimension_numbers<[1], [0], [0], [1], [0, 0, 1, 1], [], []>} : vector<8x64xbf16>, vector<64x128xbf16>, vector<8x128xf32> -> vector<8x128xf32>
    %199 = vector.extract_strided_slice %187 {offsets = [0, 64], sizes = [1, 128], strides = [1, 1]} : vector<1x192xf32> to vector<1x128xf32>
    %200 = vector.broadcast %199 : vector<1x128xf32> to vector<8x128xf32>
    %201 = arith.addf %198, %200 : vector<8x128xf32>
    %202 = vector.extract_strided_slice %201 {offsets = [0, 0], sizes = [8, 64], strides = [1, 1]} : vector<8x128xf32> to vector<8x64xf32>
    %203 = vector.extract_strided_slice %201 {offsets = [0, 64], sizes = [8, 64], strides = [1, 1]} : vector<8x128xf32> to vector<8x64xf32>
    %204 = vector.extract_strided_slice %194 {offsets = [0, 0], sizes = [8, 32], strides = [1, 1]} : vector<8x64xf32> to vector<8x32xf32>
    %205 = arith.truncf %204 : vector<8x32xf32> to vector<8x32xbf16>
    %206 = vector.extract_strided_slice %202 {offsets = [0, 0], sizes = [8, 32], strides = [1, 1]} : vector<8x64xf32> to vector<8x32xf32>
    %207 = arith.truncf %206 : vector<8x32xf32> to vector<8x32xbf16>
    %cst_71 = arith.constant dense<0.000000e+00> : vector<8x8xf32>
    %208 = tpu.matmul %205, %207, %cst_71 {dimension_numbers = #tpu.dot_dimension_numbers<[1], [1], [0], [0], [0, 0, 1, 0], [], []>} : vector<8x32xbf16>, vector<8x32xbf16>, vector<8x8xf32> -> vector<8x8xf32>
    %cst_72 = arith.constant dense<0xFF800000> : vector<8xf32>
    %209 = vector.multi_reduction <maximumf>, %208, %cst_72 [1] : vector<8x8xf32> to vector<8xf32>
    %210 = vector.shape_cast %209 : vector<8xf32> to vector<8x1xf32>
    %211 = vector.broadcast %210 : vector<8x1xf32> to vector<8x8xf32>
    %212 = arith.subf %208, %211 : vector<8x8xf32>
    %213 = math.exp %212 : vector<8x8xf32>
    %cst_73 = arith.constant dense<0.000000e+00> : vector<8xf32>
    %214 = vector.multi_reduction <add>, %213, %cst_73 [1] : vector<8x8xf32> to vector<8xf32>
    %215 = vector.shape_cast %214 : vector<8xf32> to vector<8x1xf32>
    %216 = vector.broadcast %215 : vector<8x1xf32> to vector<8x8xf32>
    %217 = arith.divf %213, %216 : vector<8x8xf32>
    %218 = vector.extract_strided_slice %203 {offsets = [0, 0], sizes = [8, 32], strides = [1, 1]} : vector<8x64xf32> to vector<8x32xf32>
    %219 = arith.truncf %218 : vector<8x32xf32> to vector<8x32xbf16>
    %220 = arith.truncf %217 : vector<8x8xf32> to vector<8x8xbf16>
    %cst_74 = arith.constant dense<0.000000e+00> : vector<8x32xf32>
    %221 = tpu.matmul %220, %219, %cst_74 {dimension_numbers = #tpu.dot_dimension_numbers<[1], [0], [0], [1], [0, 0, 1, 1], [], []>} : vector<8x8xbf16>, vector<8x32xbf16>, vector<8x32xf32> -> vector<8x32xf32>
    %c1_75 = arith.constant 1 : index
    %c0_76 = arith.constant 0 : index
    %c192_77 = arith.constant 192 : index
    %222 = vector.load %arg2[%c1_75, %c0_76, %c192_77] : memref<4x64x256xbf16, #tpu.memory_space<vmem>>, vector<1x32x64xbf16>
    %223 = vector.shape_cast %222 : vector<1x32x64xbf16> to vector<32x64xbf16>
    %224 = arith.truncf %221 : vector<8x32xf32> to vector<8x32xbf16>
    %cst_78 = arith.constant dense<0.000000e+00> : vector<8x64xf32>
    %225 = tpu.matmul %224, %223, %cst_78 {dimension_numbers = #tpu.dot_dimension_numbers<[1], [0], [0], [1], [0, 0, 1, 1], [], []>} : vector<8x32xbf16>, vector<32x64xbf16>, vector<8x64xf32> -> vector<8x64xf32>
    %226 = vector.extract_strided_slice %194 {offsets = [0, 32], sizes = [8, 32], strides = [1, 1]} : vector<8x64xf32> to vector<8x32xf32>
    %227 = arith.truncf %226 : vector<8x32xf32> to vector<8x32xbf16>
    %228 = vector.extract_strided_slice %202 {offsets = [0, 32], sizes = [8, 32], strides = [1, 1]} : vector<8x64xf32> to vector<8x32xf32>
    %229 = arith.truncf %228 : vector<8x32xf32> to vector<8x32xbf16>
    %cst_79 = arith.constant dense<0.000000e+00> : vector<8x8xf32>
    %230 = tpu.matmul %227, %229, %cst_79 {dimension_numbers = #tpu.dot_dimension_numbers<[1], [1], [0], [0], [0, 0, 1, 0], [], []>} : vector<8x32xbf16>, vector<8x32xbf16>, vector<8x8xf32> -> vector<8x8xf32>
    %cst_80 = arith.constant dense<0xFF800000> : vector<8xf32>
    %231 = vector.multi_reduction <maximumf>, %230, %cst_80 [1] : vector<8x8xf32> to vector<8xf32>
    %232 = vector.shape_cast %231 : vector<8xf32> to vector<8x1xf32>
    %233 = vector.broadcast %232 : vector<8x1xf32> to vector<8x8xf32>
    %234 = arith.subf %230, %233 : vector<8x8xf32>
    %235 = math.exp %234 : vector<8x8xf32>
    %cst_81 = arith.constant dense<0.000000e+00> : vector<8xf32>
    %236 = vector.multi_reduction <add>, %235, %cst_81 [1] : vector<8x8xf32> to vector<8xf32>
    %237 = vector.shape_cast %236 : vector<8xf32> to vector<8x1xf32>
    %238 = vector.broadcast %237 : vector<8x1xf32> to vector<8x8xf32>
    %239 = arith.divf %235, %238 : vector<8x8xf32>
    %240 = vector.extract_strided_slice %203 {offsets = [0, 32], sizes = [8, 32], strides = [1, 1]} : vector<8x64xf32> to vector<8x32xf32>
    %241 = arith.truncf %240 : vector<8x32xf32> to vector<8x32xbf16>
    %242 = arith.truncf %239 : vector<8x8xf32> to vector<8x8xbf16>
    %cst_82 = arith.constant dense<0.000000e+00> : vector<8x32xf32>
    %243 = tpu.matmul %242, %241, %cst_82 {dimension_numbers = #tpu.dot_dimension_numbers<[1], [0], [0], [1], [0, 0, 1, 1], [], []>} : vector<8x8xbf16>, vector<8x32xbf16>, vector<8x32xf32> -> vector<8x32xf32>
    %c1_83 = arith.constant 1 : index
    %c32_84 = arith.constant 32 : index
    %c192_85 = arith.constant 192 : index
    %244 = vector.load %arg2[%c1_83, %c32_84, %c192_85] : memref<4x64x256xbf16, #tpu.memory_space<vmem>>, vector<1x32x64xbf16>
    %245 = vector.shape_cast %244 : vector<1x32x64xbf16> to vector<32x64xbf16>
    %246 = arith.truncf %243 : vector<8x32xf32> to vector<8x32xbf16>
    %cst_86 = arith.constant dense<0.000000e+00> : vector<8x64xf32>
    %247 = tpu.matmul %246, %245, %cst_86 {dimension_numbers = #tpu.dot_dimension_numbers<[1], [0], [0], [1], [0, 0, 1, 1], [], []>} : vector<8x32xbf16>, vector<32x64xbf16>, vector<8x64xf32> -> vector<8x64xf32>
    %248 = arith.addf %225, %247 : vector<8x64xf32>
    %c0_87 = arith.constant 0 : index
    %c2944 = arith.constant 2944 : index
    %249 = vector.load %arg7[%c0_87, %c2944] : memref<1x7168xf32, #tpu.memory_space<vmem>>, vector<1x64xf32>
    %250 = vector.broadcast %249 : vector<1x64xf32> to vector<8x64xf32>
    %251 = arith.addf %248, %250 : vector<8x64xf32>
    %252 = arith.addf %162, %251 : vector<8x64xf32>
    %c0_88 = arith.constant 0 : index
    %c896 = arith.constant 896 : index
    %253 = vector.load %arg7[%c0_88, %c896] : memref<1x7168xf32, #tpu.memory_space<vmem>>, vector<1x64xf32>
    %c0_89 = arith.constant 0 : index
    %c1024 = arith.constant 1024 : index
    %254 = vector.load %arg7[%c0_89, %c1024] : memref<1x7168xf32, #tpu.memory_space<vmem>>, vector<1x64xf32>
    %cst_90 = arith.constant dense<0.000000e+00> : vector<8xf32>
    %255 = vector.multi_reduction <add>, %252, %cst_90 [1] : vector<8x64xf32> to vector<8xf32>
    %256 = vector.shape_cast %255 : vector<8xf32> to vector<8x1xf32>
    %cst_91 = arith.constant 6.400000e+01 : f32
    %257 = vector.broadcast %cst_91 : f32 to vector<8x1xf32>
    %258 = arith.divf %256, %257 : vector<8x1xf32>
    %259 = vector.broadcast %258 : vector<8x1xf32> to vector<8x64xf32>
    %260 = arith.subf %252, %259 : vector<8x64xf32>
    %261 = arith.mulf %260, %260 : vector<8x64xf32>
    %cst_92 = arith.constant dense<0.000000e+00> : vector<8xf32>
    %262 = vector.multi_reduction <add>, %261, %cst_92 [1] : vector<8x64xf32> to vector<8xf32>
    %263 = vector.shape_cast %262 : vector<8xf32> to vector<8x1xf32>
    %cst_93 = arith.constant 6.400000e+01 : f32
    %264 = vector.broadcast %cst_93 : f32 to vector<8x1xf32>
    %265 = arith.divf %263, %264 : vector<8x1xf32>
    %266 = vector.broadcast %258 : vector<8x1xf32> to vector<8x64xf32>
    %267 = arith.subf %252, %266 : vector<8x64xf32>
    %cst_94 = arith.constant 9.99999974E-6 : f32
    %268 = vector.broadcast %cst_94 : f32 to vector<8x1xf32>
    %269 = arith.addf %265, %268 : vector<8x1xf32>
    %270 = math.rsqrt %269 : vector<8x1xf32>
    %271 = vector.broadcast %270 : vector<8x1xf32> to vector<8x64xf32>
    %272 = arith.mulf %267, %271 : vector<8x64xf32>
    %273 = vector.broadcast %253 : vector<1x64xf32> to vector<8x64xf32>
    %274 = arith.mulf %272, %273 : vector<8x64xf32>
    %275 = vector.broadcast %254 : vector<1x64xf32> to vector<8x64xf32>
    %276 = arith.addf %274, %275 : vector<8x64xf32>
    %c0_95 = arith.constant 0 : index
    %c0_96 = arith.constant 0 : index
    %c0_97 = arith.constant 0 : index
    %277 = vector.load %arg3[%c0_95, %c0_96, %c0_97] : memref<2x64x1024xbf16, #tpu.memory_space<vmem>>, vector<1x64x1024xbf16>
    %278 = vector.shape_cast %277 : vector<1x64x1024xbf16> to vector<64x1024xbf16>
    %279 = arith.truncf %276 : vector<8x64xf32> to vector<8x64xbf16>
    %cst_98 = arith.constant dense<0.000000e+00> : vector<8x1024xf32>
    %280 = tpu.matmul %279, %278, %cst_98 {dimension_numbers = #tpu.dot_dimension_numbers<[1], [0], [0], [1], [0, 0, 1, 1], [], []>} : vector<8x64xbf16>, vector<64x1024xbf16>, vector<8x1024xf32> -> vector<8x1024xf32>
    %c0_99 = arith.constant 0 : index
    %c1152 = arith.constant 1152 : index
    %281 = vector.load %arg7[%c0_99, %c1152] : memref<1x7168xf32, #tpu.memory_space<vmem>>, vector<1x1024xf32>
    %282 = vector.broadcast %281 : vector<1x1024xf32> to vector<8x1024xf32>
    %283 = arith.addf %280, %282 : vector<8x1024xf32>
    %cst_100 = arith.constant 0.000000e+00 : f32
    %284 = vector.broadcast %cst_100 : f32 to vector<8x1024xf32>
    %285 = arith.maximumf %283, %284 : vector<8x1024xf32>
    %c0_101 = arith.constant 0 : index
    %c0_102 = arith.constant 0 : index
    %c0_103 = arith.constant 0 : index
    %286 = vector.load %arg4[%c0_101, %c0_102, %c0_103] : memref<2x1024x64xbf16, #tpu.memory_space<vmem>>, vector<1x1024x64xbf16>
    %287 = vector.shape_cast %286 : vector<1x1024x64xbf16> to vector<1024x64xbf16>
    %288 = arith.truncf %285 : vector<8x1024xf32> to vector<8x1024xbf16>
    %cst_104 = arith.constant dense<0.000000e+00> : vector<8x64xf32>
    %289 = tpu.matmul %288, %287, %cst_104 {dimension_numbers = #tpu.dot_dimension_numbers<[1], [0], [0], [1], [0, 0, 1, 1], [], []>} : vector<8x1024xbf16>, vector<1024x64xbf16>, vector<8x64xf32> -> vector<8x64xf32>
    %290 = arith.addf %252, %289 : vector<8x64xf32>
    %c0_105 = arith.constant 0 : index
    %c2176 = arith.constant 2176 : index
    %291 = vector.load %arg7[%c0_105, %c2176] : memref<1x7168xf32, #tpu.memory_space<vmem>>, vector<1x64xf32>
    %292 = vector.broadcast %291 : vector<1x64xf32> to vector<8x64xf32>
    %293 = arith.addf %290, %292 : vector<8x64xf32>
    %c0_106 = arith.constant 0 : index
    %c3072 = arith.constant 3072 : index
    %294 = vector.load %arg7[%c0_106, %c3072] : memref<1x7168xf32, #tpu.memory_space<vmem>>, vector<1x64xf32>
    %c0_107 = arith.constant 0 : index
    %c3200 = arith.constant 3200 : index
    %295 = vector.load %arg7[%c0_107, %c3200] : memref<1x7168xf32, #tpu.memory_space<vmem>>, vector<1x64xf32>
    %cst_108 = arith.constant dense<0.000000e+00> : vector<8xf32>
    %296 = vector.multi_reduction <add>, %293, %cst_108 [1] : vector<8x64xf32> to vector<8xf32>
    %297 = vector.shape_cast %296 : vector<8xf32> to vector<8x1xf32>
    %cst_109 = arith.constant 6.400000e+01 : f32
    %298 = vector.broadcast %cst_109 : f32 to vector<8x1xf32>
    %299 = arith.divf %297, %298 : vector<8x1xf32>
    %300 = vector.broadcast %299 : vector<8x1xf32> to vector<8x64xf32>
    %301 = arith.subf %293, %300 : vector<8x64xf32>
    %302 = arith.mulf %301, %301 : vector<8x64xf32>
    %cst_110 = arith.constant dense<0.000000e+00> : vector<8xf32>
    %303 = vector.multi_reduction <add>, %302, %cst_110 [1] : vector<8x64xf32> to vector<8xf32>
    %304 = vector.shape_cast %303 : vector<8xf32> to vector<8x1xf32>
    %cst_111 = arith.constant 6.400000e+01 : f32
    %305 = vector.broadcast %cst_111 : f32 to vector<8x1xf32>
    %306 = arith.divf %304, %305 : vector<8x1xf32>
    %307 = vector.broadcast %299 : vector<8x1xf32> to vector<8x64xf32>
    %308 = arith.subf %293, %307 : vector<8x64xf32>
    %cst_112 = arith.constant 9.99999974E-6 : f32
    %309 = vector.broadcast %cst_112 : f32 to vector<8x1xf32>
    %310 = arith.addf %306, %309 : vector<8x1xf32>
    %311 = math.rsqrt %310 : vector<8x1xf32>
    %312 = vector.broadcast %311 : vector<8x1xf32> to vector<8x64xf32>
    %313 = arith.mulf %308, %312 : vector<8x64xf32>
    %314 = vector.broadcast %294 : vector<1x64xf32> to vector<8x64xf32>
    %315 = arith.mulf %313, %314 : vector<8x64xf32>
    %316 = vector.broadcast %295 : vector<1x64xf32> to vector<8x64xf32>
    %317 = arith.addf %315, %316 : vector<8x64xf32>
    %c0_113 = arith.constant 0 : index
    %c4992 = arith.constant 4992 : index
    %318 = vector.load %arg7[%c0_113, %c4992] : memref<1x7168xf32, #tpu.memory_space<vmem>>, vector<1x192xf32>
    %c2 = arith.constant 2 : index
    %c0_114 = arith.constant 0 : index
    %c0_115 = arith.constant 0 : index
    %319 = vector.load %arg2[%c2, %c0_114, %c0_115] : memref<4x64x256xbf16, #tpu.memory_space<vmem>>, vector<1x64x192xbf16>
    %320 = vector.shape_cast %319 : vector<1x64x192xbf16> to vector<64x192xbf16>
    %321 = arith.truncf %317 : vector<8x64xf32> to vector<8x64xbf16>
    %cst_116 = arith.constant dense<0.000000e+00> : vector<8x192xf32>
    %322 = tpu.matmul %321, %320, %cst_116 {dimension_numbers = #tpu.dot_dimension_numbers<[1], [0], [0], [1], [0, 0, 1, 1], [], []>} : vector<8x64xbf16>, vector<64x192xbf16>, vector<8x192xf32> -> vector<8x192xf32>
    %323 = vector.broadcast %318 : vector<1x192xf32> to vector<8x192xf32>
    %324 = arith.addf %322, %323 : vector<8x192xf32>
    %325 = vector.extract_strided_slice %324 {offsets = [0, 0], sizes = [8, 64], strides = [1, 1]} : vector<8x192xf32> to vector<8x64xf32>
    %326 = vector.extract_strided_slice %324 {offsets = [0, 64], sizes = [8, 64], strides = [1, 1]} : vector<8x192xf32> to vector<8x64xf32>
    %327 = vector.extract_strided_slice %324 {offsets = [0, 128], sizes = [8, 64], strides = [1, 1]} : vector<8x192xf32> to vector<8x64xf32>
    %328 = vector.extract_strided_slice %325 {offsets = [0, 0], sizes = [8, 32], strides = [1, 1]} : vector<8x64xf32> to vector<8x32xf32>
    %329 = arith.truncf %328 : vector<8x32xf32> to vector<8x32xbf16>
    %330 = vector.extract_strided_slice %326 {offsets = [0, 0], sizes = [8, 32], strides = [1, 1]} : vector<8x64xf32> to vector<8x32xf32>
    %331 = arith.truncf %330 : vector<8x32xf32> to vector<8x32xbf16>
    %cst_117 = arith.constant dense<0.000000e+00> : vector<8x8xf32>
    %332 = tpu.matmul %329, %331, %cst_117 {dimension_numbers = #tpu.dot_dimension_numbers<[1], [1], [0], [0], [0, 0, 1, 0], [], []>} : vector<8x32xbf16>, vector<8x32xbf16>, vector<8x8xf32> -> vector<8x8xf32>
    %333 = arith.addf %332, %5 : vector<8x8xf32>
    %cst_118 = arith.constant dense<0xFF800000> : vector<8xf32>
    %334 = vector.multi_reduction <maximumf>, %333, %cst_118 [1] : vector<8x8xf32> to vector<8xf32>
    %335 = vector.shape_cast %334 : vector<8xf32> to vector<8x1xf32>
    %336 = vector.broadcast %335 : vector<8x1xf32> to vector<8x8xf32>
    %337 = arith.subf %333, %336 : vector<8x8xf32>
    %338 = math.exp %337 : vector<8x8xf32>
    %cst_119 = arith.constant dense<0.000000e+00> : vector<8xf32>
    %339 = vector.multi_reduction <add>, %338, %cst_119 [1] : vector<8x8xf32> to vector<8xf32>
    %340 = vector.shape_cast %339 : vector<8xf32> to vector<8x1xf32>
    %341 = vector.broadcast %340 : vector<8x1xf32> to vector<8x8xf32>
    %342 = arith.divf %338, %341 : vector<8x8xf32>
    %343 = vector.extract_strided_slice %327 {offsets = [0, 0], sizes = [8, 32], strides = [1, 1]} : vector<8x64xf32> to vector<8x32xf32>
    %344 = arith.truncf %343 : vector<8x32xf32> to vector<8x32xbf16>
    %345 = arith.truncf %342 : vector<8x8xf32> to vector<8x8xbf16>
    %cst_120 = arith.constant dense<0.000000e+00> : vector<8x32xf32>
    %346 = tpu.matmul %345, %344, %cst_120 {dimension_numbers = #tpu.dot_dimension_numbers<[1], [0], [0], [1], [0, 0, 1, 1], [], []>} : vector<8x8xbf16>, vector<8x32xbf16>, vector<8x32xf32> -> vector<8x32xf32>
    %c2_121 = arith.constant 2 : index
    %c0_122 = arith.constant 0 : index
    %c192_123 = arith.constant 192 : index
    %347 = vector.load %arg2[%c2_121, %c0_122, %c192_123] : memref<4x64x256xbf16, #tpu.memory_space<vmem>>, vector<1x32x64xbf16>
    %348 = vector.shape_cast %347 : vector<1x32x64xbf16> to vector<32x64xbf16>
    %349 = arith.truncf %346 : vector<8x32xf32> to vector<8x32xbf16>
    %cst_124 = arith.constant dense<0.000000e+00> : vector<8x64xf32>
    %350 = tpu.matmul %349, %348, %cst_124 {dimension_numbers = #tpu.dot_dimension_numbers<[1], [0], [0], [1], [0, 0, 1, 1], [], []>} : vector<8x32xbf16>, vector<32x64xbf16>, vector<8x64xf32> -> vector<8x64xf32>
    %351 = vector.extract_strided_slice %325 {offsets = [0, 32], sizes = [8, 32], strides = [1, 1]} : vector<8x64xf32> to vector<8x32xf32>
    %352 = arith.truncf %351 : vector<8x32xf32> to vector<8x32xbf16>
    %353 = vector.extract_strided_slice %326 {offsets = [0, 32], sizes = [8, 32], strides = [1, 1]} : vector<8x64xf32> to vector<8x32xf32>
    %354 = arith.truncf %353 : vector<8x32xf32> to vector<8x32xbf16>
    %cst_125 = arith.constant dense<0.000000e+00> : vector<8x8xf32>
    %355 = tpu.matmul %352, %354, %cst_125 {dimension_numbers = #tpu.dot_dimension_numbers<[1], [1], [0], [0], [0, 0, 1, 0], [], []>} : vector<8x32xbf16>, vector<8x32xbf16>, vector<8x8xf32> -> vector<8x8xf32>
    %356 = arith.addf %355, %5 : vector<8x8xf32>
    %cst_126 = arith.constant dense<0xFF800000> : vector<8xf32>
    %357 = vector.multi_reduction <maximumf>, %356, %cst_126 [1] : vector<8x8xf32> to vector<8xf32>
    %358 = vector.shape_cast %357 : vector<8xf32> to vector<8x1xf32>
    %359 = vector.broadcast %358 : vector<8x1xf32> to vector<8x8xf32>
    %360 = arith.subf %356, %359 : vector<8x8xf32>
    %361 = math.exp %360 : vector<8x8xf32>
    %cst_127 = arith.constant dense<0.000000e+00> : vector<8xf32>
    %362 = vector.multi_reduction <add>, %361, %cst_127 [1] : vector<8x8xf32> to vector<8xf32>
    %363 = vector.shape_cast %362 : vector<8xf32> to vector<8x1xf32>
    %364 = vector.broadcast %363 : vector<8x1xf32> to vector<8x8xf32>
    %365 = arith.divf %361, %364 : vector<8x8xf32>
    %366 = vector.extract_strided_slice %327 {offsets = [0, 32], sizes = [8, 32], strides = [1, 1]} : vector<8x64xf32> to vector<8x32xf32>
    %367 = arith.truncf %366 : vector<8x32xf32> to vector<8x32xbf16>
    %368 = arith.truncf %365 : vector<8x8xf32> to vector<8x8xbf16>
    %cst_128 = arith.constant dense<0.000000e+00> : vector<8x32xf32>
    %369 = tpu.matmul %368, %367, %cst_128 {dimension_numbers = #tpu.dot_dimension_numbers<[1], [0], [0], [1], [0, 0, 1, 1], [], []>} : vector<8x8xbf16>, vector<8x32xbf16>, vector<8x32xf32> -> vector<8x32xf32>
    %c2_129 = arith.constant 2 : index
    %c32_130 = arith.constant 32 : index
    %c192_131 = arith.constant 192 : index
    %370 = vector.load %arg2[%c2_129, %c32_130, %c192_131] : memref<4x64x256xbf16, #tpu.memory_space<vmem>>, vector<1x32x64xbf16>
    %371 = vector.shape_cast %370 : vector<1x32x64xbf16> to vector<32x64xbf16>
    %372 = arith.truncf %369 : vector<8x32xf32> to vector<8x32xbf16>
    %cst_132 = arith.constant dense<0.000000e+00> : vector<8x64xf32>
    %373 = tpu.matmul %372, %371, %cst_132 {dimension_numbers = #tpu.dot_dimension_numbers<[1], [0], [0], [1], [0, 0, 1, 1], [], []>} : vector<8x32xbf16>, vector<32x64xbf16>, vector<8x64xf32> -> vector<8x64xf32>
    %374 = arith.addf %350, %373 : vector<8x64xf32>
    %c0_133 = arith.constant 0 : index
    %c5248 = arith.constant 5248 : index
    %375 = vector.load %arg7[%c0_133, %c5248] : memref<1x7168xf32, #tpu.memory_space<vmem>>, vector<1x64xf32>
    %376 = vector.broadcast %375 : vector<1x64xf32> to vector<8x64xf32>
    %377 = arith.addf %374, %376 : vector<8x64xf32>
    %378 = arith.addf %293, %377 : vector<8x64xf32>
    %c0_134 = arith.constant 0 : index
    %c3328 = arith.constant 3328 : index
    %379 = vector.load %arg7[%c0_134, %c3328] : memref<1x7168xf32, #tpu.memory_space<vmem>>, vector<1x64xf32>
    %c0_135 = arith.constant 0 : index
    %c3456 = arith.constant 3456 : index
    %380 = vector.load %arg7[%c0_135, %c3456] : memref<1x7168xf32, #tpu.memory_space<vmem>>, vector<1x64xf32>
    %cst_136 = arith.constant dense<0.000000e+00> : vector<8xf32>
    %381 = vector.multi_reduction <add>, %378, %cst_136 [1] : vector<8x64xf32> to vector<8xf32>
    %382 = vector.shape_cast %381 : vector<8xf32> to vector<8x1xf32>
    %cst_137 = arith.constant 6.400000e+01 : f32
    %383 = vector.broadcast %cst_137 : f32 to vector<8x1xf32>
    %384 = arith.divf %382, %383 : vector<8x1xf32>
    %385 = vector.broadcast %384 : vector<8x1xf32> to vector<8x64xf32>
    %386 = arith.subf %378, %385 : vector<8x64xf32>
    %387 = arith.mulf %386, %386 : vector<8x64xf32>
    %cst_138 = arith.constant dense<0.000000e+00> : vector<8xf32>
    %388 = vector.multi_reduction <add>, %387, %cst_138 [1] : vector<8x64xf32> to vector<8xf32>
    %389 = vector.shape_cast %388 : vector<8xf32> to vector<8x1xf32>
    %cst_139 = arith.constant 6.400000e+01 : f32
    %390 = vector.broadcast %cst_139 : f32 to vector<8x1xf32>
    %391 = arith.divf %389, %390 : vector<8x1xf32>
    %392 = vector.broadcast %384 : vector<8x1xf32> to vector<8x64xf32>
    %393 = arith.subf %378, %392 : vector<8x64xf32>
    %cst_140 = arith.constant 9.99999974E-6 : f32
    %394 = vector.broadcast %cst_140 : f32 to vector<8x1xf32>
    %395 = arith.addf %391, %394 : vector<8x1xf32>
    %396 = math.rsqrt %395 : vector<8x1xf32>
    %397 = vector.broadcast %396 : vector<8x1xf32> to vector<8x64xf32>
    %398 = arith.mulf %393, %397 : vector<8x64xf32>
    %399 = vector.broadcast %379 : vector<1x64xf32> to vector<8x64xf32>
    %400 = arith.mulf %398, %399 : vector<8x64xf32>
    %401 = vector.broadcast %380 : vector<1x64xf32> to vector<8x64xf32>
    %402 = arith.addf %400, %401 : vector<8x64xf32>
    %c0_141 = arith.constant 0 : index
    %c5376 = arith.constant 5376 : index
    %403 = vector.load %arg7[%c0_141, %c5376] : memref<1x7168xf32, #tpu.memory_space<vmem>>, vector<1x192xf32>
    %c3 = arith.constant 3 : index
    %c0_142 = arith.constant 0 : index
    %c0_143 = arith.constant 0 : index
    %404 = vector.load %arg2[%c3, %c0_142, %c0_143] : memref<4x64x256xbf16, #tpu.memory_space<vmem>>, vector<1x64x64xbf16>
    %405 = vector.shape_cast %404 : vector<1x64x64xbf16> to vector<64x64xbf16>
    %406 = arith.truncf %402 : vector<8x64xf32> to vector<8x64xbf16>
    %cst_144 = arith.constant dense<0.000000e+00> : vector<8x64xf32>
    %407 = tpu.matmul %406, %405, %cst_144 {dimension_numbers = #tpu.dot_dimension_numbers<[1], [0], [0], [1], [0, 0, 1, 1], [], []>} : vector<8x64xbf16>, vector<64x64xbf16>, vector<8x64xf32> -> vector<8x64xf32>
    %408 = vector.extract_strided_slice %403 {offsets = [0, 0], sizes = [1, 64], strides = [1, 1]} : vector<1x192xf32> to vector<1x64xf32>
    %409 = vector.broadcast %408 : vector<1x64xf32> to vector<8x64xf32>
    %410 = arith.addf %407, %409 : vector<8x64xf32>
    %c3_145 = arith.constant 3 : index
    %c0_146 = arith.constant 0 : index
    %c64_147 = arith.constant 64 : index
    %411 = vector.load %arg2[%c3_145, %c0_146, %c64_147] : memref<4x64x256xbf16, #tpu.memory_space<vmem>>, vector<1x64x128xbf16>
    %412 = vector.shape_cast %411 : vector<1x64x128xbf16> to vector<64x128xbf16>
    %413 = arith.truncf %77 : vector<8x64xf32> to vector<8x64xbf16>
    %cst_148 = arith.constant dense<0.000000e+00> : vector<8x128xf32>
    %414 = tpu.matmul %413, %412, %cst_148 {dimension_numbers = #tpu.dot_dimension_numbers<[1], [0], [0], [1], [0, 0, 1, 1], [], []>} : vector<8x64xbf16>, vector<64x128xbf16>, vector<8x128xf32> -> vector<8x128xf32>
    %415 = vector.extract_strided_slice %403 {offsets = [0, 64], sizes = [1, 128], strides = [1, 1]} : vector<1x192xf32> to vector<1x128xf32>
    %416 = vector.broadcast %415 : vector<1x128xf32> to vector<8x128xf32>
    %417 = arith.addf %414, %416 : vector<8x128xf32>
    %418 = vector.extract_strided_slice %417 {offsets = [0, 0], sizes = [8, 64], strides = [1, 1]} : vector<8x128xf32> to vector<8x64xf32>
    %419 = vector.extract_strided_slice %417 {offsets = [0, 64], sizes = [8, 64], strides = [1, 1]} : vector<8x128xf32> to vector<8x64xf32>
    %420 = vector.extract_strided_slice %410 {offsets = [0, 0], sizes = [8, 32], strides = [1, 1]} : vector<8x64xf32> to vector<8x32xf32>
    %421 = arith.truncf %420 : vector<8x32xf32> to vector<8x32xbf16>
    %422 = vector.extract_strided_slice %418 {offsets = [0, 0], sizes = [8, 32], strides = [1, 1]} : vector<8x64xf32> to vector<8x32xf32>
    %423 = arith.truncf %422 : vector<8x32xf32> to vector<8x32xbf16>
    %cst_149 = arith.constant dense<0.000000e+00> : vector<8x8xf32>
    %424 = tpu.matmul %421, %423, %cst_149 {dimension_numbers = #tpu.dot_dimension_numbers<[1], [1], [0], [0], [0, 0, 1, 0], [], []>} : vector<8x32xbf16>, vector<8x32xbf16>, vector<8x8xf32> -> vector<8x8xf32>
    %cst_150 = arith.constant dense<0xFF800000> : vector<8xf32>
    %425 = vector.multi_reduction <maximumf>, %424, %cst_150 [1] : vector<8x8xf32> to vector<8xf32>
    %426 = vector.shape_cast %425 : vector<8xf32> to vector<8x1xf32>
    %427 = vector.broadcast %426 : vector<8x1xf32> to vector<8x8xf32>
    %428 = arith.subf %424, %427 : vector<8x8xf32>
    %429 = math.exp %428 : vector<8x8xf32>
    %cst_151 = arith.constant dense<0.000000e+00> : vector<8xf32>
    %430 = vector.multi_reduction <add>, %429, %cst_151 [1] : vector<8x8xf32> to vector<8xf32>
    %431 = vector.shape_cast %430 : vector<8xf32> to vector<8x1xf32>
    %432 = vector.broadcast %431 : vector<8x1xf32> to vector<8x8xf32>
    %433 = arith.divf %429, %432 : vector<8x8xf32>
    %434 = vector.extract_strided_slice %419 {offsets = [0, 0], sizes = [8, 32], strides = [1, 1]} : vector<8x64xf32> to vector<8x32xf32>
    %435 = arith.truncf %434 : vector<8x32xf32> to vector<8x32xbf16>
    %436 = arith.truncf %433 : vector<8x8xf32> to vector<8x8xbf16>
    %cst_152 = arith.constant dense<0.000000e+00> : vector<8x32xf32>
    %437 = tpu.matmul %436, %435, %cst_152 {dimension_numbers = #tpu.dot_dimension_numbers<[1], [0], [0], [1], [0, 0, 1, 1], [], []>} : vector<8x8xbf16>, vector<8x32xbf16>, vector<8x32xf32> -> vector<8x32xf32>
    %c3_153 = arith.constant 3 : index
    %c0_154 = arith.constant 0 : index
    %c192_155 = arith.constant 192 : index
    %438 = vector.load %arg2[%c3_153, %c0_154, %c192_155] : memref<4x64x256xbf16, #tpu.memory_space<vmem>>, vector<1x32x64xbf16>
    %439 = vector.shape_cast %438 : vector<1x32x64xbf16> to vector<32x64xbf16>
    %440 = arith.truncf %437 : vector<8x32xf32> to vector<8x32xbf16>
    %cst_156 = arith.constant dense<0.000000e+00> : vector<8x64xf32>
    %441 = tpu.matmul %440, %439, %cst_156 {dimension_numbers = #tpu.dot_dimension_numbers<[1], [0], [0], [1], [0, 0, 1, 1], [], []>} : vector<8x32xbf16>, vector<32x64xbf16>, vector<8x64xf32> -> vector<8x64xf32>
    %442 = vector.extract_strided_slice %410 {offsets = [0, 32], sizes = [8, 32], strides = [1, 1]} : vector<8x64xf32> to vector<8x32xf32>
    %443 = arith.truncf %442 : vector<8x32xf32> to vector<8x32xbf16>
    %444 = vector.extract_strided_slice %418 {offsets = [0, 32], sizes = [8, 32], strides = [1, 1]} : vector<8x64xf32> to vector<8x32xf32>
    %445 = arith.truncf %444 : vector<8x32xf32> to vector<8x32xbf16>
    %cst_157 = arith.constant dense<0.000000e+00> : vector<8x8xf32>
    %446 = tpu.matmul %443, %445, %cst_157 {dimension_numbers = #tpu.dot_dimension_numbers<[1], [1], [0], [0], [0, 0, 1, 0], [], []>} : vector<8x32xbf16>, vector<8x32xbf16>, vector<8x8xf32> -> vector<8x8xf32>
    %cst_158 = arith.constant dense<0xFF800000> : vector<8xf32>
    %447 = vector.multi_reduction <maximumf>, %446, %cst_158 [1] : vector<8x8xf32> to vector<8xf32>
    %448 = vector.shape_cast %447 : vector<8xf32> to vector<8x1xf32>
    %449 = vector.broadcast %448 : vector<8x1xf32> to vector<8x8xf32>
    %450 = arith.subf %446, %449 : vector<8x8xf32>
    %451 = math.exp %450 : vector<8x8xf32>
    %cst_159 = arith.constant dense<0.000000e+00> : vector<8xf32>
    %452 = vector.multi_reduction <add>, %451, %cst_159 [1] : vector<8x8xf32> to vector<8xf32>
    %453 = vector.shape_cast %452 : vector<8xf32> to vector<8x1xf32>
    %454 = vector.broadcast %453 : vector<8x1xf32> to vector<8x8xf32>
    %455 = arith.divf %451, %454 : vector<8x8xf32>
    %456 = vector.extract_strided_slice %419 {offsets = [0, 32], sizes = [8, 32], strides = [1, 1]} : vector<8x64xf32> to vector<8x32xf32>
    %457 = arith.truncf %456 : vector<8x32xf32> to vector<8x32xbf16>
    %458 = arith.truncf %455 : vector<8x8xf32> to vector<8x8xbf16>
    %cst_160 = arith.constant dense<0.000000e+00> : vector<8x32xf32>
    %459 = tpu.matmul %458, %457, %cst_160 {dimension_numbers = #tpu.dot_dimension_numbers<[1], [0], [0], [1], [0, 0, 1, 1], [], []>} : vector<8x8xbf16>, vector<8x32xbf16>, vector<8x32xf32> -> vector<8x32xf32>
    %c3_161 = arith.constant 3 : index
    %c32_162 = arith.constant 32 : index
    %c192_163 = arith.constant 192 : index
    %460 = vector.load %arg2[%c3_161, %c32_162, %c192_163] : memref<4x64x256xbf16, #tpu.memory_space<vmem>>, vector<1x32x64xbf16>
    %461 = vector.shape_cast %460 : vector<1x32x64xbf16> to vector<32x64xbf16>
    %462 = arith.truncf %459 : vector<8x32xf32> to vector<8x32xbf16>
    %cst_164 = arith.constant dense<0.000000e+00> : vector<8x64xf32>
    %463 = tpu.matmul %462, %461, %cst_164 {dimension_numbers = #tpu.dot_dimension_numbers<[1], [0], [0], [1], [0, 0, 1, 1], [], []>} : vector<8x32xbf16>, vector<32x64xbf16>, vector<8x64xf32> -> vector<8x64xf32>
    %464 = arith.addf %441, %463 : vector<8x64xf32>
    %c0_165 = arith.constant 0 : index
    %c5632 = arith.constant 5632 : index
    %465 = vector.load %arg7[%c0_165, %c5632] : memref<1x7168xf32, #tpu.memory_space<vmem>>, vector<1x64xf32>
    %466 = vector.broadcast %465 : vector<1x64xf32> to vector<8x64xf32>
    %467 = arith.addf %464, %466 : vector<8x64xf32>
    %468 = arith.addf %378, %467 : vector<8x64xf32>
    %c0_166 = arith.constant 0 : index
    %c3584 = arith.constant 3584 : index
    %469 = vector.load %arg7[%c0_166, %c3584] : memref<1x7168xf32, #tpu.memory_space<vmem>>, vector<1x64xf32>
    %c0_167 = arith.constant 0 : index
    %c3712 = arith.constant 3712 : index
    %470 = vector.load %arg7[%c0_167, %c3712] : memref<1x7168xf32, #tpu.memory_space<vmem>>, vector<1x64xf32>
    %cst_168 = arith.constant dense<0.000000e+00> : vector<8xf32>
    %471 = vector.multi_reduction <add>, %468, %cst_168 [1] : vector<8x64xf32> to vector<8xf32>
    %472 = vector.shape_cast %471 : vector<8xf32> to vector<8x1xf32>
    %cst_169 = arith.constant 6.400000e+01 : f32
    %473 = vector.broadcast %cst_169 : f32 to vector<8x1xf32>
    %474 = arith.divf %472, %473 : vector<8x1xf32>
    %475 = vector.broadcast %474 : vector<8x1xf32> to vector<8x64xf32>
    %476 = arith.subf %468, %475 : vector<8x64xf32>
    %477 = arith.mulf %476, %476 : vector<8x64xf32>
    %cst_170 = arith.constant dense<0.000000e+00> : vector<8xf32>
    %478 = vector.multi_reduction <add>, %477, %cst_170 [1] : vector<8x64xf32> to vector<8xf32>
    %479 = vector.shape_cast %478 : vector<8xf32> to vector<8x1xf32>
    %cst_171 = arith.constant 6.400000e+01 : f32
    %480 = vector.broadcast %cst_171 : f32 to vector<8x1xf32>
    %481 = arith.divf %479, %480 : vector<8x1xf32>
    %482 = vector.broadcast %474 : vector<8x1xf32> to vector<8x64xf32>
    %483 = arith.subf %468, %482 : vector<8x64xf32>
    %cst_172 = arith.constant 9.99999974E-6 : f32
    %484 = vector.broadcast %cst_172 : f32 to vector<8x1xf32>
    %485 = arith.addf %481, %484 : vector<8x1xf32>
    %486 = math.rsqrt %485 : vector<8x1xf32>
    %487 = vector.broadcast %486 : vector<8x1xf32> to vector<8x64xf32>
    %488 = arith.mulf %483, %487 : vector<8x64xf32>
    %489 = vector.broadcast %469 : vector<1x64xf32> to vector<8x64xf32>
    %490 = arith.mulf %488, %489 : vector<8x64xf32>
    %491 = vector.broadcast %470 : vector<1x64xf32> to vector<8x64xf32>
    %492 = arith.addf %490, %491 : vector<8x64xf32>
    %c1_173 = arith.constant 1 : index
    %c0_174 = arith.constant 0 : index
    %c0_175 = arith.constant 0 : index
    %493 = vector.load %arg3[%c1_173, %c0_174, %c0_175] : memref<2x64x1024xbf16, #tpu.memory_space<vmem>>, vector<1x64x1024xbf16>
    %494 = vector.shape_cast %493 : vector<1x64x1024xbf16> to vector<64x1024xbf16>
    %495 = arith.truncf %492 : vector<8x64xf32> to vector<8x64xbf16>
    %cst_176 = arith.constant dense<0.000000e+00> : vector<8x1024xf32>
    %496 = tpu.matmul %495, %494, %cst_176 {dimension_numbers = #tpu.dot_dimension_numbers<[1], [0], [0], [1], [0, 0, 1, 1], [], []>} : vector<8x64xbf16>, vector<64x1024xbf16>, vector<8x1024xf32> -> vector<8x1024xf32>
    %c0_177 = arith.constant 0 : index
    %c3840 = arith.constant 3840 : index
    %497 = vector.load %arg7[%c0_177, %c3840] : memref<1x7168xf32, #tpu.memory_space<vmem>>, vector<1x1024xf32>
    %498 = vector.broadcast %497 : vector<1x1024xf32> to vector<8x1024xf32>
    %499 = arith.addf %496, %498 : vector<8x1024xf32>
    %cst_178 = arith.constant 0.000000e+00 : f32
    %500 = vector.broadcast %cst_178 : f32 to vector<8x1024xf32>
    %501 = arith.maximumf %499, %500 : vector<8x1024xf32>
    %c1_179 = arith.constant 1 : index
    %c0_180 = arith.constant 0 : index
    %c0_181 = arith.constant 0 : index
    %502 = vector.load %arg4[%c1_179, %c0_180, %c0_181] : memref<2x1024x64xbf16, #tpu.memory_space<vmem>>, vector<1x1024x64xbf16>
    %503 = vector.shape_cast %502 : vector<1x1024x64xbf16> to vector<1024x64xbf16>
    %504 = arith.truncf %501 : vector<8x1024xf32> to vector<8x1024xbf16>
    %cst_182 = arith.constant dense<0.000000e+00> : vector<8x64xf32>
    %505 = tpu.matmul %504, %503, %cst_182 {dimension_numbers = #tpu.dot_dimension_numbers<[1], [0], [0], [1], [0, 0, 1, 1], [], []>} : vector<8x1024xbf16>, vector<1024x64xbf16>, vector<8x64xf32> -> vector<8x64xf32>
    %506 = arith.addf %468, %505 : vector<8x64xf32>
    %c0_183 = arith.constant 0 : index
    %c4864 = arith.constant 4864 : index
    %507 = vector.load %arg7[%c0_183, %c4864] : memref<1x7168xf32, #tpu.memory_space<vmem>>, vector<1x64xf32>
    %508 = vector.broadcast %507 : vector<1x64xf32> to vector<8x64xf32>
    %509 = arith.addf %506, %508 : vector<8x64xf32>
    %510 = arith.truncf %509 : vector<8x64xf32> to vector<8x64xbf16>
    %c0_184 = arith.constant 0 : index
    %c0_185 = arith.constant 0 : index
    %511 = vector.load %arg6[%c0_184, %c0_185] : memref<512x128xbf16, #tpu.memory_space<vmem>>, vector<64x128xbf16>
    %cst_186 = arith.constant dense<0.000000e+00> : vector<8x128xf32>
    %512 = tpu.matmul %510, %511, %cst_186 {dimension_numbers = #tpu.dot_dimension_numbers<[1], [0], [0], [1], [0, 0, 1, 1], [], []>} : vector<8x64xbf16>, vector<64x128xbf16>, vector<8x128xf32> -> vector<8x128xf32>
    %c0_187 = arith.constant 0 : index
    %c5760 = arith.constant 5760 : index
    %513 = vector.load %arg7[%c0_187, %c5760] : memref<1x7168xf32, #tpu.memory_space<vmem>>, vector<1x128xf32>
    %514 = vector.broadcast %513 : vector<1x128xf32> to vector<8x128xf32>
    %515 = arith.addf %512, %514 : vector<8x128xf32>
    %cst_188 = arith.constant 5.000000e-01 : f32
    %516 = vector.broadcast %cst_188 : f32 to vector<8x128xf32>
    %517 = arith.mulf %516, %515 : vector<8x128xf32>
    %cst_189 = arith.constant 0.707106769 : f32
    %518 = vector.broadcast %cst_189 : f32 to vector<8x128xf32>
    %519 = arith.mulf %515, %518 : vector<8x128xf32>
    %520 = math.absf %519 : vector<8x128xf32>
    %cst_190 = arith.constant 0.327591091 : f32
    %521 = vector.broadcast %cst_190 : f32 to vector<8x128xf32>
    %522 = arith.mulf %521, %520 : vector<8x128xf32>
    %cst_191 = arith.constant 1.000000e+00 : f32
    %523 = vector.broadcast %cst_191 : f32 to vector<8x128xf32>
    %524 = arith.addf %523, %522 : vector<8x128xf32>
    %cst_192 = arith.constant 1.000000e+00 : f32
    %525 = vector.broadcast %cst_192 : f32 to vector<8x128xf32>
    %526 = arith.divf %525, %524 : vector<8x128xf32>
    %cst_193 = arith.constant 1.06140542 : f32
    %527 = vector.broadcast %cst_193 : f32 to vector<8x128xf32>
    %528 = arith.mulf %527, %526 : vector<8x128xf32>
    %cst_194 = arith.constant 1.45315206 : f32
    %529 = vector.broadcast %cst_194 : f32 to vector<8x128xf32>
    %530 = arith.subf %528, %529 : vector<8x128xf32>
    %531 = arith.mulf %530, %526 : vector<8x128xf32>
    %cst_195 = arith.constant 1.42141378 : f32
    %532 = vector.broadcast %cst_195 : f32 to vector<8x128xf32>
    %533 = arith.addf %531, %532 : vector<8x128xf32>
    %534 = arith.mulf %533, %526 : vector<8x128xf32>
    %cst_196 = arith.constant 0.284496725 : f32
    %535 = vector.broadcast %cst_196 : f32 to vector<8x128xf32>
    %536 = arith.subf %534, %535 : vector<8x128xf32>
    %537 = arith.mulf %536, %526 : vector<8x128xf32>
    %cst_197 = arith.constant 0.254829586 : f32
    %538 = vector.broadcast %cst_197 : f32 to vector<8x128xf32>
    %539 = arith.addf %537, %538 : vector<8x128xf32>
    %540 = arith.mulf %539, %526 : vector<8x128xf32>
    %cst_198 = arith.constant 0.000000e+00 : f32
    %541 = vector.broadcast %cst_198 : f32 to vector<8x128xf32>
    %542 = arith.subf %541, %520 : vector<8x128xf32>
    %543 = arith.mulf %542, %520 : vector<8x128xf32>
    %544 = math.exp %543 : vector<8x128xf32>
    %545 = arith.mulf %540, %544 : vector<8x128xf32>
    %cst_199 = arith.constant 1.000000e+00 : f32
    %546 = vector.broadcast %cst_199 : f32 to vector<8x128xf32>
    %547 = arith.subf %546, %545 : vector<8x128xf32>
    %cst_200 = arith.constant 0.000000e+00 : f32
    %548 = vector.broadcast %cst_200 : f32 to vector<8x128xf32>
    %549 = arith.cmpf olt, %519, %548 : vector<8x128xf32>
    %cst_201 = arith.constant 0.000000e+00 : f32
    %550 = vector.broadcast %cst_201 : f32 to vector<8x128xf32>
    %551 = arith.subf %550, %547 : vector<8x128xf32>
    %552 = arith.select %549, %551, %547 : vector<8x128xi1>, vector<8x128xf32>
    %cst_202 = arith.constant 1.000000e+00 : f32
    %553 = vector.broadcast %cst_202 : f32 to vector<8x128xf32>
    %554 = arith.addf %553, %552 : vector<8x128xf32>
    %555 = arith.mulf %517, %554 : vector<8x128xf32>
    %c64_203 = arith.constant 64 : index
    %c0_204 = arith.constant 0 : index
    %556 = vector.load %arg6[%c64_203, %c0_204] : memref<512x128xbf16, #tpu.memory_space<vmem>>, vector<128x128xbf16>
    %557 = arith.truncf %555 : vector<8x128xf32> to vector<8x128xbf16>
    %cst_205 = arith.constant dense<0.000000e+00> : vector<8x128xf32>
    %558 = tpu.matmul %557, %556, %cst_205 {dimension_numbers = #tpu.dot_dimension_numbers<[1], [0], [0], [1], [0, 0, 1, 1], [], []>} : vector<8x128xbf16>, vector<128x128xbf16>, vector<8x128xf32> -> vector<8x128xf32>
    %c0_206 = arith.constant 0 : index
    %c5888 = arith.constant 5888 : index
    %559 = vector.load %arg7[%c0_206, %c5888] : memref<1x7168xf32, #tpu.memory_space<vmem>>, vector<1x128xf32>
    %560 = vector.broadcast %559 : vector<1x128xf32> to vector<8x128xf32>
    %561 = arith.addf %558, %560 : vector<8x128xf32>
    %cst_207 = arith.constant 5.000000e-01 : f32
    %562 = vector.broadcast %cst_207 : f32 to vector<8x128xf32>
    %563 = arith.mulf %562, %561 : vector<8x128xf32>
    %cst_208 = arith.constant 0.707106769 : f32
    %564 = vector.broadcast %cst_208 : f32 to vector<8x128xf32>
    %565 = arith.mulf %561, %564 : vector<8x128xf32>
    %566 = math.absf %565 : vector<8x128xf32>
    %cst_209 = arith.constant 0.327591091 : f32
    %567 = vector.broadcast %cst_209 : f32 to vector<8x128xf32>
    %568 = arith.mulf %567, %566 : vector<8x128xf32>
    %cst_210 = arith.constant 1.000000e+00 : f32
    %569 = vector.broadcast %cst_210 : f32 to vector<8x128xf32>
    %570 = arith.addf %569, %568 : vector<8x128xf32>
    %cst_211 = arith.constant 1.000000e+00 : f32
    %571 = vector.broadcast %cst_211 : f32 to vector<8x128xf32>
    %572 = arith.divf %571, %570 : vector<8x128xf32>
    %cst_212 = arith.constant 1.06140542 : f32
    %573 = vector.broadcast %cst_212 : f32 to vector<8x128xf32>
    %574 = arith.mulf %573, %572 : vector<8x128xf32>
    %cst_213 = arith.constant 1.45315206 : f32
    %575 = vector.broadcast %cst_213 : f32 to vector<8x128xf32>
    %576 = arith.subf %574, %575 : vector<8x128xf32>
    %577 = arith.mulf %576, %572 : vector<8x128xf32>
    %cst_214 = arith.constant 1.42141378 : f32
    %578 = vector.broadcast %cst_214 : f32 to vector<8x128xf32>
    %579 = arith.addf %577, %578 : vector<8x128xf32>
    %580 = arith.mulf %579, %572 : vector<8x128xf32>
    %cst_215 = arith.constant 0.284496725 : f32
    %581 = vector.broadcast %cst_215 : f32 to vector<8x128xf32>
    %582 = arith.subf %580, %581 : vector<8x128xf32>
    %583 = arith.mulf %582, %572 : vector<8x128xf32>
    %cst_216 = arith.constant 0.254829586 : f32
    %584 = vector.broadcast %cst_216 : f32 to vector<8x128xf32>
    %585 = arith.addf %583, %584 : vector<8x128xf32>
    %586 = arith.mulf %585, %572 : vector<8x128xf32>
    %cst_217 = arith.constant 0.000000e+00 : f32
    %587 = vector.broadcast %cst_217 : f32 to vector<8x128xf32>
    %588 = arith.subf %587, %566 : vector<8x128xf32>
    %589 = arith.mulf %588, %566 : vector<8x128xf32>
    %590 = math.exp %589 : vector<8x128xf32>
    %591 = arith.mulf %586, %590 : vector<8x128xf32>
    %cst_218 = arith.constant 1.000000e+00 : f32
    %592 = vector.broadcast %cst_218 : f32 to vector<8x128xf32>
    %593 = arith.subf %592, %591 : vector<8x128xf32>
    %cst_219 = arith.constant 0.000000e+00 : f32
    %594 = vector.broadcast %cst_219 : f32 to vector<8x128xf32>
    %595 = arith.cmpf olt, %565, %594 : vector<8x128xf32>
    %cst_220 = arith.constant 0.000000e+00 : f32
    %596 = vector.broadcast %cst_220 : f32 to vector<8x128xf32>
    %597 = arith.subf %596, %593 : vector<8x128xf32>
    %598 = arith.select %595, %597, %593 : vector<8x128xi1>, vector<8x128xf32>
    %cst_221 = arith.constant 1.000000e+00 : f32
    %599 = vector.broadcast %cst_221 : f32 to vector<8x128xf32>
    %600 = arith.addf %599, %598 : vector<8x128xf32>
    %601 = arith.mulf %563, %600 : vector<8x128xf32>
    %c0_222 = arith.constant 0 : index
    %c6016 = arith.constant 6016 : index
    %602 = vector.load %arg7[%c0_222, %c6016] : memref<1x7168xf32, #tpu.memory_space<vmem>>, vector<1x128xf32>
    %c0_223 = arith.constant 0 : index
    %c6144 = arith.constant 6144 : index
    %603 = vector.load %arg7[%c0_223, %c6144] : memref<1x7168xf32, #tpu.memory_space<vmem>>, vector<1x128xf32>
    %cst_224 = arith.constant dense<0.000000e+00> : vector<8xf32>
    %604 = vector.multi_reduction <add>, %601, %cst_224 [1] : vector<8x128xf32> to vector<8xf32>
    %605 = vector.shape_cast %604 : vector<8xf32> to vector<8x1xf32>
    %cst_225 = arith.constant 1.280000e+02 : f32
    %606 = vector.broadcast %cst_225 : f32 to vector<8x1xf32>
    %607 = arith.divf %605, %606 : vector<8x1xf32>
    %608 = vector.broadcast %607 : vector<8x1xf32> to vector<8x128xf32>
    %609 = arith.subf %601, %608 : vector<8x128xf32>
    %610 = arith.mulf %609, %609 : vector<8x128xf32>
    %cst_226 = arith.constant dense<0.000000e+00> : vector<8xf32>
    %611 = vector.multi_reduction <add>, %610, %cst_226 [1] : vector<8x128xf32> to vector<8xf32>
    %612 = vector.shape_cast %611 : vector<8xf32> to vector<8x1xf32>
    %cst_227 = arith.constant 1.280000e+02 : f32
    %613 = vector.broadcast %cst_227 : f32 to vector<8x1xf32>
    %614 = arith.divf %612, %613 : vector<8x1xf32>
    %615 = vector.broadcast %607 : vector<8x1xf32> to vector<8x128xf32>
    %616 = arith.subf %601, %615 : vector<8x128xf32>
    %cst_228 = arith.constant 9.99999974E-6 : f32
    %617 = vector.broadcast %cst_228 : f32 to vector<8x1xf32>
    %618 = arith.addf %614, %617 : vector<8x1xf32>
    %619 = math.rsqrt %618 : vector<8x1xf32>
    %620 = vector.broadcast %619 : vector<8x1xf32> to vector<8x128xf32>
    %621 = arith.mulf %616, %620 : vector<8x128xf32>
    %622 = vector.broadcast %602 : vector<1x128xf32> to vector<8x128xf32>
    %623 = arith.mulf %621, %622 : vector<8x128xf32>
    %624 = vector.broadcast %603 : vector<1x128xf32> to vector<8x128xf32>
    %625 = arith.addf %623, %624 : vector<8x128xf32>
    %c384_229 = arith.constant 384 : index
    %c0_230 = arith.constant 0 : index
    %626 = vector.load %arg6[%c384_229, %c0_230] : memref<512x128xbf16, #tpu.memory_space<vmem>>, vector<128x3xbf16>
    %627 = arith.truncf %625 : vector<8x128xf32> to vector<8x128xbf16>
    %cst_231 = arith.constant dense<0.000000e+00> : vector<8x3xf32>
    %628 = tpu.matmul %627, %626, %cst_231 {dimension_numbers = #tpu.dot_dimension_numbers<[1], [0], [0], [1], [0, 0, 1, 1], [], []>} : vector<8x128xbf16>, vector<128x3xbf16>, vector<8x3xf32> -> vector<8x3xf32>
    %c0_232 = arith.constant 0 : index
    %c6272 = arith.constant 6272 : index
    %629 = vector.load %arg7[%c0_232, %c6272] : memref<1x7168xf32, #tpu.memory_space<vmem>>, vector<1x3xf32>
    %630 = vector.broadcast %629 : vector<1x3xf32> to vector<8x3xf32>
    %631 = arith.addf %628, %630 : vector<8x3xf32>
    %c0_233 = arith.constant 0 : index
    %c0_234 = arith.constant 0 : index
    %c0_235 = arith.constant 0 : index
    %632 = vector.load %arg8[%c0_233, %c0_234, %c0_235] : memref<1x8x3xf32, #tpu.memory_space<vmem>>, vector<1x8x3xf32>
    %633 = vector.shape_cast %632 : vector<1x8x3xf32> to vector<8x3xf32>
    %634 = vector.shape_cast %631 : vector<8x3xf32> to vector<1x8x3xf32>
    tpu.vector_store %arg8[%c0_233, %c0_234, %c0_235], %634 {strides = array<i32>} : memref<1x8x3xf32, #tpu.memory_space<vmem>>, vector<1x8x3xf32>,
    %c12 = arith.constant 12 : index
    %c0_236 = arith.constant 0 : index
    %635 = vector.load %arg5[%c12, %c0_236] : memref<13x64xbf16, #tpu.memory_space<vmem>>, vector<1x64xbf16>
    %cst_237 = arith.constant dense<0.000000e+00> : vector<1x8xf32>
    %636 = tpu.matmul %635, %510, %cst_237 {dimension_numbers = #tpu.dot_dimension_numbers<[1], [1], [0], [0], [0, 0, 1, 0], [], []>} : vector<1x64xbf16>, vector<8x64xbf16>, vector<1x8xf32> -> vector<1x8xf32>
    %c0_238 = arith.constant 0 : index
    %c7040 = arith.constant 7040 : index
    %637 = vector.load %arg7[%c0_238, %c7040] : memref<1x7168xf32, #tpu.memory_space<vmem>>, vector<1x1xf32>
    %638 = vector.broadcast %637 : vector<1x1xf32> to vector<1x8xf32>
    %639 = arith.addf %636, %638 : vector<1x8xf32>
    %cst_239 = arith.constant dense<0xFF800000> : vector<1xf32>
    %640 = vector.multi_reduction <maximumf>, %639, %cst_239 [1] : vector<1x8xf32> to vector<1xf32>
    %641 = vector.shape_cast %640 : vector<1xf32> to vector<1x1xf32>
    %642 = vector.broadcast %641 : vector<1x1xf32> to vector<1x8xf32>
    %643 = arith.subf %639, %642 : vector<1x8xf32>
    %644 = math.exp %643 : vector<1x8xf32>
    %cst_240 = arith.constant dense<0.000000e+00> : vector<1xf32>
    %645 = vector.multi_reduction <add>, %644, %cst_240 [1] : vector<1x8xf32> to vector<1xf32>
    %646 = vector.shape_cast %645 : vector<1xf32> to vector<1x1xf32>
    %647 = vector.broadcast %646 : vector<1x1xf32> to vector<1x8xf32>
    %648 = arith.divf %644, %647 : vector<1x8xf32>
    %649 = arith.truncf %648 : vector<1x8xf32> to vector<1x8xbf16>
    %cst_241 = arith.constant dense<0.000000e+00> : vector<1x64xf32>
    %650 = tpu.matmul %649, %510, %cst_241 {dimension_numbers = #tpu.dot_dimension_numbers<[1], [0], [0], [1], [0, 0, 1, 1], [], []>} : vector<1x8xbf16>, vector<8x64xbf16>, vector<1x64xf32> -> vector<1x64xf32>
    %c192_242 = arith.constant 192 : index
    %c0_243 = arith.constant 0 : index
    %651 = vector.load %arg6[%c192_242, %c0_243] : memref<512x128xbf16, #tpu.memory_space<vmem>>, vector<64x128xbf16>
    %652 = arith.truncf %650 : vector<1x64xf32> to vector<1x64xbf16>
    %cst_244 = arith.constant dense<0.000000e+00> : vector<1x128xf32>
    %653 = tpu.matmul %652, %651, %cst_244 {dimension_numbers = #tpu.dot_dimension_numbers<[1], [0], [0], [1], [0, 0, 1, 1], [], []>} : vector<1x64xbf16>, vector<64x128xbf16>, vector<1x128xf32> -> vector<1x128xf32>
    %c0_245 = arith.constant 0 : index
    %c6400 = arith.constant 6400 : index
    %654 = vector.load %arg7[%c0_245, %c6400] : memref<1x7168xf32, #tpu.memory_space<vmem>>, vector<1x128xf32>
    %655 = arith.addf %653, %654 : vector<1x128xf32>
    %cst_246 = arith.constant 5.000000e-01 : f32
    %656 = vector.broadcast %cst_246 : f32 to vector<1x128xf32>
    %657 = arith.mulf %656, %655 : vector<1x128xf32>
    %cst_247 = arith.constant 0.707106769 : f32
    %658 = vector.broadcast %cst_247 : f32 to vector<1x128xf32>
    %659 = arith.mulf %655, %658 : vector<1x128xf32>
    %660 = math.absf %659 : vector<1x128xf32>
    %cst_248 = arith.constant 0.327591091 : f32
    %661 = vector.broadcast %cst_248 : f32 to vector<1x128xf32>
    %662 = arith.mulf %661, %660 : vector<1x128xf32>
    %cst_249 = arith.constant 1.000000e+00 : f32
    %663 = vector.broadcast %cst_249 : f32 to vector<1x128xf32>
    %664 = arith.addf %663, %662 : vector<1x128xf32>
    %cst_250 = arith.constant 1.000000e+00 : f32
    %665 = vector.broadcast %cst_250 : f32 to vector<1x128xf32>
    %666 = arith.divf %665, %664 : vector<1x128xf32>
    %cst_251 = arith.constant 1.06140542 : f32
    %667 = vector.broadcast %cst_251 : f32 to vector<1x128xf32>
    %668 = arith.mulf %667, %666 : vector<1x128xf32>
    %cst_252 = arith.constant 1.45315206 : f32
    %669 = vector.broadcast %cst_252 : f32 to vector<1x128xf32>
    %670 = arith.subf %668, %669 : vector<1x128xf32>
    %671 = arith.mulf %670, %666 : vector<1x128xf32>
    %cst_253 = arith.constant 1.42141378 : f32
    %672 = vector.broadcast %cst_253 : f32 to vector<1x128xf32>
    %673 = arith.addf %671, %672 : vector<1x128xf32>
    %674 = arith.mulf %673, %666 : vector<1x128xf32>
    %cst_254 = arith.constant 0.284496725 : f32
    %675 = vector.broadcast %cst_254 : f32 to vector<1x128xf32>
    %676 = arith.subf %674, %675 : vector<1x128xf32>
    %677 = arith.mulf %676, %666 : vector<1x128xf32>
    %cst_255 = arith.constant 0.254829586 : f32
    %678 = vector.broadcast %cst_255 : f32 to vector<1x128xf32>
    %679 = arith.addf %677, %678 : vector<1x128xf32>
    %680 = arith.mulf %679, %666 : vector<1x128xf32>
    %cst_256 = arith.constant 0.000000e+00 : f32
    %681 = vector.broadcast %cst_256 : f32 to vector<1x128xf32>
    %682 = arith.subf %681, %660 : vector<1x128xf32>
    %683 = arith.mulf %682, %660 : vector<1x128xf32>
    %684 = math.exp %683 : vector<1x128xf32>
    %685 = arith.mulf %680, %684 : vector<1x128xf32>
    %cst_257 = arith.constant 1.000000e+00 : f32
    %686 = vector.broadcast %cst_257 : f32 to vector<1x128xf32>
    %687 = arith.subf %686, %685 : vector<1x128xf32>
    %cst_258 = arith.constant 0.000000e+00 : f32
    %688 = vector.broadcast %cst_258 : f32 to vector<1x128xf32>
    %689 = arith.cmpf olt, %659, %688 : vector<1x128xf32>
    %cst_259 = arith.constant 0.000000e+00 : f32
    %690 = vector.broadcast %cst_259 : f32 to vector<1x128xf32>
    %691 = arith.subf %690, %687 : vector<1x128xf32>
    %692 = arith.select %689, %691, %687 : vector<1x128xi1>, vector<1x128xf32>
    %cst_260 = arith.constant 1.000000e+00 : f32
    %693 = vector.broadcast %cst_260 : f32 to vector<1x128xf32>
    %694 = arith.addf %693, %692 : vector<1x128xf32>
    %695 = arith.mulf %657, %694 : vector<1x128xf32>
    %c256_261 = arith.constant 256 : index
    %c0_262 = arith.constant 0 : index
    %696 = vector.load %arg6[%c256_261, %c0_262] : memref<512x128xbf16, #tpu.memory_space<vmem>>, vector<128x128xbf16>
    %697 = arith.truncf %695 : vector<1x128xf32> to vector<1x128xbf16>
    %cst_263 = arith.constant dense<0.000000e+00> : vector<1x128xf32>
    %698 = tpu.matmul %697, %696, %cst_263 {dimension_numbers = #tpu.dot_dimension_numbers<[1], [0], [0], [1], [0, 0, 1, 1], [], []>} : vector<1x128xbf16>, vector<128x128xbf16>, vector<1x128xf32> -> vector<1x128xf32>
    %c0_264 = arith.constant 0 : index
    %c6528 = arith.constant 6528 : index
    %699 = vector.load %arg7[%c0_264, %c6528] : memref<1x7168xf32, #tpu.memory_space<vmem>>, vector<1x128xf32>
    %700 = arith.addf %698, %699 : vector<1x128xf32>
    %cst_265 = arith.constant 5.000000e-01 : f32
    %701 = vector.broadcast %cst_265 : f32 to vector<1x128xf32>
    %702 = arith.mulf %701, %700 : vector<1x128xf32>
    %cst_266 = arith.constant 0.707106769 : f32
    %703 = vector.broadcast %cst_266 : f32 to vector<1x128xf32>
    %704 = arith.mulf %700, %703 : vector<1x128xf32>
    %705 = math.absf %704 : vector<1x128xf32>
    %cst_267 = arith.constant 0.327591091 : f32
    %706 = vector.broadcast %cst_267 : f32 to vector<1x128xf32>
    %707 = arith.mulf %706, %705 : vector<1x128xf32>
    %cst_268 = arith.constant 1.000000e+00 : f32
    %708 = vector.broadcast %cst_268 : f32 to vector<1x128xf32>
    %709 = arith.addf %708, %707 : vector<1x128xf32>
    %cst_269 = arith.constant 1.000000e+00 : f32
    %710 = vector.broadcast %cst_269 : f32 to vector<1x128xf32>
    %711 = arith.divf %710, %709 : vector<1x128xf32>
    %cst_270 = arith.constant 1.06140542 : f32
    %712 = vector.broadcast %cst_270 : f32 to vector<1x128xf32>
    %713 = arith.mulf %712, %711 : vector<1x128xf32>
    %cst_271 = arith.constant 1.45315206 : f32
    %714 = vector.broadcast %cst_271 : f32 to vector<1x128xf32>
    %715 = arith.subf %713, %714 : vector<1x128xf32>
    %716 = arith.mulf %715, %711 : vector<1x128xf32>
    %cst_272 = arith.constant 1.42141378 : f32
    %717 = vector.broadcast %cst_272 : f32 to vector<1x128xf32>
    %718 = arith.addf %716, %717 : vector<1x128xf32>
    %719 = arith.mulf %718, %711 : vector<1x128xf32>
    %cst_273 = arith.constant 0.284496725 : f32
    %720 = vector.broadcast %cst_273 : f32 to vector<1x128xf32>
    %721 = arith.subf %719, %720 : vector<1x128xf32>
    %722 = arith.mulf %721, %711 : vector<1x128xf32>
    %cst_274 = arith.constant 0.254829586 : f32
    %723 = vector.broadcast %cst_274 : f32 to vector<1x128xf32>
    %724 = arith.addf %722, %723 : vector<1x128xf32>
    %725 = arith.mulf %724, %711 : vector<1x128xf32>
    %cst_275 = arith.constant 0.000000e+00 : f32
    %726 = vector.broadcast %cst_275 : f32 to vector<1x128xf32>
    %727 = arith.subf %726, %705 : vector<1x128xf32>
    %728 = arith.mulf %727, %705 : vector<1x128xf32>
    %729 = math.exp %728 : vector<1x128xf32>
    %730 = arith.mulf %725, %729 : vector<1x128xf32>
    %cst_276 = arith.constant 1.000000e+00 : f32
    %731 = vector.broadcast %cst_276 : f32 to vector<1x128xf32>
    %732 = arith.subf %731, %730 : vector<1x128xf32>
    %cst_277 = arith.constant 0.000000e+00 : f32
    %733 = vector.broadcast %cst_277 : f32 to vector<1x128xf32>
    %734 = arith.cmpf olt, %704, %733 : vector<1x128xf32>
    %cst_278 = arith.constant 0.000000e+00 : f32
    %735 = vector.broadcast %cst_278 : f32 to vector<1x128xf32>
    %736 = arith.subf %735, %732 : vector<1x128xf32>
    %737 = arith.select %734, %736, %732 : vector<1x128xi1>, vector<1x128xf32>
    %cst_279 = arith.constant 1.000000e+00 : f32
    %738 = vector.broadcast %cst_279 : f32 to vector<1x128xf32>
    %739 = arith.addf %738, %737 : vector<1x128xf32>
    %740 = arith.mulf %702, %739 : vector<1x128xf32>
    %c0_280 = arith.constant 0 : index
    %c6656 = arith.constant 6656 : index
    %741 = vector.load %arg7[%c0_280, %c6656] : memref<1x7168xf32, #tpu.memory_space<vmem>>, vector<1x128xf32>
    %c0_281 = arith.constant 0 : index
    %c6784 = arith.constant 6784 : index
    %742 = vector.load %arg7[%c0_281, %c6784] : memref<1x7168xf32, #tpu.memory_space<vmem>>, vector<1x128xf32>
    %cst_282 = arith.constant dense<0.000000e+00> : vector<1xf32>
    %743 = vector.multi_reduction <add>, %740, %cst_282 [1] : vector<1x128xf32> to vector<1xf32>
    %744 = vector.shape_cast %743 : vector<1xf32> to vector<1x1xf32>
    %cst_283 = arith.constant 1.280000e+02 : f32
    %745 = vector.broadcast %cst_283 : f32 to vector<1x1xf32>
    %746 = arith.divf %744, %745 : vector<1x1xf32>
    %747 = vector.broadcast %746 : vector<1x1xf32> to vector<1x128xf32>
    %748 = arith.subf %740, %747 : vector<1x128xf32>
    %749 = arith.mulf %748, %748 : vector<1x128xf32>
    %cst_284 = arith.constant dense<0.000000e+00> : vector<1xf32>
    %750 = vector.multi_reduction <add>, %749, %cst_284 [1] : vector<1x128xf32> to vector<1xf32>
    %751 = vector.shape_cast %750 : vector<1xf32> to vector<1x1xf32>
    %cst_285 = arith.constant 1.280000e+02 : f32
    %752 = vector.broadcast %cst_285 : f32 to vector<1x1xf32>
    %753 = arith.divf %751, %752 : vector<1x1xf32>
    %754 = vector.broadcast %746 : vector<1x1xf32> to vector<1x128xf32>
    %755 = arith.subf %740, %754 : vector<1x128xf32>
    %cst_286 = arith.constant 9.99999974E-6 : f32
    %756 = vector.broadcast %cst_286 : f32 to vector<1x1xf32>
    %757 = arith.addf %753, %756 : vector<1x1xf32>
    %758 = math.rsqrt %757 : vector<1x1xf32>
    %759 = vector.broadcast %758 : vector<1x1xf32> to vector<1x128xf32>
    %760 = arith.mulf %755, %759 : vector<1x128xf32>
    %761 = arith.mulf %760, %741 : vector<1x128xf32>
    %762 = arith.addf %761, %742 : vector<1x128xf32>
    %c384_287 = arith.constant 384 : index
    %c3_288 = arith.constant 3 : index
    %763 = vector.load %arg6[%c384_287, %c3_288] : memref<512x128xbf16, #tpu.memory_space<vmem>>, vector<128x1xbf16>
    %764 = arith.truncf %762 : vector<1x128xf32> to vector<1x128xbf16>
    %cst_289 = arith.constant dense<0.000000e+00> : vector<1x1xf32>
    %765 = tpu.matmul %764, %763, %cst_289 {dimension_numbers = #tpu.dot_dimension_numbers<[1], [0], [0], [1], [0, 0, 1, 1], [], []>} : vector<1x128xbf16>, vector<128x1xbf16>, vector<1x1xf32> -> vector<1x1xf32>
    %c0_290 = arith.constant 0 : index
    %c6912 = arith.constant 6912 : index
    %766 = vector.load %arg7[%c0_290, %c6912] : memref<1x7168xf32, #tpu.memory_space<vmem>>, vector<1x1xf32>
    %767 = arith.addf %765, %766 : vector<1x1xf32>
    %c0_291 = arith.constant 0 : index
    %c0_292 = arith.constant 0 : index
    %c0_293 = arith.constant 0 : index
    %768 = vector.load %arg9[%c0_291, %c0_292, %c0_293] : memref<1x1x1xf32, #tpu.memory_space<vmem>>, vector<1x1x1xf32>
    %769 = vector.shape_cast %768 : vector<1x1x1xf32> to vector<1x1xf32>
    %770 = vector.shape_cast %767 : vector<1x1xf32> to vector<1x1x1xf32>
    tpu.vector_store %arg9[%c0_291, %c0_292, %c0_293], %770 {strides = array<i32>} : memref<1x1x1xf32, #tpu.memory_space<vmem>>, vector<1x1x1xf32>,
    return
  }
  func.func @transform_0(%arg0: i32) -> (i32, i32, i32) {
    %c0_i32 = arith.constant 0 : i32
    %c0_i32_0 = arith.constant 0 : i32
    %c0_i32_1 = arith.constant 0 : i32
    return %arg0, %c0_i32, %c0_i32_0 : i32, i32, i32
  }
  func.func @transform_1(%arg0: i32) -> (i32, i32, i32) {
    %c0_i32 = arith.constant 0 : i32
    %c0_i32_0 = arith.constant 0 : i32
    %c0_i32_1 = arith.constant 0 : i32
    %c0_i32_2 = arith.constant 0 : i32
    return %c0_i32, %c0_i32_0, %c0_i32_1 : i32, i32, i32
  }
  func.func @transform_2(%arg0: i32) -> (i32, i32, i32) {
    %c0_i32 = arith.constant 0 : i32
    %c0_i32_0 = arith.constant 0 : i32
    %c0_i32_1 = arith.constant 0 : i32
    %c0_i32_2 = arith.constant 0 : i32
    return %c0_i32, %c0_i32_0, %c0_i32_1 : i32, i32, i32
  }
  func.func @transform_3(%arg0: i32) -> (i32, i32, i32) {
    %c0_i32 = arith.constant 0 : i32
    %c0_i32_0 = arith.constant 0 : i32
    %c0_i32_1 = arith.constant 0 : i32
    %c0_i32_2 = arith.constant 0 : i32
    return %c0_i32, %c0_i32_0, %c0_i32_1 : i32, i32, i32
  }
  func.func @transform_4(%arg0: i32) -> (i32, i32) {
    %c0_i32 = arith.constant 0 : i32
    %c0_i32_0 = arith.constant 0 : i32
    %c0_i32_1 = arith.constant 0 : i32
    return %c0_i32, %c0_i32_0 : i32, i32
  }
  func.func @transform_5(%arg0: i32) -> (i32, i32) {
    %c0_i32 = arith.constant 0 : i32
    %c0_i32_0 = arith.constant 0 : i32
    %c0_i32_1 = arith.constant 0 : i32
    return %c0_i32, %c0_i32_0 : i32, i32
  }
  func.func @transform_6(%arg0: i32) -> (i32, i32) {
    %c0_i32 = arith.constant 0 : i32
    %c0_i32_0 = arith.constant 0 : i32
    %c0_i32_1 = arith.constant 0 : i32
    return %c0_i32, %c0_i32_0 : i32, i32
  }
  func.func @transform_7(%arg0: i32) -> (i32, i32, i32) {
    %c0_i32 = arith.constant 0 : i32
    %c0_i32_0 = arith.constant 0 : i32
    %c0_i32_1 = arith.constant 0 : i32
    return %arg0, %c0_i32, %c0_i32_0 : i32, i32, i32
  }
  func.func @transform_8(%arg0: i32) -> (i32, i32, i32) {
    %c0_i32 = arith.constant 0 : i32
    %c0_i32_0 = arith.constant 0 : i32
    %c0_i32_1 = arith.constant 0 : i32
    return %arg0, %c0_i32, %c0_i32_0 : i32, i32, i32
  }
}

</mosaic_0001>

<llo_original>
// kernel: tpu_custom_call.1
$region0: #{tpu_custom_call.1}
  #allocation0 [shape = 'u32[]', space=smem, size = 0x4, offset = 0x4, fixed_abs, tag = 'smem constant byte address 0x4 - core index']
  #allocation1 [shape = 'u32[72,128]{1,0:T(1,128)}', space=vmem, size = 0x9000, scoped, tag = 'internal scratch']
  %s0 = inlined_call_operand.vmem [shape: f32[2,8,12], index: 0, kind: input, shape index: {}]
  %s1 = inlined_call_operand.vmem [shape: bf16[4,64,256], index: 1, kind: input, shape index: {}]
  %s2 = inlined_call_operand.vmem [shape: bf16[2,64,1024], index: 2, kind: input, shape index: {}]
  %s3 = inlined_call_operand.vmem [shape: bf16[2,1024,64], index: 3, kind: input, shape index: {}]
  %s4 = inlined_call_operand.vmem [shape: bf16[13,64], index: 4, kind: input, shape index: {}]
  %s5 = inlined_call_operand.vmem [shape: bf16[512,128], index: 5, kind: input, shape index: {}]
  %s6 = inlined_call_operand.vmem [shape: f32[1,7168], index: 6, kind: input, shape index: {}]
  %s7 = inlined_call_operand.vmem [shape: f32[2,8,3], index: 7, kind: output, shape index: {0}]
  %s8 = inlined_call_operand.vmem [shape: f32[2,1,1], index: 8, kind: output, shape index: {1}]
  %9 = xla_tuple %s7, %s8
  %s10 = sld [smem:[#allocation0]]
  $region69: #{tpu_custom_call.1} parent=0
    _
  %s12 = ssub.s32 1, %s10
  %s13 = scalar_select 0, %s12, %s10
  loop: start=0, step=1, limit=4
  $region2: #{tpu_custom_call.1} parent=0 // loop_pre_header
    _
  $region3: #{tpu_custom_call.1} parent=0 // loop_header
    %s15 = sphi 0, %s19
    %p16 = scmp.ge.s32.totalorder %s15, 4
    %s25 = sphi 0, %s27
    %s28 = sphi 0, %s25
    %s29 = sphi 0, %s28
    %s45 = sphi 0, %s29
    %s49 = sphi 0, %s49
    %s51 = sphi 0, %s49
    %s52 = sphi 0, %s51
    %s66 = sphi 0, %s52
    %s70 = sphi 0, %s70
    %s72 = sphi 0, %s70
    %s73 = sphi 0, %s72
    %s87 = sphi 0, %s73
    %s91 = sphi 0, %s91
    %s93 = sphi 0, %s91
    %s94 = sphi 0, %s93
    %s108 = sphi 0, %s94
    %s112 = sphi 0, %s112
    %s114 = sphi 0, %s112
    %s115 = sphi 0, %s114
    %s129 = sphi 0, %s115
    %s133 = sphi 0, %s133
    %s135 = sphi 0, %s133
    %s136 = sphi 0, %s135
    %s150 = sphi 0, %s136
    %s154 = sphi 0, %s154
    %s156 = sphi 0, %s154
    %s157 = sphi 0, %s156
    %s171 = sphi 0, %s157
    %s177 = sphi 0, %s179
    %s180 = sphi 0, %s177
    %s181 = sphi 0, %s180
    %s197 = sphi 0, %s181
    %s203 = sphi 0, %s205
    %s206 = sphi 0, %s203
    %s207 = sphi 0, %s206
    %s223 = sphi 0, %s207
  $region4: #{tpu_custom_call.1} parent=0 // loop_header_branch
    %18 = sbr.rel (%p16) target = $region8
  $region5: #{tpu_custom_call.1} parent=0 // loop_body
    %s20 = ssub.s32 %s15, 1
    %s21 = ssub.s32 %s15, 2
    %s22 = sadd.s32 %s15, 1
    %s23 = ssub.s32 %s15, %s22
    %p24 = scmp.eq.s32.totalorder %s23, 0
    %s26 = sadd.s32 %s25, 1
    %s27 = scalar_select %p24, %s25, %s26
    %p30 = pneg %p24
    %p31 = scmp.eq.s32.totalorder %s15, 1
    %p32 = por %p30, %p31
    %p33 = scmp.ne.s32.totalorder %s25, %s28
    %p34 = scmp.eq.s32.totalorder %s15, 0
    %p35 = por %p33, %p34
    %p36 = scmp.ne.s32.totalorder %s25, %s28
    %p37 = scmp.eq.s32.totalorder %s20, 1
    %p38 = por %p36, %p37
    %p39 = scmp.ne.s32.totalorder %s28, %s29
    %p40 = scmp.eq.s32.totalorder %s20, 0
    %p41 = por %p39, %p40
    %p42 = scmp.ne.s32.totalorder %s28, %s29
    %p43 = scmp.eq.s32.totalorder %s21, 1
    %p44 = por %p42, %p43
    %p46 = scmp.ne.s32.totalorder %s29, %s45
    %p47 = scmp.eq.s32.totalorder %s21, 0
    %p48 = por %p46, %p47
    %s50 = sadd.s32 %s49, 1
    %p53 = scmp.eq.s32.totalorder %s15, 1
    %p54 = scmp.ne.s32.totalorder %s49, %s51
    %p55 = scmp.eq.s32.totalorder %s15, 0
    %p56 = por %p54, %p55
    %p57 = scmp.ne.s32.totalorder %s49, %s51
    %p58 = scmp.eq.s32.totalorder %s20, 1
    %p59 = por %p57, %p58
    %p60 = scmp.ne.s32.totalorder %s51, %s52
    %p61 = scmp.eq.s32.totalorder %s20, 0
    %p62 = por %p60, %p61
    %p63 = scmp.ne.s32.totalorder %s51, %s52
    %p64 = scmp.eq.s32.totalorder %s21, 1
    %p65 = por %p63, %p64
    %p67 = scmp.ne.s32.totalorder %s52, %s66
    %p68 = scmp.eq.s32.totalorder %s21, 0
    %p69 = por %p67, %p68
    %s71 = sadd.s32 %s70, 1
    %p74 = scmp.eq.s32.totalorder %s15, 1
    %p75 = scmp.ne.s32.totalorder %s70, %s72
    %p76 = scmp.eq.s32.totalorder %s15, 0
    %p77 = por %p75, %p76
    %p78 = scmp.ne.s32.totalorder %s70, %s72
    %p79 = scmp.eq.s32.totalorder %s20, 1
    %p80 = por %p78, %p79
    %p81 = scmp.ne.s32.totalorder %s72, %s73
    %p82 = scmp.eq.s32.totalorder %s20, 0
    %p83 = por %p81, %p82
    %p84 = scmp.ne.s32.totalorder %s72, %s73
    %p85 = scmp.eq.s32.totalorder %s21, 1
    %p86 = por %p84, %p85
    %p88 = scmp.ne.s32.totalorder %s73, %s87
    %p89 = scmp.eq.s32.totalorder %s21, 0
    %p90 = por %p88, %p89
    %s92 = sadd.s32 %s91, 1
    %p95 = scmp.eq.s32.totalorder %s15, 1
    %p96 = scmp.ne.s32.totalorder %s91, %s93
    %p97 = scmp.eq.s32.totalorder %s15, 0
    %p98 = por %p96, %p97
    %p99 = scmp.ne.s32.totalorder %s91, %s93
    %p100 = scmp.eq.s32.totalorder %s20, 1
    %p101 = por %p99, %p100
    %p102 = scmp.ne.s32.totalorder %s93, %s94
    %p103 = scmp.eq.s32.totalorder %s20, 0
    %p104 = por %p102, %p103
    %p105 = scmp.ne.s32.totalorder %s93, %s94
    %p106 = scmp.eq.s32.totalorder %s21, 1
    %p107 = por %p105, %p106
    %p109 = scmp.ne.s32.totalorder %s94, %s108
    %p110 = scmp.eq.s32.totalorder %s21, 0
    %p111 = por %p109, %p110
    %s113 = sadd.s32 %s112, 1
    %p116 = scmp.eq.s32.totalorder %s15, 1
    %p117 = scmp.ne.s32.totalorder %s112, %s114
    %p118 = scmp.eq.s32.totalorder %s15, 0
    %p119 = por %p117, %p118
    %p120 = scmp.ne.s32.totalorder %s112, %s114
    %p121 = scmp.eq.s32.totalorder %s20, 1
    %p122 = por %p120, %p121
    %p123 = scmp.ne.s32.totalorder %s114, %s115
    %p124 = scmp.eq.s32.totalorder %s20, 0
    %p125 = por %p123, %p124
    %p126 = scmp.ne.s32.totalorder %s114, %s115
    %p127 = scmp.eq.s32.totalorder %s21, 1
    %p128 = por %p126, %p127
    %p130 = scmp.ne.s32.totalorder %s115, %s129
    %p131 = scmp.eq.s32.totalorder %s21, 0
    %p132 = por %p130, %p131
    %s134 = sadd.s32 %s133, 1
    %p137 = scmp.eq.s32.totalorder %s15, 1
    %p138 = scmp.ne.s32.totalorder %s133, %s135
    %p139 = scmp.eq.s32.totalorder %s15, 0
    %p140 = por %p138, %p139
    %p141 = scmp.ne.s32.totalorder %s133, %s135
    %p142 = scmp.eq.s32.totalorder %s20, 1
    %p143 = por %p141, %p142
    %p144 = scmp.ne.s32.totalorder %s135, %s136
    %p145 = scmp.eq.s32.totalorder %s20, 0
    %p146 = por %p144, %p145
    %p147 = scmp.ne.s32.totalorder %s135, %s136
    %p148 = scmp.eq.s32.totalorder %s21, 1
    %p149 = por %p147, %p148
    %p151 = scmp.ne.s32.totalorder %s136, %s150
    %p152 = scmp.eq.s32.totalorder %s21, 0
    %p153 = por %p151, %p152
    %s155 = sadd.s32 %s154, 1
    %p158 = scmp.eq.s32.totalorder %s15, 1
    %p159 = scmp.ne.s32.totalorder %s154, %s156
    %p160 = scmp.eq.s32.totalorder %s15, 0
    %p161 = por %p159, %p160
    %p162 = scmp.ne.s32.totalorder %s154, %s156
    %p163 = scmp.eq.s32.totalorder %s20, 1
    %p164 = por %p162, %p163
    %p165 = scmp.ne.s32.totalorder %s156, %s157
    %p166 = scmp.eq.s32.totalorder %s20, 0
    %p167 = por %p165, %p166
    %p168 = scmp.ne.s32.totalorder %s156, %s157
    %p169 = scmp.eq.s32.totalorder %s21, 1
    %p170 = por %p168, %p169
    %p172 = scmp.ne.s32.totalorder %s157, %s171
    %p173 = scmp.eq.s32.totalorder %s21, 0
    %p174 = por %p172, %p173
    %s175 = ssub.s32 %s15, %s22
    %p176 = scmp.eq.s32.totalorder %s175, 0
    %s178 = sadd.s32 %s177, 1
    %s179 = scalar_select %p176, %s177, %s178
    %p182 = pneg %p176
    %p183 = scmp.eq.s32.totalorder %s15, 1
    %p184 = por %p182, %p183
    %p185 = scmp.ne.s32.totalorder %s177, %s180
    %p186 = scmp.eq.s32.totalorder %s15, 0
    %p187 = por %p185, %p186
    %p188 = scmp.ne.s32.totalorder %s177, %s180
    %p189 = scmp.eq.s32.totalorder %s20, 1
    %p190 = por %p188, %p189
    %p191 = scmp.ne.s32.totalorder %s180, %s181
    %p192 = scmp.eq.s32.totalorder %s20, 0
    %p193 = por %p191, %p192
    %p194 = scmp.ne.s32.totalorder %s180, %s181
    %p195 = scmp.eq.s32.totalorder %s21, 1
    %p196 = por %p194, %p195
    %p198 = scmp.ne.s32.totalorder %s181, %s197
    %p199 = scmp.eq.s32.totalorder %s21, 0
    %p200 = por %p198, %p199
    %s201 = ssub.s32 %s15, %s22
    %p202 = scmp.eq.s32.totalorder %s201, 0
    %s204 = sadd.s32 %s203, 1
    %s205 = scalar_select %p202, %s203, %s204
    %p208 = pneg %p202
    %p209 = scmp.eq.s32.totalorder %s15, 1
    %p210 = por %p208, %p209
    %p211 = scmp.ne.s32.totalorder %s203, %s206
    %p212 = scmp.eq.s32.totalorder %s15, 0
    %p213 = por %p211, %p212
    %p214 = scmp.ne.s32.totalorder %s203, %s206
    %p215 = scmp.eq.s32.totalorder %s20, 1
    %p216 = por %p214, %p215
    %p217 = scmp.ne.s32.totalorder %s206, %s207
    %p218 = scmp.eq.s32.totalorder %s20, 0
    %p219 = por %p217, %p218
    %p220 = scmp.ne.s32.totalorder %s206, %s207
    %p221 = scmp.eq.s32.totalorder %s21, 1
    %p222 = por %p220, %p221
    %p224 = scmp.ne.s32.totalorder %s207, %s223
    %p225 = scmp.eq.s32.totalorder %s21, 0
    %p226 = por %p224, %p225
    %p227 = scmp.le.s32.totalorder 1, %s15
    %p228 = scmp.lt.s32.totalorder %s15, 3
    %p229 = pnand %p227, %p228
    %p230 = pneg %p229
    // Predicated region
    $region9: #{tpu_custom_call.1} parent=5 // pred_check
      _
    $region10: #{tpu_custom_call.1} parent=5 // pred_check_branch
      %232 = sbr.rel (%p229) target = $region12
    $region11: #{tpu_custom_call.1} parent=5 // pred_region
      %s233 = ssub.s32 %s15, 1
      // Predicated region
      $region13: #{tpu_custom_call.1} parent=11 // pred_check
        %p234 = pneg %p62
      $region14: #{tpu_custom_call.1} parent=11 // pred_check_branch
        %236 = sbr.rel (%p234) target = $region16
      $region15: #{tpu_custom_call.1} parent=11 // pred_region
        _
      $region16: #{tpu_custom_call.1} parent=11 // pred_fallthru
        _
      // Predicated region
      $region17: #{tpu_custom_call.1} parent=11 // pred_check
        %p237 = pneg %p83
      $region18: #{tpu_custom_call.1} parent=11 // pred_check_branch
        %239 = sbr.rel (%p237) target = $region20
      $region19: #{tpu_custom_call.1} parent=11 // pred_region
        _
      $region20: #{tpu_custom_call.1} parent=11 // pred_fallthru
        _
      // Predicated region
      $region21: #{tpu_custom_call.1} parent=11 // pred_check
        %p240 = pneg %p104
      $region22: #{tpu_custom_call.1} parent=11 // pred_check_branch
        %242 = sbr.rel (%p240) target = $region24
      $region23: #{tpu_custom_call.1} parent=11 // pred_region
        _
      $region24: #{tpu_custom_call.1} parent=11 // pred_fallthru
        _
      // Predicated region
      $region25: #{tpu_custom_call.1} parent=11 // pred_check
        %p243 = pneg %p125
      $region26: #{tpu_custom_call.1} parent=11 // pred_check_branch
        %245 = sbr.rel (%p243) target = $region28
      $region27: #{tpu_custom_call.1} parent=11 // pred_region
        _
      $region28: #{tpu_custom_call.1} parent=11 // pred_fallthru
        _
      // Predicated region
      $region29: #{tpu_custom_call.1} parent=11 // pred_check
        %p246 = pneg %p146
      $region30: #{tpu_custom_call.1} parent=11 // pred_check_branch
        %248 = sbr.rel (%p246) target = $region32
      $region31: #{tpu_custom_call.1} parent=11 // pred_region
        _
      $region32: #{tpu_custom_call.1} parent=11 // pred_fallthru
        _
      // Predicated region
      $region33: #{tpu_custom_call.1} parent=11 // pred_check
        %p249 = pneg %p167
      $region34: #{tpu_custom_call.1} parent=11 // pred_check_branch
        %251 = sbr.rel (%p249) target = $region36
      $region35: #{tpu_custom_call.1} parent=11 // pred_region
        _
      $region36: #{tpu_custom_call.1} parent=11 // pred_fallthru
        _
    $region12: #{tpu_custom_call.1} parent=5 // pred_fallthru
      _
    %p252 = scmp.lt.s32.totalorder %s15, 2
    // Predicated region
    $region37: #{tpu_custom_call.1} parent=5 // pred_check
      %p253 = pneg %p252
    $region38: #{tpu_custom_call.1} parent=5 // pred_check_branch
      %255 = sbr.rel (%p253) target = $region40
    $region39: #{tpu_custom_call.1} parent=5 // pred_region
      // Predicated region
      $region41: #{tpu_custom_call.1} parent=39 // pred_check
        %p256 = pneg %p35
      $region42: #{tpu_custom_call.1} parent=39 // pred_check_branch
        %258 = sbr.rel (%p256) target = $region44
      $region43: #{tpu_custom_call.1} parent=39 // pred_region
        %p259 = scmp.lt.s32.totalorder %s15, 1
        %s260 = scalar_select %p259, %s15, 1
        %s261 = smul.addr %s260, 8
        %s262 = scalar_lea.vmem %s0, %s261
      $region44: #{tpu_custom_call.1} parent=39 // pred_fallthru
        _
    $region40: #{tpu_custom_call.1} parent=5 // pred_fallthru
      _
    %p263 = scmp.le.s32.totalorder 1, %s15
    %p264 = scmp.lt.s32.totalorder %s15, 3
    %p265 = pnand %p263, %p264
    %p266 = pneg %p265
    // Predicated region
    $region45: #{tpu_custom_call.1} parent=5 // pred_check
      _
    $region46: #{tpu_custom_call.1} parent=5 // pred_check_branch
      %268 = sbr.rel (%p265) target = $region48
    $region47: #{tpu_custom_call.1} parent=5 // pred_region
      %s269 = ssub.s32 %s15, 1
      %p270 = scmp.lt.s32.totalorder %s20, 1
      %s271 = scalar_select %p270, %s20, 1
      %s272 = smul.addr %s271, 8
      %s273 = scalar_lea.vmem %s0, %s272
      %p274 = pneg %p41
      %p275 = pneg %p38
      %p276 = pneg %p62
      %p277 = pneg %p59
      %p278 = pneg %p83
      %p279 = pneg %p80
      %p280 = pneg %p104
      %p281 = pneg %p101
      %p282 = pneg %p125
      %p283 = pneg %p122
      %p284 = pneg %p146
      %p285 = pneg %p143
      %p286 = pneg %p167
      %p287 = pneg %p164
      %p288 = pneg %p193
      %p289 = pneg %p190
      %p290 = scmp.lt.s32.totalorder %s20, 1
      %s291 = scalar_select %p290, %s20, 1
      %s292 = smul.addr %s291, 8
      %s293 = scalar_lea.vmem %s7, %s292
      %p294 = pneg %p219
      %p295 = pneg %p216
      %p296 = scmp.lt.s32.totalorder %s20, 1
      %s297 = scalar_select %p296, %s20, 1
      %s298 = scalar_lea.vmem %s8, %s297
      %p299 = scmp.lt.s32.totalorder %s20, 1
      %s300 = scalar_select %p299, %s20, 1
      %s301 = smul.addr %s300, 8
      %s302 = scalar_lea.vmem %s0, %s301
      %p303 = scmp.lt.s32.totalorder %s20, 1
      %s304 = scalar_select %p303, %s20, 1
      %s305 = smul.addr %s304, 8
      %s306 = scalar_lea.vmem %s7, %s305
      %p307 = scmp.lt.s32.totalorder %s20, 1
      %s308 = scalar_select %p307, %s20, 1
      %s309 = scalar_lea.vmem %s8, %s308
      %v311 = vlaneseq
      %v312 = vshrl.u32 %v311, 7
      %v313 = vlaneseq
      %v314 = vand.u32 %v313, 127
      %vm315 = vcmp.le.s32.totalorder %v314, %v312
      %v316 = vsel %vm315, 0.0, -1e+30
      %v317 = vld [vmem:[%s302] sm:$0xff]
      %v318 = vld [vmem:[%s6] sm:$0x1]
      %v319 = vld [vmem:[%s6 + $0x1] sm:$0x1]
      %vm320 = vcmask 97280
      %v321 = vsel %vm320, %v317, 0.0
      %322 = vadd.xlane.f32.xlu0 %v321
      %v323 = vpop.xlane.xlu0 %322
      %v324 = vrcp.pop 12.0
      %v325 = vmul.f32 12.0, %v324
      %v326 = vsub.f32 1.0, %v325
      %v327 = vmul.f32 %v324, %v326
      %v328 = vadd.f32 %v324, %v327
      %vm329 = vweird.f32 %v324
      %v330 = vsel %vm329, %v324, %v328
      %v331 = vmul.f32 %v323, %v330
      %v332 = vsub.f32 %v317, %v331
      %v333 = vmul.f32 %v332, %v332
      %v334 = vsel %vm320, %v333, 0.0
      %335 = vadd.xlane.f32.xlu0 %v334
      %v336 = vpop.xlane.xlu0 %335
      %v337 = vmul.f32 %v336, %v330
      %v338 = vadd.f32 %v337, 1e-05
      %v339 = vrsqrt.pop %v338
      %v340 = vmul.f32 %v339, %v338
      %v341 = vmul.f32 %v340, %v339
      %v342 = vmul.f32 0.5, %v341
      %v343 = vsub.f32 1.5, %v342
      %v344 = vmul.f32 %v339, %v343
      %vm345 = vweird.f32 %v338
      %vm346 = vweird.f32 %v339
      %vm347 = vmor %vm345, %vm346
      %v348 = vsel %vm347, %v339, %v344
      %v349 = vmul.f32 %v332, %v348
      %v351 = vperm.slane %v318, 0
      %v353 = vmul.f32 %v349, %v351
      %v355 = vperm.slane %v319, 0
      %v357 = vadd.f32 %v353, %v355
      %v358 = vld [vmem:[%s4] sm:$0xf]
      %v359 = vld [vmem:[%s4 + $0x4] sm:$0x3]
      %v360 = vpack.c.bf16 %v357, %v357
      %v361 = vld [vmem:[%s6 + $0x2] sm:$0x1]
      %v363 = vperm.slane %v361, 0
      %v367 = vunpack.c.l.b16 %v358
      %v368 = vunpack.c.l.b16 %v359
      %v369 = vpack.c.b16 %v368, %v367
      %v371 = vsel %vm320, %v360, 0
      %vm373 = vcmask 1045504
      %v375 = vsel %vm373, %v369, 0
      %377 = vmatpush.bf16.msra.mxu0 0
      %378 = vmatpush.bf16.msra.mxu0 0
      %379 = vmatpush.bf16.msra.mxu0 0
      %380 = vmatpush.bf16.msra.mxu0 0
      %381 = vmatpush.bf16.msra.mxu0 0
      %382 = vmatpush.bf16.msra.mxu0 0
      %383 = vmatpush.bf16.msra.mxu0 0
      %384 = vmatpush.bf16.msra.mxu0 %v375
      %385 = vmatmul.bf16.gmra.mxu0 %v371
      %v386 = vpop.f32.mrf.mxu0
      %v387 = vadd.f32 %v363, %v386
      %v388 = vpop.f32.mrf.mxu0
      %389 = vdwg.mxu0
      %v390 = vmul.f32 %v387, 0.5
      %v391 = vmul.f32 %v387, 0.70710677
      %v392 = vand.u32 2147483647, %v391
      %v393 = vmul.f32 %v392, 0.3275911
      %v394 = vadd.f32 %v393, 1.0
      %v395 = vrcp.pop %v394
      %v396 = vmul.f32 %v394, %v395
      %v397 = vsub.f32 1.0, %v396
      %v398 = vmul.f32 %v395, %v397
      %v399 = vadd.f32 %v395, %v398
      %vm400 = vweird.f32 %v394
      %vm401 = vweird.f32 %v395
      %vm402 = vmor %vm400, %vm401
      %v403 = vsel %vm402, %v395, %v399
      %v404 = vand.u32 2147483647, %v394
      %vm405 = vcmp.eq.f32.partialorder %v404, 8.507059e+37
      %v406 = vand.u32 %v394, 2147483648
      %v407 = vor.u32 1.1754944e-38, %v406
      %v408 = vsel %vm405, %v407, %v403
      %v409 = vmul.f32 1.0, %v408
      %v410 = vmul.f32 %v409, 1.0614054
      %v411 = vsub.f32 %v410, 1.4531521
      %v412 = vmul.f32 %v411, %v409
      %v413 = vadd.f32 %v412, 1.4214138
      %v414 = vmul.f32 %v413, %v409
      %v415 = vsub.f32 %v414, 0.28449672
      %v416 = vmul.f32 %v415, %v409
      %v417 = vadd.f32 %v416, 0.2548296
      %v418 = vmul.f32 %v417, %v409
      %v419 = vsub.f32 0.0, %v392
      %v420 = vmul.f32 %v419, %v392
      %v421 = vmul.f32 %v420, 1.442695
      %v422 = vpow.pop %v421
      %v423 = vmul.f32 %v418, %v422
      %v424 = vsub.f32 1.0, %v423
      %vm425 = vcmp.lt.f32.partialorder %v391, 0.0
      %v426 = vsub.f32 0.0, %v424
      %v427 = vsel %vm425, %v426, %v424
      %v428 = vadd.f32 %v427, 1.0
      %v429 = vmul.f32 %v390, %v428
      %v430 = vld [vmem:[%s6 + $0x3] sm:$0x1]
      %v431 = vld [vmem:[%s6 + $0x4] sm:$0x1]
      %vm432 = vcmask 523264
      %v433 = vsel %vm432, %v429, 0.0
      %434 = vadd.xlane.f32.xlu0 %v433
      %v435 = vpop.xlane.xlu0 %434
      %v436 = vrcp.pop 64.0
      %v437 = vmul.f32 64.0, %v436
      %v438 = vsub.f32 1.0, %v437
      %v439 = vmul.f32 %v436, %v438
      %v440 = vadd.f32 %v436, %v439
      %vm441 = vweird.f32 %v436
      %v442 = vsel %vm441, %v436, %v440
      %v443 = vmul.f32 %v435, %v442
      %v444 = vsub.f32 %v429, %v443
      %v445 = vmul.f32 %v444, %v444
      %v446 = vsel %vm432, %v445, 0.0
      %447 = vadd.xlane.f32.xlu0 %v446
      %v448 = vpop.xlane.xlu0 %447
      %v449 = vmul.f32 %v448, %v442
      %v450 = vadd.f32 %v449, 1e-05
      %v451 = vrsqrt.pop %v450
      %v452 = vmul.f32 %v451, %v450
      %v453 = vmul.f32 %v452, %v451
      %v454 = vmul.f32 0.5, %v453
      %v455 = vsub.f32 1.5, %v454
      %v456 = vmul.f32 %v451, %v455
      %vm457 = vweird.f32 %v450
      %vm458 = vweird.f32 %v451
      %vm459 = vmor %vm457, %vm458
      %v460 = vsel %vm459, %v451, %v456
      %v461 = vmul.f32 %v444, %v460
      %v463 = vperm.slane %v430, 0
      %v465 = vmul.f32 %v461, %v463
      %v467 = vperm.slane %v431, 0
      %v469 = vadd.f32 %v465, %v467
      %v470 = vld [vmem:[%s6 + $0x12] sm:$0x3]
      %v471 = vld [vmem:[%s1] sm:$0xff]
      %v472 = vld [vmem:[%s1 + $0x8] sm:$0xff]
      %v473 = vld [vmem:[%s1 + $0x10] sm:$0xff]
      %v474 = vld [vmem:[%s1 + $0x18] sm:$0xff]
      %v475 = vld [vmem:[%s1 + $0x20] sm:$0xff]
      %v476 = vld [vmem:[%s1 + $0x28] sm:$0xff]
      %v477 = vld [vmem:[%s1 + $0x30] sm:$0xff]
      %v478 = vld [vmem:[%s1 + $0x38] sm:$0xff]
      %v479 = vpack.c.bf16 %v469, %v469
      %v481 = vperm.slane %v470, 0
      %v482 = vperm.slane %v470, 1
      %v493 = vunpack.c.l.b16 %v471
      %v494 = vunpack.c.h.b16 %v471
      %v495 = vunpack.c.l.b16 %v472
      %v496 = vunpack.c.h.b16 %v472
      %v497 = vunpack.c.l.b16 %v473
      %v498 = vunpack.c.h.b16 %v473
      %v499 = vunpack.c.l.b16 %v474
      %v500 = vunpack.c.h.b16 %v474
      %v501 = vunpack.c.l.b16 %v475
      %v502 = vunpack.c.h.b16 %v475
      %v503 = vunpack.c.l.b16 %v476
      %v504 = vunpack.c.h.b16 %v476
      %v505 = vunpack.c.l.b16 %v477
      %v506 = vunpack.c.h.b16 %v477
      %v507 = vunpack.c.l.b16 %v478
      %v508 = vunpack.c.h.b16 %v478
      %v509 = vpack.c.b16 %v495, %v493
      %v510 = vpack.c.b16 %v496, %v494
      %v511 = vpack.c.b16 %v499, %v497
      %v512 = vpack.c.b16 %v500, %v498
      %v513 = vpack.c.b16 %v503, %v501
      %v514 = vpack.c.b16 %v504, %v502
      %v515 = vpack.c.b16 %v507, %v505
      %v516 = vpack.c.b16 %v508, %v506
      %v526 = vsel %vm432, %v479, 0
      %528 = vmatpush.bf16.msra.mxu0 0
      %529 = vmatpush.bf16.msra.mxu0 0
      %530 = vmatpush.bf16.msra.mxu0 0
      %531 = vmatpush.bf16.msra.mxu0 0
      %532 = vmatpush.bf16.msra.mxu0 %v515
      %533 = vmatpush.bf16.msra.mxu0 %v513
      %534 = vmatpush.bf16.msra.mxu0 %v511
      %535 = vmatpush.bf16.msra.mxu0 %v509
      %536 = vmatmul.bf16.gmra.mxu0 %v526
      %v537 = vpop.f32.mrf.mxu0
      %v538 = vadd.f32 %v481, %v537
      %v539 = vpop.f32.mrf.mxu0
      %540 = vdwg.mxu0
      %541 = vmatpush.bf16.msra.mxu0 0
      %542 = vmatpush.bf16.msra.mxu0 0
      %543 = vmatpush.bf16.msra.mxu0 0
      %544 = vmatpush.bf16.msra.mxu0 0
      %545 = vmatpush.bf16.msra.mxu0 %v516
      %546 = vmatpush.bf16.msra.mxu0 %v514
      %547 = vmatpush.bf16.msra.mxu0 %v512
      %548 = vmatpush.bf16.msra.mxu0 %v510
      %549 = vmatmul.bf16.gmra.mxu0 %v526
      %v550 = vpop.f32.mrf.mxu0
      %v551 = vadd.f32 %v482, %v550
      %v552 = vpop.f32.mrf.mxu0
      %553 = vdwg.mxu0
      %v554 = vpack.c.bf16 %v538, %v538
      %556 = vrot.lane.b32.xlu0 %v554, 64
      %v557 = vpop.permute.xlu0 %556
      %vm558 = vcmask 261120
      %v560 = vsel %vm558, %v554, 0
      %v563 = vsel %vm558, %v557, 0
      %565 = vmatpush.bf16.xpose.msra.mxu0 0
      %566 = vmatpush.bf16.xpose.msra.mxu0 0
      %567 = vmatpush.bf16.xpose.msra.mxu0 0
      %568 = vmatpush.bf16.xpose.msra.mxu0 0
      %569 = vmatpush.bf16.xpose.msra.mxu0 0
      %570 = vmatpush.bf16.xpose.msra.mxu0 0
      %571 = vmatpush.bf16.xpose.msra.mxu0 0
      %572 = vmatpush.bf16.xpose.msra.mxu0 %v563
      %573 = vmatmul.bf16.gmra.mxu0 %v560
      %v574 = vpop.f32.mrf.mxu0
      %v575 = vadd.f32 %v316, %v574
      %v576 = vpop.f32.mrf.mxu0
      %577 = vdwg.mxu0
      %vm578 = vcmask 64512
      %v579 = vsel %vm578, %v575, -inf
      %580 = vmax.xlane.f32.xlu0 %v579
      %v581 = vpop.xlane.xlu0 %580
      %v582 = vsub.f32 %v575, %v581
      %v583 = vmul.f32 %v582, 1.442695
      %v584 = vpow.pop %v583
      %v585 = vsel %vm578, %v584, 0.0
      %586 = vadd.xlane.f32.xlu0 %v585
      %v587 = vpop.xlane.xlu0 %586
      %v588 = vrcp.pop %v587
      %v589 = vmul.f32 %v587, %v588
      %v590 = vsub.f32 1.0, %v589
      %v591 = vmul.f32 %v588, %v590
      %v592 = vadd.f32 %v588, %v591
      %vm593 = vweird.f32 %v587
      %vm594 = vweird.f32 %v588
      %vm595 = vmor %vm593, %vm594
      %v596 = vsel %vm595, %v588, %v592
      %v597 = vand.u32 2147483647, %v587
      %vm598 = vcmp.eq.f32.partialorder %v597, 8.507059e+37
      %v599 = vand.u32 %v587, 2147483648
      %v600 = vor.u32 1.1754944e-38, %v599
      %v601 = vsel %vm598, %v600, %v596
      %v602 = vmul.f32 %v584, %v601
      %v603 = vpack.c.bf16 %v551, %v551
      %v604 = vpack.c.bf16 %v602, %v602
      %v606 = vsel %vm578, %v604, 0
      %vm608 = vcmask 1043456
      %v610 = vsel %vm608, %v603, 0
      %612 = vmatpush.bf16.msra.mxu0 0
      %613 = vmatpush.bf16.msra.mxu0 0
      %614 = vmatpush.bf16.msra.mxu0 0
      %615 = vmatpush.bf16.msra.mxu0 0
      %616 = vmatpush.bf16.msra.mxu0 0
      %617 = vmatpush.bf16.msra.mxu0 0
      %618 = vmatpush.bf16.msra.mxu0 0
      %619 = vmatpush.bf16.msra.mxu0 %v610
      %620 = vmatmul.bf16.gmra.mxu0 %v606
      %v621 = vpop.f32.mrf.mxu0
      %v622 = vadd.f32 0.0, %v621
      %v623 = vpop.f32.mrf.mxu0
      %624 = vdwg.mxu0
      %v625 = vld [vmem:[%s1 + $0x4] sm:$0xf]
      %v626 = vld [vmem:[%s1 + $0xc] sm:$0xf]
      %v627 = vld [vmem:[%s1 + $0x14] sm:$0xf]
      %v628 = vld [vmem:[%s1 + $0x1c] sm:$0xf]
      %v629 = vpack.c.bf16 %v622, %v622
      %630 = vrot.lane.b32.xlu0 %v554, 96
      %v631 = vpop.permute.xlu0 %630
      %632 = vrot.lane.b32.xlu0 %v554, 32
      %v633 = vpop.permute.xlu0 %632
      %v635 = vsel %vm558, %v631, 0
      %v638 = vsel %vm558, %v633, 0
      %640 = vmatpush.bf16.xpose.msra.mxu0 0
      %641 = vmatpush.bf16.xpose.msra.mxu0 0
      %642 = vmatpush.bf16.xpose.msra.mxu0 0
      %643 = vmatpush.bf16.xpose.msra.mxu0 0
      %644 = vmatpush.bf16.xpose.msra.mxu0 0
      %645 = vmatpush.bf16.xpose.msra.mxu0 0
      %646 = vmatpush.bf16.xpose.msra.mxu0 0
      %647 = vmatpush.bf16.xpose.msra.mxu0 %v638
      %648 = vmatmul.bf16.gmra.mxu0 %v635
      %v649 = vpop.f32.mrf.mxu0
      %v650 = vadd.f32 %v316, %v649
      %v651 = vpop.f32.mrf.mxu0
      %652 = vdwg.mxu0
      %v653 = vsel %vm578, %v650, -inf
      %654 = vmax.xlane.f32.xlu0 %v653
      %v655 = vpop.xlane.xlu0 %654
      %v656 = vsub.f32 %v650, %v655
      %v657 = vmul.f32 %v656, 1.442695
      %v658 = vpow.pop %v657
      %v659 = vsel %vm578, %v658, 0.0
      %660 = vadd.xlane.f32.xlu0 %v659
      %v661 = vpop.xlane.xlu0 %660
      %v662 = vrcp.pop %v661
      %v663 = vmul.f32 %v661, %v662
      %v664 = vsub.f32 1.0, %v663
      %v665 = vmul.f32 %v662, %v664
      %v666 = vadd.f32 %v662, %v665
      %vm667 = vweird.f32 %v661
      %vm668 = vweird.f32 %v662
      %vm669 = vmor %vm667, %vm668
      %v670 = vsel %vm669, %v662, %v666
      %v671 = vand.u32 2147483647, %v661
      %vm672 = vcmp.eq.f32.partialorder %v671, 8.507059e+37
      %v673 = vand.u32 %v661, 2147483648
      %v674 = vor.u32 1.1754944e-38, %v673
      %v675 = vsel %vm672, %v674, %v670
      %v676 = vmul.f32 %v658, %v675
      %v677 = vpack.c.bf16 %v676, %v676
      %679 = vrot.lane.b32.xlu0 %v603, 96
      %v680 = vpop.permute.xlu0 %679
      %v682 = vsel %vm578, %v677, 0
      %v685 = vsel %vm608, %v680, 0
      %687 = vmatpush.bf16.msra.mxu0 0
      %688 = vmatpush.bf16.msra.mxu0 0
      %689 = vmatpush.bf16.msra.mxu0 0
      %690 = vmatpush.bf16.msra.mxu0 0
      %691 = vmatpush.bf16.msra.mxu0 0
      %692 = vmatpush.bf16.msra.mxu0 0
      %693 = vmatpush.bf16.msra.mxu0 0
      %694 = vmatpush.bf16.msra.mxu0 %v685
      %695 = vmatmul.bf16.gmra.mxu0 %v682
      %v696 = vpop.f32.mrf.mxu0
      %v697 = vadd.f32 0.0, %v696
      %v698 = vpop.f32.mrf.mxu0
      %699 = vdwg.mxu0
      %v700 = vld [vmem:[%s1 + $0x24] sm:$0xf]
      %v701 = vld [vmem:[%s1 + $0x2c] sm:$0xf]
      %v702 = vld [vmem:[%s1 + $0x34] sm:$0xf]
      %v703 = vld [vmem:[%s1 + $0x3c] sm:$0xf]
      %v704 = vpack.c.bf16 %v697, %v697
      %v709 = vunpack.c.l.b16 %v700
      %v710 = vunpack.c.l.b16 %v701
      %v711 = vunpack.c.l.b16 %v702
      %v712 = vunpack.c.l.b16 %v703
      %v713 = vpack.c.b16 %v710, %v709
      %v714 = vpack.c.b16 %v712, %v711
      %715 = vrot.lane.b32.xlu0 %v713, 64
      %v716 = vpop.permute.xlu0 %715
      %717 = vrot.lane.b32.xlu0 %v714, 64
      %v718 = vpop.permute.xlu0 %717
      %v722 = vsel %vm558, %v704, 0
      %724 = vmatpush.bf16.msra.mxu0 0
      %725 = vmatpush.bf16.msra.mxu0 0
      %726 = vmatpush.bf16.msra.mxu0 0
      %727 = vmatpush.bf16.msra.mxu0 0
      %728 = vmatpush.bf16.msra.mxu0 0
      %729 = vmatpush.bf16.msra.mxu0 0
      %730 = vmatpush.bf16.msra.mxu0 %v718
      %731 = vmatpush.bf16.msra.mxu0 %v716
      %732 = vmatmul.bf16.gmra.mxu0 %v722
      %v733 = vpop.f32.mrf.mxu0
      %v734 = vadd.f32 0.0, %v733
      %v735 = vpop.f32.mrf.mxu0
      %736 = vdwg.mxu0
      %v741 = vunpack.c.l.b16 %v625
      %v742 = vunpack.c.l.b16 %v626
      %v743 = vunpack.c.l.b16 %v627
      %v744 = vunpack.c.l.b16 %v628
      %v745 = vpack.c.b16 %v742, %v741
      %v746 = vpack.c.b16 %v744, %v743
      %747 = vrot.lane.b32.xlu0 %v745, 64
      %v748 = vpop.permute.xlu0 %747
      %749 = vrot.lane.b32.xlu0 %v746, 64
      %v750 = vpop.permute.xlu0 %749
      %v754 = vsel %vm558, %v629, 0
      %756 = vmatpush.bf16.msra.mxu0 0
      %757 = vmatpush.bf16.msra.mxu0 0
      %758 = vmatpush.bf16.msra.mxu0 0
      %759 = vmatpush.bf16.msra.mxu0 0
      %760 = vmatpush.bf16.msra.mxu0 0
      %761 = vmatpush.bf16.msra.mxu0 0
      %762 = vmatpush.bf16.msra.mxu0 %v750
      %763 = vmatpush.bf16.msra.mxu0 %v748
      %764 = vmatmul.bf16.gmra.mxu0 %v754
      %v765 = vpop.f32.mrf.mxu0
      %v766 = vadd.f32 %v734, %v765
      %v767 = vpop.f32.mrf.mxu0
      %768 = vdwg.mxu0
      %v769 = vld [vmem:[%s6 + $0x14] sm:$0x1]
      %v771 = vperm.slane %v769, 0
      %v773 = vadd.f32 %v766, %v771
      %v774 = vadd.f32 %v429, %v773
      %v775 = vld [vmem:[%s6 + $0x5] sm:$0x1]
      %v776 = vld [vmem:[%s6 + $0x6] sm:$0x1]
      %v777 = vsel %vm432, %v774, 0.0
      %778 = vadd.xlane.f32.xlu0 %v777
      %v779 = vpop.xlane.xlu0 %778
      %v780 = vmul.f32 %v779, %v442
      %v781 = vsub.f32 %v774, %v780
      %v782 = vmul.f32 %v781, %v781
      %v783 = vsel %vm432, %v782, 0.0
      %784 = vadd.xlane.f32.xlu0 %v783
      %v785 = vpop.xlane.xlu0 %784
      %v786 = vmul.f32 %v785, %v442
      %v787 = vadd.f32 %v786, 1e-05
      %v788 = vrsqrt.pop %v787
      %v789 = vmul.f32 %v788, %v787
      %v790 = vmul.f32 %v789, %v788
      %v791 = vmul.f32 0.5, %v790
      %v792 = vsub.f32 1.5, %v791
      %v793 = vmul.f32 %v788, %v792
      %vm794 = vweird.f32 %v787
      %vm795 = vweird.f32 %v788
      %vm796 = vmor %vm794, %vm795
      %v797 = vsel %vm796, %v788, %v793
      %v798 = vmul.f32 %v781, %v797
      %v800 = vperm.slane %v775, 0
      %v802 = vmul.f32 %v798, %v800
      %v804 = vperm.slane %v776, 0
      %v806 = vadd.f32 %v802, %v804
      %v807 = vld [vmem:[%s6 + $0x15] sm:$0x3]
      %s808 = scalar_lea.vmem %s1, 64
      %v809 = vld [vmem:[%s808] sm:$0xf]
      %v810 = vld [vmem:[%s808 + $0x8] sm:$0xf]
      %v811 = vld [vmem:[%s808 + $0x10] sm:$0xf]
      %v812 = vld [vmem:[%s808 + $0x18] sm:$0xf]
      %v813 = vld [vmem:[%s808 + $0x20] sm:$0xf]
      %v814 = vld [vmem:[%s808 + $0x28] sm:$0xf]
      %v815 = vld [vmem:[%s808 + $0x30] sm:$0xf]
      %v816 = vld [vmem:[%s808 + $0x38] sm:$0xf]
      %v817 = vpack.c.bf16 %v806, %v806
      %v819 = vperm.slane %v807, 0
      %v829 = vunpack.c.l.b16 %v809
      %v830 = vunpack.c.l.b16 %v810
      %v831 = vunpack.c.l.b16 %v811
      %v832 = vunpack.c.l.b16 %v812
      %v833 = vunpack.c.l.b16 %v813
      %v834 = vunpack.c.l.b16 %v814
      %v835 = vunpack.c.l.b16 %v815
      %v836 = vunpack.c.l.b16 %v816
      %v837 = vpack.c.b16 %v830, %v829
      %v838 = vpack.c.b16 %v832, %v831
      %v839 = vpack.c.b16 %v834, %v833
      %v840 = vpack.c.b16 %v836, %v835
      %v846 = vsel %vm432, %v817, 0
      %848 = vmatpush.bf16.msra.mxu0 0
      %849 = vmatpush.bf16.msra.mxu0 0
      %850 = vmatpush.bf16.msra.mxu0 0
      %851 = vmatpush.bf16.msra.mxu0 0
      %852 = vmatpush.bf16.msra.mxu0 %v840
      %853 = vmatpush.bf16.msra.mxu0 %v839
      %854 = vmatpush.bf16.msra.mxu0 %v838
      %855 = vmatpush.bf16.msra.mxu0 %v837
      %856 = vmatmul.bf16.gmra.mxu0 %v846
      %v857 = vpop.f32.mrf.mxu0
      %v858 = vadd.f32 %v819, %v857
      %v859 = vpop.f32.mrf.mxu0
      %860 = vdwg.mxu0
      %v861 = vld [vmem:[%s808] sm:$0xff]
      %v862 = vld [vmem:[%s808 + $0x8] sm:$0xff]
      %v863 = vld [vmem:[%s808 + $0x10] sm:$0xff]
      %v864 = vld [vmem:[%s808 + $0x18] sm:$0xff]
      %v865 = vld [vmem:[%s808 + $0x20] sm:$0xff]
      %v866 = vld [vmem:[%s808 + $0x28] sm:$0xff]
      %v867 = vld [vmem:[%s808 + $0x30] sm:$0xff]
      %v868 = vld [vmem:[%s808 + $0x38] sm:$0xff]
      %v869 = vpack.c.bf16 %v429, %v429
      %v870 = vperm.slane %v807, 1
      %v879 = vunpack.c.l.b16 %v861
      %v880 = vunpack.c.h.b16 %v861
      %v881 = vunpack.c.l.b16 %v862
      %v882 = vunpack.c.h.b16 %v862
      %v883 = vunpack.c.l.b16 %v863
      %v884 = vunpack.c.h.b16 %v863
      %v885 = vunpack.c.l.b16 %v864
      %v886 = vunpack.c.h.b16 %v864
      %v887 = vunpack.c.l.b16 %v865
      %v888 = vunpack.c.h.b16 %v865
      %v889 = vunpack.c.l.b16 %v866
      %v890 = vunpack.c.h.b16 %v866
      %v891 = vunpack.c.l.b16 %v867
      %v892 = vunpack.c.h.b16 %v867
      %v893 = vunpack.c.l.b16 %v868
      %v894 = vunpack.c.h.b16 %v868
      %v895 = vpack.c.b16 %v881, %v879
      %v896 = vpack.c.b16 %v882, %v880
      %v897 = vpack.c.b16 %v885, %v883
      %v898 = vpack.c.b16 %v886, %v884
      %v899 = vpack.c.b16 %v889, %v887
      %v900 = vpack.c.b16 %v890, %v888
      %v901 = vpack.c.b16 %v893, %v891
      %v902 = vpack.c.b16 %v894, %v892
      %903 = vrot.lane.b32.xlu0 %v895, 64
      %v904 = vpop.permute.xlu0 %903
      %905 = vrot.lane.b32.xlu0 %v896, 64
      %v906 = vpop.permute.xlu0 %905
      %907 = vrot.lane.b32.xlu0 %v897, 64
      %v908 = vpop.permute.xlu0 %907
      %909 = vrot.lane.b32.xlu0 %v898, 64
      %v910 = vpop.permute.xlu0 %909
      %911 = vrot.lane.b32.xlu0 %v899, 64
      %v912 = vpop.permute.xlu0 %911
      %913 = vrot.lane.b32.xlu0 %v900, 64
      %v914 = vpop.permute.xlu0 %913
      %915 = vrot.lane.b32.xlu0 %v901, 64
      %v916 = vpop.permute.xlu0 %915
      %917 = vrot.lane.b32.xlu0 %v902, 64
      %v918 = vpop.permute.xlu0 %917
      %vm919 = vcmask 523264
      %v920 = vsel %vm919, %v904, %v906
      %v921 = vsel %vm919, %v908, %v910
      %v922 = vsel %vm919, %v912, %v914
      %v923 = vsel %vm919, %v916, %v918
      %928 = vrot.lane.b32.xlu0 %v819, 64
      %v929 = vpop.permute.xlu0 %928
      %930 = vrot.lane.b32.xlu0 %v870, 64
      %v931 = vpop.permute.xlu0 %930
      %v932 = vsel %vm432, %v929, %v931
      %v935 = vsel %vm432, %v869, 0
      %937 = vmatpush.bf16.msra.mxu0 0
      %938 = vmatpush.bf16.msra.mxu0 0
      %939 = vmatpush.bf16.msra.mxu0 0
      %940 = vmatpush.bf16.msra.mxu0 0
      %941 = vmatpush.bf16.msra.mxu0 %v923
      %942 = vmatpush.bf16.msra.mxu0 %v922
      %943 = vmatpush.bf16.msra.mxu0 %v921
      %944 = vmatpush.bf16.msra.mxu0 %v920
      %945 = vmatmul.bf16.gmra.mxu0 %v935
      %v946 = vpop.f32.mrf.mxu0
      %v947 = vadd.f32 %v932, %v946
      %v948 = vpop.f32.mrf.mxu0
      %949 = vdwg.mxu0
      %v950 = vpack.c.bf16 %v858, %v858
      %v951 = vpack.c.bf16 %v947, %v947
      %v953 = vsel %vm558, %v950, 0
      %v956 = vsel %vm558, %v951, 0
      %958 = vmatpush.bf16.xpose.msra.mxu0 0
      %959 = vmatpush.bf16.xpose.msra.mxu0 0
      %960 = vmatpush.bf16.xpose.msra.mxu0 0
      %961 = vmatpush.bf16.xpose.msra.mxu0 0
      %962 = vmatpush.bf16.xpose.msra.mxu0 0
      %963 = vmatpush.bf16.xpose.msra.mxu0 0
      %964 = vmatpush.bf16.xpose.msra.mxu0 0
      %965 = vmatpush.bf16.xpose.msra.mxu0 %v956
      %966 = vmatmul.bf16.gmra.mxu0 %v953
      %v967 = vpop.f32.mrf.mxu0
      %v968 = vadd.f32 0.0, %v967
      %v969 = vpop.f32.mrf.mxu0
      %970 = vdwg.mxu0
      %v971 = vsel %vm578, %v968, -inf
      %972 = vmax.xlane.f32.xlu0 %v971
      %v973 = vpop.xlane.xlu0 %972
      %v974 = vsub.f32 %v968, %v973
      %v975 = vmul.f32 %v974, 1.442695
      %v976 = vpow.pop %v975
      %v977 = vsel %vm578, %v976, 0.0
      %978 = vadd.xlane.f32.xlu0 %v977
      %v979 = vpop.xlane.xlu0 %978
      %v980 = vrcp.pop %v979
      %v981 = vmul.f32 %v979, %v980
      %v982 = vsub.f32 1.0, %v981
      %v983 = vmul.f32 %v980, %v982
      %v984 = vadd.f32 %v980, %v983
      %vm985 = vweird.f32 %v979
      %vm986 = vweird.f32 %v980
      %vm987 = vmor %vm985, %vm986
      %v988 = vsel %vm987, %v980, %v984
      %v989 = vand.u32 2147483647, %v979
      %vm990 = vcmp.eq.f32.partialorder %v989, 8.507059e+37
      %v991 = vand.u32 %v979, 2147483648
      %v992 = vor.u32 1.1754944e-38, %v991
      %v993 = vsel %vm990, %v992, %v988
      %v994 = vmul.f32 %v976, %v993
      %v995 = vpack.c.bf16 %v994, %v994
      %997 = vrot.lane.b32.xlu0 %v951, 64
      %v998 = vpop.permute.xlu0 %997
      %v1000 = vsel %vm578, %v995, 0
      %v1003 = vsel %vm608, %v998, 0
      %1005 = vmatpush.bf16.msra.mxu0 0
      %1006 = vmatpush.bf16.msra.mxu0 0
      %1007 = vmatpush.bf16.msra.mxu0 0
      %1008 = vmatpush.bf16.msra.mxu0 0
      %1009 = vmatpush.bf16.msra.mxu0 0
      %1010 = vmatpush.bf16.msra.mxu0 0
      %1011 = vmatpush.bf16.msra.mxu0 0
      %1012 = vmatpush.bf16.msra.mxu0 %v1003
      %1013 = vmatmul.bf16.gmra.mxu0 %v1000
      %v1014 = vpop.f32.mrf.mxu0
      %v1015 = vadd.f32 0.0, %v1014
      %v1016 = vpop.f32.mrf.mxu0
      %1017 = vdwg.mxu0
      %v1018 = vld [vmem:[%s808 + $0x4] sm:$0xf]
      %v1019 = vld [vmem:[%s808 + $0xc] sm:$0xf]
      %v1020 = vld [vmem:[%s808 + $0x14] sm:$0xf]
      %v1021 = vld [vmem:[%s808 + $0x1c] sm:$0xf]
      %v1022 = vpack.c.bf16 %v1015, %v1015
      %1024 = vrot.lane.b32.xlu0 %v950, 96
      %v1025 = vpop.permute.xlu0 %1024
      %1026 = vrot.lane.b32.xlu0 %v951, 96
      %v1027 = vpop.permute.xlu0 %1026
      %v1029 = vsel %vm558, %v1025, 0
      %v1032 = vsel %vm558, %v1027, 0
      %1034 = vmatpush.bf16.xpose.msra.mxu0 0
      %1035 = vmatpush.bf16.xpose.msra.mxu0 0
      %1036 = vmatpush.bf16.xpose.msra.mxu0 0
      %1037 = vmatpush.bf16.xpose.msra.mxu0 0
      %1038 = vmatpush.bf16.xpose.msra.mxu0 0
      %1039 = vmatpush.bf16.xpose.msra.mxu0 0
      %1040 = vmatpush.bf16.xpose.msra.mxu0 0
      %1041 = vmatpush.bf16.xpose.msra.mxu0 %v1032
      %1042 = vmatmul.bf16.gmra.mxu0 %v1029
      %v1043 = vpop.f32.mrf.mxu0
      %v1044 = vadd.f32 0.0, %v1043
      %v1045 = vpop.f32.mrf.mxu0
      %1046 = vdwg.mxu0
      %v1047 = vsel %vm578, %v1044, -inf
      %1048 = vmax.xlane.f32.xlu0 %v1047
      %v1049 = vpop.xlane.xlu0 %1048
      %v1050 = vsub.f32 %v1044, %v1049
      %v1051 = vmul.f32 %v1050, 1.442695
      %v1052 = vpow.pop %v1051
      %v1053 = vsel %vm578, %v1052, 0.0
      %1054 = vadd.xlane.f32.xlu0 %v1053
      %v1055 = vpop.xlane.xlu0 %1054
      %v1056 = vrcp.pop %v1055
      %v1057 = vmul.f32 %v1055, %v1056
      %v1058 = vsub.f32 1.0, %v1057
      %v1059 = vmul.f32 %v1056, %v1058
      %v1060 = vadd.f32 %v1056, %v1059
      %vm1061 = vweird.f32 %v1055
      %vm1062 = vweird.f32 %v1056
      %vm1063 = vmor %vm1061, %vm1062
      %v1064 = vsel %vm1063, %v1056, %v1060
      %v1065 = vand.u32 2147483647, %v1055
      %vm1066 = vcmp.eq.f32.partialorder %v1065, 8.507059e+37
      %v1067 = vand.u32 %v1055, 2147483648
      %v1068 = vor.u32 1.1754944e-38, %v1067
      %v1069 = vsel %vm1066, %v1068, %v1064
      %v1070 = vmul.f32 %v1052, %v1069
      %v1071 = vpack.c.bf16 %v1070, %v1070
      %1072 = vrot.lane.b32.xlu0 %v951, 32
      %v1073 = vpop.permute.xlu0 %1072
      %v1075 = vsel %vm578, %v1071, 0
      %v1078 = vsel %vm608, %v1073, 0
      %1080 = vmatpush.bf16.msra.mxu0 0
      %1081 = vmatpush.bf16.msra.mxu0 0
      %1082 = vmatpush.bf16.msra.mxu0 0
      %1083 = vmatpush.bf16.msra.mxu0 0
      %1084 = vmatpush.bf16.msra.mxu0 0
      %1085 = vmatpush.bf16.msra.mxu0 0
      %1086 = vmatpush.bf16.msra.mxu0 0
      %1087 = vmatpush.bf16.msra.mxu0 %v1078
      %1088 = vmatmul.bf16.gmra.mxu0 %v1075
      %v1089 = vpop.f32.mrf.mxu0
      %v1090 = vadd.f32 0.0, %v1089
      %v1091 = vpop.f32.mrf.mxu0
      %1092 = vdwg.mxu0
      %v1093 = vld [vmem:[%s808 + $0x24] sm:$0xf]
      %v1094 = vld [vmem:[%s808 + $0x2c] sm:$0xf]
      %v1095 = vld [vmem:[%s808 + $0x34] sm:$0xf]
      %v1096 = vld [vmem:[%s808 + $0x3c] sm:$0xf]
      %v1097 = vpack.c.bf16 %v1090, %v1090
      %v1102 = vunpack.c.l.b16 %v1093
      %v1103 = vunpack.c.l.b16 %v1094
      %v1104 = vunpack.c.l.b16 %v1095
      %v1105 = vunpack.c.l.b16 %v1096
      %v1106 = vpack.c.b16 %v1103, %v1102
      %v1107 = vpack.c.b16 %v1105, %v1104
      %1108 = vrot.lane.b32.xlu0 %v1106, 64
      %v1109 = vpop.permute.xlu0 %1108
      %1110 = vrot.lane.b32.xlu0 %v1107, 64
      %v1111 = vpop.permute.xlu0 %1110
      %v1115 = vsel %vm558, %v1097, 0
      %1117 = vmatpush.bf16.msra.mxu0 0
      %1118 = vmatpush.bf16.msra.mxu0 0
      %1119 = vmatpush.bf16.msra.mxu0 0
      %1120 = vmatpush.bf16.msra.mxu0 0
      %1121 = vmatpush.bf16.msra.mxu0 0
      %1122 = vmatpush.bf16.msra.mxu0 0
      %1123 = vmatpush.bf16.msra.mxu0 %v1111
      %1124 = vmatpush.bf16.msra.mxu0 %v1109
      %1125 = vmatmul.bf16.gmra.mxu0 %v1115
      %v1126 = vpop.f32.mrf.mxu0
      %v1127 = vadd.f32 0.0, %v1126
      %v1128 = vpop.f32.mrf.mxu0
      %1129 = vdwg.mxu0
      %v1134 = vunpack.c.l.b16 %v1018
      %v1135 = vunpack.c.l.b16 %v1019
      %v1136 = vunpack.c.l.b16 %v1020
      %v1137 = vunpack.c.l.b16 %v1021
      %v1138 = vpack.c.b16 %v1135, %v1134
      %v1139 = vpack.c.b16 %v1137, %v1136
      %1140 = vrot.lane.b32.xlu0 %v1138, 64
      %v1141 = vpop.permute.xlu0 %1140
      %1142 = vrot.lane.b32.xlu0 %v1139, 64
      %v1143 = vpop.permute.xlu0 %1142
      %v1147 = vsel %vm558, %v1022, 0
      %1149 = vmatpush.bf16.msra.mxu0 0
      %1150 = vmatpush.bf16.msra.mxu0 0
      %1151 = vmatpush.bf16.msra.mxu0 0
      %1152 = vmatpush.bf16.msra.mxu0 0
      %1153 = vmatpush.bf16.msra.mxu0 0
      %1154 = vmatpush.bf16.msra.mxu0 0
      %1155 = vmatpush.bf16.msra.mxu0 %v1143
      %1156 = vmatpush.bf16.msra.mxu0 %v1141
      %1157 = vmatmul.bf16.gmra.mxu0 %v1147
      %v1158 = vpop.f32.mrf.mxu0
      %v1159 = vadd.f32 %v1127, %v1158
      %v1160 = vpop.f32.mrf.mxu0
      %1161 = vdwg.mxu0
      %v1162 = vld [vmem:[%s6 + $0x17] sm:$0x1]
      %v1164 = vperm.slane %v1162, 0
      %v1166 = vadd.f32 %v1159, %v1164
      %v1167 = vadd.f32 %v774, %v1166
      %v1168 = vld [vmem:[%s6 + $0x7] sm:$0x1]
      %v1169 = vld [vmem:[%s6 + $0x8] sm:$0x1]
      %v1170 = vsel %vm432, %v1167, 0.0
      %1171 = vadd.xlane.f32.xlu0 %v1170
      %v1172 = vpop.xlane.xlu0 %1171
      %v1173 = vmul.f32 %v1172, %v442
      %v1174 = vsub.f32 %v1167, %v1173
      %v1175 = vmul.f32 %v1174, %v1174
      %v1176 = vsel %vm432, %v1175, 0.0
      %1177 = vadd.xlane.f32.xlu0 %v1176
      %v1178 = vpop.xlane.xlu0 %1177
      %v1179 = vmul.f32 %v1178, %v442
      %v1180 = vadd.f32 %v1179, 1e-05
      %v1181 = vrsqrt.pop %v1180
      %v1182 = vmul.f32 %v1181, %v1180
      %v1183 = vmul.f32 %v1182, %v1181
      %v1184 = vmul.f32 0.5, %v1183
      %v1185 = vsub.f32 1.5, %v1184
      %v1186 = vmul.f32 %v1181, %v1185
      %vm1187 = vweird.f32 %v1180
      %vm1188 = vweird.f32 %v1181
      %vm1189 = vmor %vm1187, %vm1188
      %v1190 = vsel %vm1189, %v1181, %v1186
      %v1191 = vmul.f32 %v1174, %v1190
      %v1193 = vperm.slane %v1168, 0
      %v1195 = vmul.f32 %v1191, %v1193
      %v1197 = vperm.slane %v1169, 0
      %v1199 = vadd.f32 %v1195, %v1197
      %v1200 = vld [vmem:[%s2] sm:$0xff]
      %v1201 = vld [vmem:[%s2 + $0x8] sm:$0xff]
      %v1202 = vld [vmem:[%s2 + $0x10] sm:$0xff]
      %v1203 = vld [vmem:[%s2 + $0x18] sm:$0xff]
      %v1204 = vld [vmem:[%s2 + $0x20] sm:$0xff]
      %v1205 = vld [vmem:[%s2 + $0x28] sm:$0xff]
      %v1206 = vld [vmem:[%s2 + $0x30] sm:$0xff]
      %v1207 = vld [vmem:[%s2 + $0x38] sm:$0xff]
      %v1208 = vld [vmem:[%s2 + $0x40] sm:$0xff]
      %v1209 = vld [vmem:[%s2 + $0x48] sm:$0xff]
      %v1210 = vld [vmem:[%s2 + $0x50] sm:$0xff]
      %v1211 = vld [vmem:[%s2 + $0x58] sm:$0xff]
      %v1212 = vld [vmem:[%s2 + $0x60] sm:$0xff]
      %v1213 = vld [vmem:[%s2 + $0x68] sm:$0xff]
      %v1214 = vld [vmem:[%s2 + $0x70] sm:$0xff]
      %v1215 = vld [vmem:[%s2 + $0x78] sm:$0xff]
      %v1216 = vld [vmem:[%s2 + $0x80] sm:$0xff]
      %v1217 = vld [vmem:[%s2 + $0x88] sm:$0xff]
      %v1218 = vld [vmem:[%s2 + $0x90] sm:$0xff]
      %v1219 = vld [vmem:[%s2 + $0x98] sm:$0xff]
      %v1220 = vld [vmem:[%s2 + $0xa0] sm:$0xff]
      %v1221 = vld [vmem:[%s2 + $0xa8] sm:$0xff]
      %v1222 = vld [vmem:[%s2 + $0xb0] sm:$0xff]
      %v1223 = vld [vmem:[%s2 + $0xb8] sm:$0xff]
      %v1224 = vld [vmem:[%s2 + $0xc0] sm:$0xff]
      %v1225 = vld [vmem:[%s2 + $0xc8] sm:$0xff]
      %v1226 = vld [vmem:[%s2 + $0xd0] sm:$0xff]
      %v1227 = vld [vmem:[%s2 + $0xd8] sm:$0xff]
      %v1228 = vld [vmem:[%s2 + $0xe0] sm:$0xff]
      %v1229 = vld [vmem:[%s2 + $0xe8] sm:$0xff]
      %v1230 = vld [vmem:[%s2 + $0xf0] sm:$0xff]
      %v1231 = vld [vmem:[%s2 + $0xf8] sm:$0xff]
      %v1232 = vpack.c.bf16 %v1199, %v1199
      %v1233 = vld [vmem:[%s6 + $0x9] sm:$0xff]
      %v1235 = vperm.slane %v1233, 0
      %v1236 = vperm.slane %v1233, 1
      %v1237 = vperm.slane %v1233, 2
      %v1238 = vperm.slane %v1233, 3
      %v1239 = vperm.slane %v1233, 4
      %v1240 = vperm.slane %v1233, 5
      %v1241 = vperm.slane %v1233, 6
      %v1242 = vperm.slane %v1233, 7
      %v1283 = vunpack.c.l.b16 %v1200
      %v1284 = vunpack.c.h.b16 %v1200
      %v1285 = vunpack.c.l.b16 %v1201
      %v1286 = vunpack.c.h.b16 %v1201
      %v1287 = vunpack.c.l.b16 %v1202
      %v1288 = vunpack.c.h.b16 %v1202
      %v1289 = vunpack.c.l.b16 %v1203
      %v1290 = vunpack.c.h.b16 %v1203
      %v1291 = vunpack.c.l.b16 %v1204
      %v1292 = vunpack.c.h.b16 %v1204
      %v1293 = vunpack.c.l.b16 %v1205
      %v1294 = vunpack.c.h.b16 %v1205
      %v1295 = vunpack.c.l.b16 %v1206
      %v1296 = vunpack.c.h.b16 %v1206
      %v1297 = vunpack.c.l.b16 %v1207
      %v1298 = vunpack.c.h.b16 %v1207
      %v1299 = vunpack.c.l.b16 %v1208
      %v1300 = vunpack.c.h.b16 %v1208
      %v1301 = vunpack.c.l.b16 %v1209
      %v1302 = vunpack.c.h.b16 %v1209
      %v1303 = vunpack.c.l.b16 %v1210
      %v1304 = vunpack.c.h.b16 %v1210
      %v1305 = vunpack.c.l.b16 %v1211
      %v1306 = vunpack.c.h.b16 %v1211
      %v1307 = vunpack.c.l.b16 %v1212
      %v1308 = vunpack.c.h.b16 %v1212
      %v1309 = vunpack.c.l.b16 %v1213
      %v1310 = vunpack.c.h.b16 %v1213
      %v1311 = vunpack.c.l.b16 %v1214
      %v1312 = vunpack.c.h.b16 %v1214
      %v1313 = vunpack.c.l.b16 %v1215
      %v1314 = vunpack.c.h.b16 %v1215
      %v1315 = vunpack.c.l.b16 %v1216
      %v1316 = vunpack.c.h.b16 %v1216
      %v1317 = vunpack.c.l.b16 %v1217
      %v1318 = vunpack.c.h.b16 %v1217
      %v1319 = vunpack.c.l.b16 %v1218
      %v1320 = vunpack.c.h.b16 %v1218
      %v1321 = vunpack.c.l.b16 %v1219
      %v1322 = vunpack.c.h.b16 %v1219
      %v1323 = vunpack.c.l.b16 %v1220
      %v1324 = vunpack.c.h.b16 %v1220
      %v1325 = vunpack.c.l.b16 %v1221
      %v1326 = vunpack.c.h.b16 %v1221
      %v1327 = vunpack.c.l.b16 %v1222
      %v1328 = vunpack.c.h.b16 %v1222
      %v1329 = vunpack.c.l.b16 %v1223
      %v1330 = vunpack.c.h.b16 %v1223
      %v1331 = vunpack.c.l.b16 %v1224
      %v1332 = vunpack.c.h.b16 %v1224
      %v1333 = vunpack.c.l.b16 %v1225
      %v1334 = vunpack.c.h.b16 %v1225
      %v1335 = vunpack.c.l.b16 %v1226
      %v1336 = vunpack.c.h.b16 %v1226
      %v1337 = vunpack.c.l.b16 %v1227
      %v1338 = vunpack.c.h.b16 %v1227
      %v1339 = vunpack.c.l.b16 %v1228
      %v1340 = vunpack.c.h.b16 %v1228
      %v1341 = vunpack.c.l.b16 %v1229
      %v1342 = vunpack.c.h.b16 %v1229
      %v1343 = vunpack.c.l.b16 %v1230
      %v1344 = vunpack.c.h.b16 %v1230
      %v1345 = vunpack.c.l.b16 %v1231
      %v1346 = vunpack.c.h.b16 %v1231
      %v1347 = vpack.c.b16 %v1291, %v1283
      %v1348 = vpack.c.b16 %v1292, %v1284
      %v1349 = vpack.c.b16 %v1293, %v1285
      %v1350 = vpack.c.b16 %v1294, %v1286
      %v1351 = vpack.c.b16 %v1295, %v1287
      %v1352 = vpack.c.b16 %v1296, %v1288
      %v1353 = vpack.c.b16 %v1297, %v1289
      %v1354 = vpack.c.b16 %v1298, %v1290
      %v1355 = vpack.c.b16 %v1307, %v1299
      %v1356 = vpack.c.b16 %v1308, %v1300
      %v1357 = vpack.c.b16 %v1309, %v1301
      %v1358 = vpack.c.b16 %v1310, %v1302
      %v1359 = vpack.c.b16 %v1311, %v1303
      %v1360 = vpack.c.b16 %v1312, %v1304
      %v1361 = vpack.c.b16 %v1313, %v1305
      %v1362 = vpack.c.b16 %v1314, %v1306
      %v1363 = vpack.c.b16 %v1323, %v1315
      %v1364 = vpack.c.b16 %v1324, %v1316
      %v1365 = vpack.c.b16 %v1325, %v1317
      %v1366 = vpack.c.b16 %v1326, %v1318
      %v1367 = vpack.c.b16 %v1327, %v1319
      %v1368 = vpack.c.b16 %v1328, %v1320
      %v1369 = vpack.c.b16 %v1329, %v1321
      %v1370 = vpack.c.b16 %v1330, %v1322
      %v1371 = vpack.c.b16 %v1339, %v1331
      %v1372 = vpack.c.b16 %v1340, %v1332
      %v1373 = vpack.c.b16 %v1341, %v1333
      %v1374 = vpack.c.b16 %v1342, %v1334
      %v1375 = vpack.c.b16 %v1343, %v1335
      %v1376 = vpack.c.b16 %v1344, %v1336
      %v1377 = vpack.c.b16 %v1345, %v1337
      %v1378 = vpack.c.b16 %v1346, %v1338
      %v1412 = vsel %vm432, %v1232, 0
      %1414 = vmatpush.bf16.msra.mxu0 0
      %1415 = vmatpush.bf16.msra.mxu0 0
      %1416 = vmatpush.bf16.msra.mxu0 0
      %1417 = vmatpush.bf16.msra.mxu0 0
      %1418 = vmatpush.bf16.msra.mxu0 %v1371
      %1419 = vmatpush.bf16.msra.mxu0 %v1363
      %1420 = vmatpush.bf16.msra.mxu0 %v1355
      %1421 = vmatpush.bf16.msra.mxu0 %v1347
      %1422 = vmatmul.bf16.gmra.mxu0 %v1412
      %v1423 = vpop.f32.mrf.mxu0
      %v1424 = vadd.f32 %v1235, %v1423
      %v1425 = vpop.f32.mrf.mxu0
      %1426 = vdwg.mxu0
      %1427 = vmatpush.bf16.msra.mxu0 0
      %1428 = vmatpush.bf16.msra.mxu0 0
      %1429 = vmatpush.bf16.msra.mxu0 0
      %1430 = vmatpush.bf16.msra.mxu0 0
      %1431 = vmatpush.bf16.msra.mxu0 %v1372
      %1432 = vmatpush.bf16.msra.mxu0 %v1364
      %1433 = vmatpush.bf16.msra.mxu0 %v1356
      %1434 = vmatpush.bf16.msra.mxu0 %v1348
      %1435 = vmatmul.bf16.gmra.mxu0 %v1412
      %v1436 = vpop.f32.mrf.mxu0
      %v1437 = vadd.f32 %v1236, %v1436
      %v1438 = vpop.f32.mrf.mxu0
      %1439 = vdwg.mxu0
      %1440 = vmatpush.bf16.msra.mxu0 0
      %1441 = vmatpush.bf16.msra.mxu0 0
      %1442 = vmatpush.bf16.msra.mxu0 0
      %1443 = vmatpush.bf16.msra.mxu0 0
      %1444 = vmatpush.bf16.msra.mxu0 %v1373
      %1445 = vmatpush.bf16.msra.mxu0 %v1365
      %1446 = vmatpush.bf16.msra.mxu0 %v1357
      %1447 = vmatpush.bf16.msra.mxu0 %v1349
      %1448 = vmatmul.bf16.gmra.mxu0 %v1412
      %v1449 = vpop.f32.mrf.mxu0
      %v1450 = vadd.f32 %v1237, %v1449
      %v1451 = vpop.f32.mrf.mxu0
      %1452 = vdwg.mxu0
      %1453 = vmatpush.bf16.msra.mxu0 0
      %1454 = vmatpush.bf16.msra.mxu0 0
      %1455 = vmatpush.bf16.msra.mxu0 0
      %1456 = vmatpush.bf16.msra.mxu0 0
      %1457 = vmatpush.bf16.msra.mxu0 %v1374
      %1458 = vmatpush.bf16.msra.mxu0 %v1366
      %1459 = vmatpush.bf16.msra.mxu0 %v1358
      %1460 = vmatpush.bf16.msra.mxu0 %v1350
      %1461 = vmatmul.bf16.gmra.mxu0 %v1412
      %v1462 = vpop.f32.mrf.mxu0
      %v1463 = vadd.f32 %v1238, %v1462
      %v1464 = vpop.f32.mrf.mxu0
      %1465 = vdwg.mxu0
      %1466 = vmatpush.bf16.msra.mxu0 0
      %1467 = vmatpush.bf16.msra.mxu0 0
      %1468 = vmatpush.bf16.msra.mxu0 0
      %1469 = vmatpush.bf16.msra.mxu0 0
      %1470 = vmatpush.bf16.msra.mxu0 %v1375
      %1471 = vmatpush.bf16.msra.mxu0 %v1367
      %1472 = vmatpush.bf16.msra.mxu0 %v1359
      %1473 = vmatpush.bf16.msra.mxu0 %v1351
      %1474 = vmatmul.bf16.gmra.mxu0 %v1412
      %v1475 = vpop.f32.mrf.mxu0
      %v1476 = vadd.f32 %v1239, %v1475
      %v1477 = vpop.f32.mrf.mxu0
      %1478 = vdwg.mxu0
      %1479 = vmatpush.bf16.msra.mxu0 0
      %1480 = vmatpush.bf16.msra.mxu0 0
      %1481 = vmatpush.bf16.msra.mxu0 0
      %1482 = vmatpush.bf16.msra.mxu0 0
      %1483 = vmatpush.bf16.msra.mxu0 %v1376
      %1484 = vmatpush.bf16.msra.mxu0 %v1368
      %1485 = vmatpush.bf16.msra.mxu0 %v1360
      %1486 = vmatpush.bf16.msra.mxu0 %v1352
      %1487 = vmatmul.bf16.gmra.mxu0 %v1412
      %v1488 = vpop.f32.mrf.mxu0
      %v1489 = vadd.f32 %v1240, %v1488
      %v1490 = vpop.f32.mrf.mxu0
      %1491 = vdwg.mxu0
      %1492 = vmatpush.bf16.msra.mxu0 0
      %1493 = vmatpush.bf16.msra.mxu0 0
      %1494 = vmatpush.bf16.msra.mxu0 0
      %1495 = vmatpush.bf16.msra.mxu0 0
      %1496 = vmatpush.bf16.msra.mxu0 %v1377
      %1497 = vmatpush.bf16.msra.mxu0 %v1369
      %1498 = vmatpush.bf16.msra.mxu0 %v1361
      %1499 = vmatpush.bf16.msra.mxu0 %v1353
      %1500 = vmatmul.bf16.gmra.mxu0 %v1412
      %v1501 = vpop.f32.mrf.mxu0
      %v1502 = vadd.f32 %v1241, %v1501
      %v1503 = vpop.f32.mrf.mxu0
      %1504 = vdwg.mxu0
      %1505 = vmatpush.bf16.msra.mxu0 0
      %1506 = vmatpush.bf16.msra.mxu0 0
      %1507 = vmatpush.bf16.msra.mxu0 0
      %1508 = vmatpush.bf16.msra.mxu0 0
      %1509 = vmatpush.bf16.msra.mxu0 %v1378
      %1510 = vmatpush.bf16.msra.mxu0 %v1370
      %1511 = vmatpush.bf16.msra.mxu0 %v1362
      %1512 = vmatpush.bf16.msra.mxu0 %v1354
      %1513 = vmatmul.bf16.gmra.mxu0 %v1412
      %v1514 = vpop.f32.mrf.mxu0
      %v1515 = vadd.f32 %v1242, %v1514
      %v1516 = vpop.f32.mrf.mxu0
      %1517 = vdwg.mxu0
      %v1518 = vmax.f32 %v1424, 0.0
      %v1519 = vmax.f32 %v1437, 0.0
      %v1520 = vmax.f32 %v1450, 0.0
      %v1521 = vmax.f32 %v1463, 0.0
      %v1522 = vmax.f32 %v1476, 0.0
      %v1523 = vmax.f32 %v1489, 0.0
      %v1524 = vmax.f32 %v1502, 0.0
      %v1525 = vmax.f32 %v1515, 0.0
      %v1526 = vld [vmem:[%s3] sm:$0xf]
      %v1527 = vld [vmem:[%s3 + $0x4] sm:$0xf]
      %v1528 = vld [vmem:[%s3 + $0x8] sm:$0xf]
      %v1529 = vld [vmem:[%s3 + $0xc] sm:$0xf]
      %v1530 = vld [vmem:[%s3 + $0x10] sm:$0xf]
      %v1531 = vld [vmem:[%s3 + $0x14] sm:$0xf]
      %v1532 = vld [vmem:[%s3 + $0x18] sm:$0xf]
      %v1533 = vld [vmem:[%s3 + $0x1c] sm:$0xf]
      %v1534 = vld [vmem:[%s3 + $0x20] sm:$0xf]
      %v1535 = vld [vmem:[%s3 + $0x24] sm:$0xf]
      %v1536 = vld [vmem:[%s3 + $0x28] sm:$0xf]
      %v1537 = vld [vmem:[%s3 + $0x2c] sm:$0xf]
      %v1538 = vld [vmem:[%s3 + $0x30] sm:$0xf]
      %v1539 = vld [vmem:[%s3 + $0x34] sm:$0xf]
      %v1540 = vld [vmem:[%s3 + $0x38] sm:$0xf]
      %v1541 = vld [vmem:[%s3 + $0x3c] sm:$0xf]
      %v1542 = vld [vmem:[%s3 + $0x40] sm:$0xf]
      %v1543 = vld [vmem:[%s3 + $0x44] sm:$0xf]
      %v1544 = vld [vmem:[%s3 + $0x48] sm:$0xf]
      %v1545 = vld [vmem:[%s3 + $0x4c] sm:$0xf]
      %v1546 = vld [vmem:[%s3 + $0x50] sm:$0xf]
      %v1547 = vld [vmem:[%s3 + $0x54] sm:$0xf]
      %v1548 = vld [vmem:[%s3 + $0x58] sm:$0xf]
      %v1549 = vld [vmem:[%s3 + $0x5c] sm:$0xf]
      %v1550 = vld [vmem:[%s3 + $0x60] sm:$0xf]
      %v1551 = vld [vmem:[%s3 + $0x64] sm:$0xf]
      %v1552 = vld [vmem:[%s3 + $0x68] sm:$0xf]
      %v1553 = vld [vmem:[%s3 + $0x6c] sm:$0xf]
      %v1554 = vld [vmem:[%s3 + $0x70] sm:$0xf]
      %v1555 = vld [vmem:[%s3 + $0x74] sm:$0xf]
      %v1556 = vld [vmem:[%s3 + $0x78] sm:$0xf]
      %v1557 = vld [vmem:[%s3 + $0x7c] sm:$0xf]
      %v1558 = vld [vmem:[%s3 + $0x80] sm:$0xf]
      %v1559 = vld [vmem:[%s3 + $0x84] sm:$0xf]
      %v1560 = vld [vmem:[%s3 + $0x88] sm:$0xf]
      %v1561 = vld [vmem:[%s3 + $0x8c] sm:$0xf]
      %v1562 = vld [vmem:[%s3 + $0x90] sm:$0xf]
      %v1563 = vld [vmem:[%s3 + $0x94] sm:$0xf]
      %v1564 = vld [vmem:[%s3 + $0x98] sm:$0xf]
      %v1565 = vld [vmem:[%s3 + $0x9c] sm:$0xf]
      %v1566 = vld [vmem:[%s3 + $0xa0] sm:$0xf]
      %v1567 = vld [vmem:[%s3 + $0xa4] sm:$0xf]
      %v1568 = vld [vmem:[%s3 + $0xa8] sm:$0xf]
      %v1569 = vld [vmem:[%s3 + $0xac] sm:$0xf]
      %v1570 = vld [vmem:[%s3 + $0xb0] sm:$0xf]
      %v1571 = vld [vmem:[%s3 + $0xb4] sm:$0xf]
      %v1572 = vld [vmem:[%s3 + $0xb8] sm:$0xf]
      %v1573 = vld [vmem:[%s3 + $0xbc] sm:$0xf]
      %v1574 = vld [vmem:[%s3 + $0xc0] sm:$0xf]
      %v1575 = vld [vmem:[%s3 + $0xc4] sm:$0xf]
      %v1576 = vld [vmem:[%s3 + $0xc8] sm:$0xf]
      %v1577 = vld [vmem:[%s3 + $0xcc] sm:$0xf]
      %v1578 = vld [vmem:[%s3 + $0xd0] sm:$0xf]
      %v1579 = vld [vmem:[%s3 + $0xd4] sm:$0xf]
      %v1580 = vld [vmem:[%s3 + $0xd8] sm:$0xf]
      %v1581 = vld [vmem:[%s3 + $0xdc] sm:$0xf]
      %v1582 = vld [vmem:[%s3 + $0xe0] sm:$0xf]
      %v1583 = vld [vmem:[%s3 + $0xe4] sm:$0xf]
      %v1584 = vld [vmem:[%s3 + $0xe8] sm:$0xf]
      %v1585 = vld [vmem:[%s3 + $0xec] sm:$0xf]
      %v1586 = vld [vmem:[%s3 + $0xf0] sm:$0xf]
      %v1587 = vld [vmem:[%s3 + $0xf4] sm:$0xf]
      %v1588 = vld [vmem:[%s3 + $0xf8] sm:$0xf]
      %v1589 = vld [vmem:[%s3 + $0xfc] sm:$0xf]
      %v1590 = vld [vmem:[%s3 + $0x100] sm:$0xf]
      %v1591 = vld [vmem:[%s3 + $0x104] sm:$0xf]
      %v1592 = vld [vmem:[%s3 + $0x108] sm:$0xf]
      %v1593 = vld [vmem:[%s3 + $0x10c] sm:$0xf]
      %v1594 = vld [vmem:[%s3 + $0x110] sm:$0xf]
      %v1595 = vld [vmem:[%s3 + $0x114] sm:$0xf]
      %v1596 = vld [vmem:[%s3 + $0x118] sm:$0xf]
      %v1597 = vld [vmem:[%s3 + $0x11c] sm:$0xf]
      %v1598 = vld [vmem:[%s3 + $0x120] sm:$0xf]
      %v1599 = vld [vmem:[%s3 + $0x124] sm:$0xf]
      %v1600 = vld [vmem:[%s3 + $0x128] sm:$0xf]
      %v1601 = vld [vmem:[%s3 + $0x12c] sm:$0xf]
      %v1602 = vld [vmem:[%s3 + $0x130] sm:$0xf]
      %v1603 = vld [vmem:[%s3 + $0x134] sm:$0xf]
      %v1604 = vld [vmem:[%s3 + $0x138] sm:$0xf]
      %v1605 = vld [vmem:[%s3 + $0x13c] sm:$0xf]
      %v1606 = vld [vmem:[%s3 + $0x140] sm:$0xf]
      %v1607 = vld [vmem:[%s3 + $0x144] sm:$0xf]
      %v1608 = vld [vmem:[%s3 + $0x148] sm:$0xf]
      %v1609 = vld [vmem:[%s3 + $0x14c] sm:$0xf]
      %v1610 = vld [vmem:[%s3 + $0x150] sm:$0xf]
      %v1611 = vld [vmem:[%s3 + $0x154] sm:$0xf]
      %v1612 = vld [vmem:[%s3 + $0x158] sm:$0xf]
      %v1613 = vld [vmem:[%s3 + $0x15c] sm:$0xf]
      %v1614 = vld [vmem:[%s3 + $0x160] sm:$0xf]
      %v1615 = vld [vmem:[%s3 + $0x164] sm:$0xf]
      %v1616 = vld [vmem:[%s3 + $0x168] sm:$0xf]
      %v1617 = vld [vmem:[%s3 + $0x16c] sm:$0xf]
      %v1618 = vld [vmem:[%s3 + $0x170] sm:$0xf]
      %v1619 = vld [vmem:[%s3 + $0x174] sm:$0xf]
      %v1620 = vld [vmem:[%s3 + $0x178] sm:$0xf]
      %v1621 = vld [vmem:[%s3 + $0x17c] sm:$0xf]
      %v1622 = vld [vmem:[%s3 + $0x180] sm:$0xf]
      %v1623 = vld [vmem:[%s3 + $0x184] sm:$0xf]
      %v1624 = vld [vmem:[%s3 + $0x188] sm:$0xf]
      %v1625 = vld [vmem:[%s3 + $0x18c] sm:$0xf]
      %v1626 = vld [vmem:[%s3 + $0x190] sm:$0xf]
      %v1627 = vld [vmem:[%s3 + $0x194] sm:$0xf]
      %v1628 = vld [vmem:[%s3 + $0x198] sm:$0xf]
      %v1629 = vld [vmem:[%s3 + $0x19c] sm:$0xf]
      %v1630 = vld [vmem:[%s3 + $0x1a0] sm:$0xf]
      %v1631 = vld [vmem:[%s3 + $0x1a4] sm:$0xf]
      %v1632 = vld [vmem:[%s3 + $0x1a8] sm:$0xf]
      %v1633 = vld [vmem:[%s3 + $0x1ac] sm:$0xf]
      %v1634 = vld [vmem:[%s3 + $0x1b0] sm:$0xf]
      %v1635 = vld [vmem:[%s3 + $0x1b4] sm:$0xf]
      %v1636 = vld [vmem:[%s3 + $0x1b8] sm:$0xf]
      %v1637 = vld [vmem:[%s3 + $0x1bc] sm:$0xf]
      %v1638 = vld [vmem:[%s3 + $0x1c0] sm:$0xf]
      %v1639 = vld [vmem:[%s3 + $0x1c4] sm:$0xf]
      %v1640 = vld [vmem:[%s3 + $0x1c8] sm:$0xf]
      %v1641 = vld [vmem:[%s3 + $0x1cc] sm:$0xf]
      %v1642 = vld [vmem:[%s3 + $0x1d0] sm:$0xf]
      %v1643 = vld [vmem:[%s3 + $0x1d4] sm:$0xf]
      %v1644 = vld [vmem:[%s3 + $0x1d8] sm:$0xf]
      %v1645 = vld [vmem:[%s3 + $0x1dc] sm:$0xf]
      %v1646 = vld [vmem:[%s3 + $0x1e0] sm:$0xf]
      %v1647 = vld [vmem:[%s3 + $0x1e4] sm:$0xf]
      %v1648 = vld [vmem:[%s3 + $0x1e8] sm:$0xf]
      %v1649 = vld [vmem:[%s3 + $0x1ec] sm:$0xf]
      %v1650 = vld [vmem:[%s3 + $0x1f0] sm:$0xf]
      %v1651 = vld [vmem:[%s3 + $0x1f4] sm:$0xf]
      %v1652 = vld [vmem:[%s3 + $0x1f8] sm:$0xf]
      %v1653 = vld [vmem:[%s3 + $0x1fc] sm:$0xf]
      %v1654 = vpack.c.bf16 %v1518, %v1518
      %v1655 = vpack.c.bf16 %v1519, %v1519
      %v1656 = vpack.c.bf16 %v1520, %v1520
      %v1657 = vpack.c.bf16 %v1521, %v1521
      %v1658 = vpack.c.bf16 %v1522, %v1522
      %v1659 = vpack.c.bf16 %v1523, %v1523
      %v1660 = vpack.c.bf16 %v1524, %v1524
      %v1661 = vpack.c.bf16 %v1525, %v1525
      %v1790 = vunpack.c.l.b16 %v1526
      %v1791 = vunpack.c.l.b16 %v1527
      %v1792 = vunpack.c.l.b16 %v1528
      %v1793 = vunpack.c.l.b16 %v1529
      %v1794 = vunpack.c.l.b16 %v1530
      %v1795 = vunpack.c.l.b16 %v1531
      %v1796 = vunpack.c.l.b16 %v1532
      %v1797 = vunpack.c.l.b16 %v1533
      %v1798 = vunpack.c.l.b16 %v1534
      %v1799 = vunpack.c.l.b16 %v1535
      %v1800 = vunpack.c.l.b16 %v1536
      %v1801 = vunpack.c.l.b16 %v1537
      %v1802 = vunpack.c.l.b16 %v1538
      %v1803 = vunpack.c.l.b16 %v1539
      %v1804 = vunpack.c.l.b16 %v1540
      %v1805 = vunpack.c.l.b16 %v1541
      %v1806 = vunpack.c.l.b16 %v1542
      %v1807 = vunpack.c.l.b16 %v1543
      %v1808 = vunpack.c.l.b16 %v1544
      %v1809 = vunpack.c.l.b16 %v1545
      %v1810 = vunpack.c.l.b16 %v1546
      %v1811 = vunpack.c.l.b16 %v1547
      %v1812 = vunpack.c.l.b16 %v1548
      %v1813 = vunpack.c.l.b16 %v1549
      %v1814 = vunpack.c.l.b16 %v1550
      %v1815 = vunpack.c.l.b16 %v1551
      %v1816 = vunpack.c.l.b16 %v1552
      %v1817 = vunpack.c.l.b16 %v1553
      %v1818 = vunpack.c.l.b16 %v1554
      %v1819 = vunpack.c.l.b16 %v1555
      %v1820 = vunpack.c.l.b16 %v1556
      %v1821 = vunpack.c.l.b16 %v1557
      %v1822 = vunpack.c.l.b16 %v1558
      %v1823 = vunpack.c.l.b16 %v1559
      %v1824 = vunpack.c.l.b16 %v1560
      %v1825 = vunpack.c.l.b16 %v1561
      %v1826 = vunpack.c.l.b16 %v1562
      %v1827 = vunpack.c.l.b16 %v1563
      %v1828 = vunpack.c.l.b16 %v1564
      %v1829 = vunpack.c.l.b16 %v1565
      %v1830 = vunpack.c.l.b16 %v1566
      %v1831 = vunpack.c.l.b16 %v1567
      %v1832 = vunpack.c.l.b16 %v1568
      %v1833 = vunpack.c.l.b16 %v1569
      %v1834 = vunpack.c.l.b16 %v1570
      %v1835 = vunpack.c.l.b16 %v1571
      %v1836 = vunpack.c.l.b16 %v1572
      %v1837 = vunpack.c.l.b16 %v1573
      %v1838 = vunpack.c.l.b16 %v1574
      %v1839 = vunpack.c.l.b16 %v1575
      %v1840 = vunpack.c.l.b16 %v1576
      %v1841 = vunpack.c.l.b16 %v1577
      %v1842 = vunpack.c.l.b16 %v1578
      %v1843 = vunpack.c.l.b16 %v1579
      %v1844 = vunpack.c.l.b16 %v1580
      %v1845 = vunpack.c.l.b16 %v1581
      %v1846 = vunpack.c.l.b16 %v1582
      %v1847 = vunpack.c.l.b16 %v1583
      %v1848 = vunpack.c.l.b16 %v1584
      %v1849 = vunpack.c.l.b16 %v1585
      %v1850 = vunpack.c.l.b16 %v1586
      %v1851 = vunpack.c.l.b16 %v1587
      %v1852 = vunpack.c.l.b16 %v1588
      %v1853 = vunpack.c.l.b16 %v1589
      %v1854 = vunpack.c.l.b16 %v1590
      %v1855 = vunpack.c.l.b16 %v1591
      %v1856 = vunpack.c.l.b16 %v1592
      %v1857 = vunpack.c.l.b16 %v1593
      %v1858 = vunpack.c.l.b16 %v1594
      %v1859 = vunpack.c.l.b16 %v1595
      %v1860 = vunpack.c.l.b16 %v1596
      %v1861 = vunpack.c.l.b16 %v1597
      %v1862 = vunpack.c.l.b16 %v1598
      %v1863 = vunpack.c.l.b16 %v1599
      %v1864 = vunpack.c.l.b16 %v1600
      %v1865 = vunpack.c.l.b16 %v1601
      %v1866 = vunpack.c.l.b16 %v1602
      %v1867 = vunpack.c.l.b16 %v1603
      %v1868 = vunpack.c.l.b16 %v1604
      %v1869 = vunpack.c.l.b16 %v1605
      %v1870 = vunpack.c.l.b16 %v1606
      %v1871 = vunpack.c.l.b16 %v1607
      %v1872 = vunpack.c.l.b16 %v1608
      %v1873 = vunpack.c.l.b16 %v1609
      %v1874 = vunpack.c.l.b16 %v1610
      %v1875 = vunpack.c.l.b16 %v1611
      %v1876 = vunpack.c.l.b16 %v1612
      %v1877 = vunpack.c.l.b16 %v1613
      %v1878 = vunpack.c.l.b16 %v1614
      %v1879 = vunpack.c.l.b16 %v1615
      %v1880 = vunpack.c.l.b16 %v1616
      %v1881 = vunpack.c.l.b16 %v1617
      %v1882 = vunpack.c.l.b16 %v1618
      %v1883 = vunpack.c.l.b16 %v1619
      %v1884 = vunpack.c.l.b16 %v1620
      %v1885 = vunpack.c.l.b16 %v1621
      %v1886 = vunpack.c.l.b16 %v1622
      %v1887 = vunpack.c.l.b16 %v1623
      %v1888 = vunpack.c.l.b16 %v1624
      %v1889 = vunpack.c.l.b16 %v1625
      %v1890 = vunpack.c.l.b16 %v1626
      %v1891 = vunpack.c.l.b16 %v1627
      %v1892 = vunpack.c.l.b16 %v1628
      %v1893 = vunpack.c.l.b16 %v1629
      %v1894 = vunpack.c.l.b16 %v1630
      %v1895 = vunpack.c.l.b16 %v1631
      %v1896 = vunpack.c.l.b16 %v1632
      %v1897 = vunpack.c.l.b16 %v1633
      %v1898 = vunpack.c.l.b16 %v1634
      %v1899 = vunpack.c.l.b16 %v1635
      %v1900 = vunpack.c.l.b16 %v1636
      %v1901 = vunpack.c.l.b16 %v1637
      %v1902 = vunpack.c.l.b16 %v1638
      %v1903 = vunpack.c.l.b16 %v1639
      %v1904 = vunpack.c.l.b16 %v1640
      %v1905 = vunpack.c.l.b16 %v1641
      %v1906 = vunpack.c.l.b16 %v1642
      %v1907 = vunpack.c.l.b16 %v1643
      %v1908 = vunpack.c.l.b16 %v1644
      %v1909 = vunpack.c.l.b16 %v1645
      %v1910 = vunpack.c.l.b16 %v1646
      %v1911 = vunpack.c.l.b16 %v1647
      %v1912 = vunpack.c.l.b16 %v1648
      %v1913 = vunpack.c.l.b16 %v1649
      %v1914 = vunpack.c.l.b16 %v1650
      %v1915 = vunpack.c.l.b16 %v1651
      %v1916 = vunpack.c.l.b16 %v1652
      %v1917 = vunpack.c.l.b16 %v1653
      %v1918 = vpack.c.b16 %v1791, %v1790
      %v1919 = vpack.c.b16 %v1793, %v1792
      %v1920 = vpack.c.b16 %v1795, %v1794
      %v1921 = vpack.c.b16 %v1797, %v1796
      %v1922 = vpack.c.b16 %v1799, %v1798
      %v1923 = vpack.c.b16 %v1801, %v1800
      %v1924 = vpack.c.b16 %v1803, %v1802
      %v1925 = vpack.c.b16 %v1805, %v1804
      %v1926 = vpack.c.b16 %v1807, %v1806
      %v1927 = vpack.c.b16 %v1809, %v1808
      %v1928 = vpack.c.b16 %v1811, %v1810
      %v1929 = vpack.c.b16 %v1813, %v1812
      %v1930 = vpack.c.b16 %v1815, %v1814
      %v1931 = vpack.c.b16 %v1817, %v1816
      %v1932 = vpack.c.b16 %v1819, %v1818
      %v1933 = vpack.c.b16 %v1821, %v1820
      %v1934 = vpack.c.b16 %v1823, %v1822
      %v1935 = vpack.c.b16 %v1825, %v1824
      %v1936 = vpack.c.b16 %v1827, %v1826
      %v1937 = vpack.c.b16 %v1829, %v1828
      %v1938 = vpack.c.b16 %v1831, %v1830
      %v1939 = vpack.c.b16 %v1833, %v1832
      %v1940 = vpack.c.b16 %v1835, %v1834
      %v1941 = vpack.c.b16 %v1837, %v1836
      %v1942 = vpack.c.b16 %v1839, %v1838
      %v1943 = vpack.c.b16 %v1841, %v1840
      %v1944 = vpack.c.b16 %v1843, %v1842
      %v1945 = vpack.c.b16 %v1845, %v1844
      %v1946 = vpack.c.b16 %v1847, %v1846
      %v1947 = vpack.c.b16 %v1849, %v1848
      %v1948 = vpack.c.b16 %v1851, %v1850
      %v1949 = vpack.c.b16 %v1853, %v1852
      %v1950 = vpack.c.b16 %v1855, %v1854
      %v1951 = vpack.c.b16 %v1857, %v1856
      %v1952 = vpack.c.b16 %v1859, %v1858
      %v1953 = vpack.c.b16 %v1861, %v1860
      %v1954 = vpack.c.b16 %v1863, %v1862
      %v1955 = vpack.c.b16 %v1865, %v1864
      %v1956 = vpack.c.b16 %v1867, %v1866
      %v1957 = vpack.c.b16 %v1869, %v1868
      %v1958 = vpack.c.b16 %v1871, %v1870
      %v1959 = vpack.c.b16 %v1873, %v1872
      %v1960 = vpack.c.b16 %v1875, %v1874
      %v1961 = vpack.c.b16 %v1877, %v1876
      %v1962 = vpack.c.b16 %v1879, %v1878
      %v1963 = vpack.c.b16 %v1881, %v1880
      %v1964 = vpack.c.b16 %v1883, %v1882
      %v1965 = vpack.c.b16 %v1885, %v1884
      %v1966 = vpack.c.b16 %v1887, %v1886
      %v1967 = vpack.c.b16 %v1889, %v1888
      %v1968 = vpack.c.b16 %v1891, %v1890
      %v1969 = vpack.c.b16 %v1893, %v1892
      %v1970 = vpack.c.b16 %v1895, %v1894
      %v1971 = vpack.c.b16 %v1897, %v1896
      %v1972 = vpack.c.b16 %v1899, %v1898
      %v1973 = vpack.c.b16 %v1901, %v1900
      %v1974 = vpack.c.b16 %v1903, %v1902
      %v1975 = vpack.c.b16 %v1905, %v1904
      %v1976 = vpack.c.b16 %v1907, %v1906
      %v1977 = vpack.c.b16 %v1909, %v1908
      %v1978 = vpack.c.b16 %v1911, %v1910
      %v1979 = vpack.c.b16 %v1913, %v1912
      %v1980 = vpack.c.b16 %v1915, %v1914
      %v1981 = vpack.c.b16 %v1917, %v1916
      %2046 = vmatpush.bf16.msra.mxu0 %v1925
      %2047 = vmatpush.bf16.msra.mxu0 %v1924
      %2048 = vmatpush.bf16.msra.mxu0 %v1923
      %2049 = vmatpush.bf16.msra.mxu0 %v1922
      %2050 = vmatpush.bf16.msra.mxu0 %v1921
      %2051 = vmatpush.bf16.msra.mxu0 %v1920
      %2052 = vmatpush.bf16.msra.mxu0 %v1919
      %2053 = vmatpush.bf16.msra.mxu0 %v1918
      %2054 = vmatmul.bf16.gmra.mxu0 %v1654
      %v2055 = vpop.f32.mrf.mxu0
      %v2056 = vadd.f32 0.0, %v2055
      %v2057 = vpop.f32.mrf.mxu0
      %2058 = vdwg.mxu0
      %2059 = vmatpush.bf16.msra.mxu0 %v1933
      %2060 = vmatpush.bf16.msra.mxu0 %v1932
      %2061 = vmatpush.bf16.msra.mxu0 %v1931
      %2062 = vmatpush.bf16.msra.mxu0 %v1930
      %2063 = vmatpush.bf16.msra.mxu0 %v1929
      %2064 = vmatpush.bf16.msra.mxu0 %v1928
      %2065 = vmatpush.bf16.msra.mxu0 %v1927
      %2066 = vmatpush.bf16.msra.mxu0 %v1926
      %2067 = vmatmul.bf16.gmra.mxu0 %v1655
      %v2068 = vpop.f32.mrf.mxu0
      %v2069 = vadd.f32 %v2056, %v2068
      %v2070 = vpop.f32.mrf.mxu0
      %2071 = vdwg.mxu0
      %2072 = vmatpush.bf16.msra.mxu0 %v1941
      %2073 = vmatpush.bf16.msra.mxu0 %v1940
      %2074 = vmatpush.bf16.msra.mxu0 %v1939
      %2075 = vmatpush.bf16.msra.mxu0 %v1938
      %2076 = vmatpush.bf16.msra.mxu0 %v1937
      %2077 = vmatpush.bf16.msra.mxu0 %v1936
      %2078 = vmatpush.bf16.msra.mxu0 %v1935
      %2079 = vmatpush.bf16.msra.mxu0 %v1934
      %2080 = vmatmul.bf16.gmra.mxu0 %v1656
      %v2081 = vpop.f32.mrf.mxu0
      %v2082 = vadd.f32 %v2069, %v2081
      %v2083 = vpop.f32.mrf.mxu0
      %2084 = vdwg.mxu0
      %2085 = vmatpush.bf16.msra.mxu0 %v1949
      %2086 = vmatpush.bf16.msra.mxu0 %v1948
      %2087 = vmatpush.bf16.msra.mxu0 %v1947
      %2088 = vmatpush.bf16.msra.mxu0 %v1946
      %2089 = vmatpush.bf16.msra.mxu0 %v1945
      %2090 = vmatpush.bf16.msra.mxu0 %v1944
      %2091 = vmatpush.bf16.msra.mxu0 %v1943
      %2092 = vmatpush.bf16.msra.mxu0 %v1942
      %2093 = vmatmul.bf16.gmra.mxu0 %v1657
      %v2094 = vpop.f32.mrf.mxu0
      %v2095 = vadd.f32 %v2082, %v2094
      %v2096 = vpop.f32.mrf.mxu0
      %2097 = vdwg.mxu0
      %2098 = vmatpush.bf16.msra.mxu0 %v1957
      %2099 = vmatpush.bf16.msra.mxu0 %v1956
      %2100 = vmatpush.bf16.msra.mxu0 %v1955
      %2101 = vmatpush.bf16.msra.mxu0 %v1954
      %2102 = vmatpush.bf16.msra.mxu0 %v1953
      %2103 = vmatpush.bf16.msra.mxu0 %v1952
      %2104 = vmatpush.bf16.msra.mxu0 %v1951
      %2105 = vmatpush.bf16.msra.mxu0 %v1950
      %2106 = vmatmul.bf16.gmra.mxu0 %v1658
      %v2107 = vpop.f32.mrf.mxu0
      %v2108 = vadd.f32 %v2095, %v2107
      %v2109 = vpop.f32.mrf.mxu0
      %2110 = vdwg.mxu0
      %2111 = vmatpush.bf16.msra.mxu0 %v1965
      %2112 = vmatpush.bf16.msra.mxu0 %v1964
      %2113 = vmatpush.bf16.msra.mxu0 %v1963
      %2114 = vmatpush.bf16.msra.mxu0 %v1962
      %2115 = vmatpush.bf16.msra.mxu0 %v1961
      %2116 = vmatpush.bf16.msra.mxu0 %v1960
      %2117 = vmatpush.bf16.msra.mxu0 %v1959
      %2118 = vmatpush.bf16.msra.mxu0 %v1958
      %2119 = vmatmul.bf16.gmra.mxu0 %v1659
      %v2120 = vpop.f32.mrf.mxu0
      %v2121 = vadd.f32 %v2108, %v2120
      %v2122 = vpop.f32.mrf.mxu0
      %2123 = vdwg.mxu0
      %2124 = vmatpush.bf16.msra.mxu0 %v1973
      %2125 = vmatpush.bf16.msra.mxu0 %v1972
      %2126 = vmatpush.bf16.msra.mxu0 %v1971
      %2127 = vmatpush.bf16.msra.mxu0 %v1970
      %2128 = vmatpush.bf16.msra.mxu0 %v1969
      %2129 = vmatpush.bf16.msra.mxu0 %v1968
      %2130 = vmatpush.bf16.msra.mxu0 %v1967
      %2131 = vmatpush.bf16.msra.mxu0 %v1966
      %2132 = vmatmul.bf16.gmra.mxu0 %v1660
      %v2133 = vpop.f32.mrf.mxu0
      %v2134 = vadd.f32 %v2121, %v2133
      %v2135 = vpop.f32.mrf.mxu0
      %2136 = vdwg.mxu0
      %2137 = vmatpush.bf16.msra.mxu0 %v1981
      %2138 = vmatpush.bf16.msra.mxu0 %v1980
      %2139 = vmatpush.bf16.msra.mxu0 %v1979
      %2140 = vmatpush.bf16.msra.mxu0 %v1978
      %2141 = vmatpush.bf16.msra.mxu0 %v1977
      %2142 = vmatpush.bf16.msra.mxu0 %v1976
      %2143 = vmatpush.bf16.msra.mxu0 %v1975
      %2144 = vmatpush.bf16.msra.mxu0 %v1974
      %2145 = vmatmul.bf16.gmra.mxu0 %v1661
      %v2146 = vpop.f32.mrf.mxu0
      %v2147 = vadd.f32 %v2134, %v2146
      %v2148 = vpop.f32.mrf.mxu0
      %2149 = vdwg.mxu0
      %v2150 = vadd.f32 %v1167, %v2147
      %v2151 = vld [vmem:[%s6 + $0x11] sm:$0x1]
      %v2153 = vperm.slane %v2151, 0
      %v2155 = vadd.f32 %v2150, %v2153
      %v2156 = vld [vmem:[%s6 + $0x18] sm:$0x1]
      %v2157 = vld [vmem:[%s6 + $0x19] sm:$0x1]
      %v2158 = vsel %vm432, %v2155, 0.0
      %2159 = vadd.xlane.f32.xlu0 %v2158
      %v2160 = vpop.xlane.xlu0 %2159
      %v2161 = vmul.f32 %v2160, %v442
      %v2162 = vsub.f32 %v2155, %v2161
      %v2163 = vmul.f32 %v2162, %v2162
      %v2164 = vsel %vm432, %v2163, 0.0
      %2165 = vadd.xlane.f32.xlu0 %v2164
      %v2166 = vpop.xlane.xlu0 %2165
      %v2167 = vmul.f32 %v2166, %v442
      %v2168 = vadd.f32 %v2167, 1e-05
      %v2169 = vrsqrt.pop %v2168
      %v2170 = vmul.f32 %v2169, %v2168
      %v2171 = vmul.f32 %v2170, %v2169
      %v2172 = vmul.f32 0.5, %v2171
      %v2173 = vsub.f32 1.5, %v2172
      %v2174 = vmul.f32 %v2169, %v2173
      %vm2175 = vweird.f32 %v2168
      %vm2176 = vweird.f32 %v2169
      %vm2177 = vmor %vm2175, %vm2176
      %v2178 = vsel %vm2177, %v2169, %v2174
      %v2179 = vmul.f32 %v2162, %v2178
      %v2181 = vperm.slane %v2156, 0
      %v2183 = vmul.f32 %v2179, %v2181
      %v2185 = vperm.slane %v2157, 0
      %v2187 = vadd.f32 %v2183, %v2185
      %v2188 = vld [vmem:[%s6 + $0x27] sm:$0x3]
      %s2189 = scalar_lea.vmem %s1, 128
      %v2190 = vld [vmem:[%s2189] sm:$0xff]
      %v2191 = vld [vmem:[%s2189 + $0x8] sm:$0xff]
      %v2192 = vld [vmem:[%s2189 + $0x10] sm:$0xff]
      %v2193 = vld [vmem:[%s2189 + $0x18] sm:$0xff]
      %v2194 = vld [vmem:[%s2189 + $0x20] sm:$0xff]
      %v2195 = vld [vmem:[%s2189 + $0x28] sm:$0xff]
      %v2196 = vld [vmem:[%s2189 + $0x30] sm:$0xff]
      %v2197 = vld [vmem:[%s2189 + $0x38] sm:$0xff]
      %v2198 = vpack.c.bf16 %v2187, %v2187
      %v2200 = vperm.slane %v2188, 0
      %v2201 = vperm.slane %v2188, 1
      %v2212 = vunpack.c.l.b16 %v2190
      %v2213 = vunpack.c.h.b16 %v2190
      %v2214 = vunpack.c.l.b16 %v2191
      %v2215 = vunpack.c.h.b16 %v2191
      %v2216 = vunpack.c.l.b16 %v2192
      %v2217 = vunpack.c.h.b16 %v2192
      %v2218 = vunpack.c.l.b16 %v2193
      %v2219 = vunpack.c.h.b16 %v2193
      %v2220 = vunpack.c.l.b16 %v2194
      %v2221 = vunpack.c.h.b16 %v2194
      %v2222 = vunpack.c.l.b16 %v2195
      %v2223 = vunpack.c.h.b16 %v2195
      %v2224 = vunpack.c.l.b16 %v2196
      %v2225 = vunpack.c.h.b16 %v2196
      %v2226 = vunpack.c.l.b16 %v2197
      %v2227 = vunpack.c.h.b16 %v2197
      %v2228 = vpack.c.b16 %v2214, %v2212
      %v2229 = vpack.c.b16 %v2215, %v2213
      %v2230 = vpack.c.b16 %v2218, %v2216
      %v2231 = vpack.c.b16 %v2219, %v2217
      %v2232 = vpack.c.b16 %v2222, %v2220
      %v2233 = vpack.c.b16 %v2223, %v2221
      %v2234 = vpack.c.b16 %v2226, %v2224
      %v2235 = vpack.c.b16 %v2227, %v2225
      %v2245 = vsel %vm432, %v2198, 0
      %2247 = vmatpush.bf16.msra.mxu0 0
      %2248 = vmatpush.bf16.msra.mxu0 0
      %2249 = vmatpush.bf16.msra.mxu0 0
      %2250 = vmatpush.bf16.msra.mxu0 0
      %2251 = vmatpush.bf16.msra.mxu0 %v2234
      %2252 = vmatpush.bf16.msra.mxu0 %v2232
      %2253 = vmatpush.bf16.msra.mxu0 %v2230
      %2254 = vmatpush.bf16.msra.mxu0 %v2228
      %2255 = vmatmul.bf16.gmra.mxu0 %v2245
      %v2256 = vpop.f32.mrf.mxu0
      %v2257 = vadd.f32 %v2200, %v2256
      %v2258 = vpop.f32.mrf.mxu0
      %2259 = vdwg.mxu0
      %2260 = vmatpush.bf16.msra.mxu0 0
      %2261 = vmatpush.bf16.msra.mxu0 0
      %2262 = vmatpush.bf16.msra.mxu0 0
      %2263 = vmatpush.bf16.msra.mxu0 0
      %2264 = vmatpush.bf16.msra.mxu0 %v2235
      %2265 = vmatpush.bf16.msra.mxu0 %v2233
      %2266 = vmatpush.bf16.msra.mxu0 %v2231
      %2267 = vmatpush.bf16.msra.mxu0 %v2229
      %2268 = vmatmul.bf16.gmra.mxu0 %v2245
      %v2269 = vpop.f32.mrf.mxu0
      %v2270 = vadd.f32 %v2201, %v2269
      %v2271 = vpop.f32.mrf.mxu0
      %2272 = vdwg.mxu0
      %v2273 = vpack.c.bf16 %v2257, %v2257
      %2275 = vrot.lane.b32.xlu0 %v2273, 64
      %v2276 = vpop.permute.xlu0 %2275
      %v2278 = vsel %vm558, %v2273, 0
      %v2281 = vsel %vm558, %v2276, 0
      %2283 = vmatpush.bf16.xpose.msra.mxu0 0
      %2284 = vmatpush.bf16.xpose.msra.mxu0 0
      %2285 = vmatpush.bf16.xpose.msra.mxu0 0
      %2286 = vmatpush.bf16.xpose.msra.mxu0 0
      %2287 = vmatpush.bf16.xpose.msra.mxu0 0
      %2288 = vmatpush.bf16.xpose.msra.mxu0 0
      %2289 = vmatpush.bf16.xpose.msra.mxu0 0
      %2290 = vmatpush.bf16.xpose.msra.mxu0 %v2281
      %2291 = vmatmul.bf16.gmra.mxu0 %v2278
      %v2292 = vpop.f32.mrf.mxu0
      %v2293 = vadd.f32 %v316, %v2292
      %v2294 = vpop.f32.mrf.mxu0
      %2295 = vdwg.mxu0
      %v2296 = vsel %vm578, %v2293, -inf
      %2297 = vmax.xlane.f32.xlu0 %v2296
      %v2298 = vpop.xlane.xlu0 %2297
      %v2299 = vsub.f32 %v2293, %v2298
      %v2300 = vmul.f32 %v2299, 1.442695
      %v2301 = vpow.pop %v2300
      %v2302 = vsel %vm578, %v2301, 0.0
      %2303 = vadd.xlane.f32.xlu0 %v2302
      %v2304 = vpop.xlane.xlu0 %2303
      %v2305 = vrcp.pop %v2304
      %v2306 = vmul.f32 %v2304, %v2305
      %v2307 = vsub.f32 1.0, %v2306
      %v2308 = vmul.f32 %v2305, %v2307
      %v2309 = vadd.f32 %v2305, %v2308
      %vm2310 = vweird.f32 %v2304
      %vm2311 = vweird.f32 %v2305
      %vm2312 = vmor %vm2310, %vm2311
      %v2313 = vsel %vm2312, %v2305, %v2309
      %v2314 = vand.u32 2147483647, %v2304
      %vm2315 = vcmp.eq.f32.partialorder %v2314, 8.507059e+37
      %v2316 = vand.u32 %v2304, 2147483648
      %v2317 = vor.u32 1.1754944e-38, %v2316
      %v2318 = vsel %vm2315, %v2317, %v2313
      %v2319 = vmul.f32 %v2301, %v2318
      %v2320 = vpack.c.bf16 %v2270, %v2270
      %v2321 = vpack.c.bf16 %v2319, %v2319
      %v2323 = vsel %vm578, %v2321, 0
      %v2326 = vsel %vm608, %v2320, 0
      %2328 = vmatpush.bf16.msra.mxu0 0
      %2329 = vmatpush.bf16.msra.mxu0 0
      %2330 = vmatpush.bf16.msra.mxu0 0
      %2331 = vmatpush.bf16.msra.mxu0 0
      %2332 = vmatpush.bf16.msra.mxu0 0
      %2333 = vmatpush.bf16.msra.mxu0 0
      %2334 = vmatpush.bf16.msra.mxu0 0
      %2335 = vmatpush.bf16.msra.mxu0 %v2326
      %2336 = vmatmul.bf16.gmra.mxu0 %v2323
      %v2337 = vpop.f32.mrf.mxu0
      %v2338 = vadd.f32 0.0, %v2337
      %v2339 = vpop.f32.mrf.mxu0
      %2340 = vdwg.mxu0
      %v2341 = vld [vmem:[%s2189 + $0x4] sm:$0xf]
      %v2342 = vld [vmem:[%s2189 + $0xc] sm:$0xf]
      %v2343 = vld [vmem:[%s2189 + $0x14] sm:$0xf]
      %v2344 = vld [vmem:[%s2189 + $0x1c] sm:$0xf]
      %v2345 = vpack.c.bf16 %v2338, %v2338
      %2346 = vrot.lane.b32.xlu0 %v2273, 96
      %v2347 = vpop.permute.xlu0 %2346
      %2348 = vrot.lane.b32.xlu0 %v2273, 32
      %v2349 = vpop.permute.xlu0 %2348
      %v2351 = vsel %vm558, %v2347, 0
      %v2354 = vsel %vm558, %v2349, 0
      %2356 = vmatpush.bf16.xpose.msra.mxu0 0
      %2357 = vmatpush.bf16.xpose.msra.mxu0 0
      %2358 = vmatpush.bf16.xpose.msra.mxu0 0
      %2359 = vmatpush.bf16.xpose.msra.mxu0 0
      %2360 = vmatpush.bf16.xpose.msra.mxu0 0
      %2361 = vmatpush.bf16.xpose.msra.mxu0 0
      %2362 = vmatpush.bf16.xpose.msra.mxu0 0
      %2363 = vmatpush.bf16.xpose.msra.mxu0 %v2354
      %2364 = vmatmul.bf16.gmra.mxu0 %v2351
      %v2365 = vpop.f32.mrf.mxu0
      %v2366 = vadd.f32 %v316, %v2365
      %v2367 = vpop.f32.mrf.mxu0
      %2368 = vdwg.mxu0
      %v2369 = vsel %vm578, %v2366, -inf
      %2370 = vmax.xlane.f32.xlu0 %v2369
      %v2371 = vpop.xlane.xlu0 %2370
      %v2372 = vsub.f32 %v2366, %v2371
      %v2373 = vmul.f32 %v2372, 1.442695
      %v2374 = vpow.pop %v2373
      %v2375 = vsel %vm578, %v2374, 0.0
      %2376 = vadd.xlane.f32.xlu0 %v2375
      %v2377 = vpop.xlane.xlu0 %2376
      %v2378 = vrcp.pop %v2377
      %v2379 = vmul.f32 %v2377, %v2378
      %v2380 = vsub.f32 1.0, %v2379
      %v2381 = vmul.f32 %v2378, %v2380
      %v2382 = vadd.f32 %v2378, %v2381
      %vm2383 = vweird.f32 %v2377
      %vm2384 = vweird.f32 %v2378
      %vm2385 = vmor %vm2383, %vm2384
      %v2386 = vsel %vm2385, %v2378, %v2382
      %v2387 = vand.u32 2147483647, %v2377
      %vm2388 = vcmp.eq.f32.partialorder %v2387, 8.507059e+37
      %v2389 = vand.u32 %v2377, 2147483648
      %v2390 = vor.u32 1.1754944e-38, %v2389
      %v2391 = vsel %vm2388, %v2390, %v2386
      %v2392 = vmul.f32 %v2374, %v2391
      %v2393 = vpack.c.bf16 %v2392, %v2392
      %2395 = vrot.lane.b32.xlu0 %v2320, 96
      %v2396 = vpop.permute.xlu0 %2395
      %v2398 = vsel %vm578, %v2393, 0
      %v2401 = vsel %vm608, %v2396, 0
      %2403 = vmatpush.bf16.msra.mxu0 0
      %2404 = vmatpush.bf16.msra.mxu0 0
      %2405 = vmatpush.bf16.msra.mxu0 0
      %2406 = vmatpush.bf16.msra.mxu0 0
      %2407 = vmatpush.bf16.msra.mxu0 0
      %2408 = vmatpush.bf16.msra.mxu0 0
      %2409 = vmatpush.bf16.msra.mxu0 0
      %2410 = vmatpush.bf16.msra.mxu0 %v2401
      %2411 = vmatmul.bf16.gmra.mxu0 %v2398
      %v2412 = vpop.f32.mrf.mxu0
      %v2413 = vadd.f32 0.0, %v2412
      %v2414 = vpop.f32.mrf.mxu0
      %2415 = vdwg.mxu0
      %v2416 = vld [vmem:[%s2189 + $0x24] sm:$0xf]
      %v2417 = vld [vmem:[%s2189 + $0x2c] sm:$0xf]
      %v2418 = vld [vmem:[%s2189 + $0x34] sm:$0xf]
      %v2419 = vld [vmem:[%s2189 + $0x3c] sm:$0xf]
      %v2420 = vpack.c.bf16 %v2413, %v2413
      %v2425 = vunpack.c.l.b16 %v2416
      %v2426 = vunpack.c.l.b16 %v2417
      %v2427 = vunpack.c.l.b16 %v2418
      %v2428 = vunpack.c.l.b16 %v2419
      %v2429 = vpack.c.b16 %v2426, %v2425
      %v2430 = vpack.c.b16 %v2428, %v2427
      %2431 = vrot.lane.b32.xlu0 %v2429, 64
      %v2432 = vpop.permute.xlu0 %2431
      %2433 = vrot.lane.b32.xlu0 %v2430, 64
      %v2434 = vpop.permute.xlu0 %2433
      %v2438 = vsel %vm558, %v2420, 0
      %2440 = vmatpush.bf16.msra.mxu0 0
      %2441 = vmatpush.bf16.msra.mxu0 0
      %2442 = vmatpush.bf16.msra.mxu0 0
      %2443 = vmatpush.bf16.msra.mxu0 0
      %2444 = vmatpush.bf16.msra.mxu0 0
      %2445 = vmatpush.bf16.msra.mxu0 0
      %2446 = vmatpush.bf16.msra.mxu0 %v2434
      %2447 = vmatpush.bf16.msra.mxu0 %v2432
      %2448 = vmatmul.bf16.gmra.mxu0 %v2438
      %v2449 = vpop.f32.mrf.mxu0
      %v2450 = vadd.f32 0.0, %v2449
      %v2451 = vpop.f32.mrf.mxu0
      %2452 = vdwg.mxu0
      %v2457 = vunpack.c.l.b16 %v2341
      %v2458 = vunpack.c.l.b16 %v2342
      %v2459 = vunpack.c.l.b16 %v2343
      %v2460 = vunpack.c.l.b16 %v2344
      %v2461 = vpack.c.b16 %v2458, %v2457
      %v2462 = vpack.c.b16 %v2460, %v2459
      %2463 = vrot.lane.b32.xlu0 %v2461, 64
      %v2464 = vpop.permute.xlu0 %2463
      %2465 = vrot.lane.b32.xlu0 %v2462, 64
      %v2466 = vpop.permute.xlu0 %2465
      %v2470 = vsel %vm558, %v2345, 0
      %2472 = vmatpush.bf16.msra.mxu0 0
      %2473 = vmatpush.bf16.msra.mxu0 0
      %2474 = vmatpush.bf16.msra.mxu0 0
      %2475 = vmatpush.bf16.msra.mxu0 0
      %2476 = vmatpush.bf16.msra.mxu0 0
      %2477 = vmatpush.bf16.msra.mxu0 0
      %2478 = vmatpush.bf16.msra.mxu0 %v2466
      %2479 = vmatpush.bf16.msra.mxu0 %v2464
      %2480 = vmatmul.bf16.gmra.mxu0 %v2470
      %v2481 = vpop.f32.mrf.mxu0
      %v2482 = vadd.f32 %v2450, %v2481
      %v2483 = vpop.f32.mrf.mxu0
      %2484 = vdwg.mxu0
      %v2485 = vld [vmem:[%s6 + $0x29] sm:$0x1]
      %v2487 = vperm.slane %v2485, 0
      %v2489 = vadd.f32 %v2482, %v2487
      %v2490 = vadd.f32 %v2155, %v2489
      %v2491 = vld [vmem:[%s6 + $0x1a] sm:$0x1]
      %v2492 = vld [vmem:[%s6 + $0x1b] sm:$0x1]
      %v2493 = vsel %vm432, %v2490, 0.0
      %2494 = vadd.xlane.f32.xlu0 %v2493
      %v2495 = vpop.xlane.xlu0 %2494
      %v2496 = vmul.f32 %v2495, %v442
      %v2497 = vsub.f32 %v2490, %v2496
      %v2498 = vmul.f32 %v2497, %v2497
      %v2499 = vsel %vm432, %v2498, 0.0
      %2500 = vadd.xlane.f32.xlu0 %v2499
      %v2501 = vpop.xlane.xlu0 %2500
      %v2502 = vmul.f32 %v2501, %v442
      %v2503 = vadd.f32 %v2502, 1e-05
      %v2504 = vrsqrt.pop %v2503
      %v2505 = vmul.f32 %v2504, %v2503
      %v2506 = vmul.f32 %v2505, %v2504
      %v2507 = vmul.f32 0.5, %v2506
      %v2508 = vsub.f32 1.5, %v2507
      %v2509 = vmul.f32 %v2504, %v2508
      %vm2510 = vweird.f32 %v2503
      %vm2511 = vweird.f32 %v2504
      %vm2512 = vmor %vm2510, %vm2511
      %v2513 = vsel %vm2512, %v2504, %v2509
      %v2514 = vmul.f32 %v2497, %v2513
      %v2516 = vperm.slane %v2491, 0
      %v2518 = vmul.f32 %v2514, %v2516
      %v2520 = vperm.slane %v2492, 0
      %v2522 = vadd.f32 %v2518, %v2520
      %v2523 = vld [vmem:[%s6 + $0x2a] sm:$0x3]
      %s2524 = scalar_lea.vmem %s1, 192
      %v2525 = vld [vmem:[%s2524] sm:$0xf]
      %v2526 = vld [vmem:[%s2524 + $0x8] sm:$0xf]
      %v2527 = vld [vmem:[%s2524 + $0x10] sm:$0xf]
      %v2528 = vld [vmem:[%s2524 + $0x18] sm:$0xf]
      %v2529 = vld [vmem:[%s2524 + $0x20] sm:$0xf]
      %v2530 = vld [vmem:[%s2524 + $0x28] sm:$0xf]
      %v2531 = vld [vmem:[%s2524 + $0x30] sm:$0xf]
      %v2532 = vld [vmem:[%s2524 + $0x38] sm:$0xf]
      %v2533 = vpack.c.bf16 %v2522, %v2522
      %v2535 = vperm.slane %v2523, 0
      %v2545 = vunpack.c.l.b16 %v2525
      %v2546 = vunpack.c.l.b16 %v2526
      %v2547 = vunpack.c.l.b16 %v2527
      %v2548 = vunpack.c.l.b16 %v2528
      %v2549 = vunpack.c.l.b16 %v2529
      %v2550 = vunpack.c.l.b16 %v2530
      %v2551 = vunpack.c.l.b16 %v2531
      %v2552 = vunpack.c.l.b16 %v2532
      %v2553 = vpack.c.b16 %v2546, %v2545
      %v2554 = vpack.c.b16 %v2548, %v2547
      %v2555 = vpack.c.b16 %v2550, %v2549
      %v2556 = vpack.c.b16 %v2552, %v2551
      %v2562 = vsel %vm432, %v2533, 0
      %2564 = vmatpush.bf16.msra.mxu0 0
      %2565 = vmatpush.bf16.msra.mxu0 0
      %2566 = vmatpush.bf16.msra.mxu0 0
      %2567 = vmatpush.bf16.msra.mxu0 0
      %2568 = vmatpush.bf16.msra.mxu0 %v2556
      %2569 = vmatpush.bf16.msra.mxu0 %v2555
      %2570 = vmatpush.bf16.msra.mxu0 %v2554
      %2571 = vmatpush.bf16.msra.mxu0 %v2553
      %2572 = vmatmul.bf16.gmra.mxu0 %v2562
      %v2573 = vpop.f32.mrf.mxu0
      %v2574 = vadd.f32 %v2535, %v2573
      %v2575 = vpop.f32.mrf.mxu0
      %2576 = vdwg.mxu0
      %v2577 = vld [vmem:[%s2524] sm:$0xff]
      %v2578 = vld [vmem:[%s2524 + $0x8] sm:$0xff]
      %v2579 = vld [vmem:[%s2524 + $0x10] sm:$0xff]
      %v2580 = vld [vmem:[%s2524 + $0x18] sm:$0xff]
      %v2581 = vld [vmem:[%s2524 + $0x20] sm:$0xff]
      %v2582 = vld [vmem:[%s2524 + $0x28] sm:$0xff]
      %v2583 = vld [vmem:[%s2524 + $0x30] sm:$0xff]
      %v2584 = vld [vmem:[%s2524 + $0x38] sm:$0xff]
      %v2585 = vperm.slane %v2523, 1
      %v2594 = vunpack.c.l.b16 %v2577
      %v2595 = vunpack.c.h.b16 %v2577
      %v2596 = vunpack.c.l.b16 %v2578
      %v2597 = vunpack.c.h.b16 %v2578
      %v2598 = vunpack.c.l.b16 %v2579
      %v2599 = vunpack.c.h.b16 %v2579
      %v2600 = vunpack.c.l.b16 %v2580
      %v2601 = vunpack.c.h.b16 %v2580
      %v2602 = vunpack.c.l.b16 %v2581
      %v2603 = vunpack.c.h.b16 %v2581
      %v2604 = vunpack.c.l.b16 %v2582
      %v2605 = vunpack.c.h.b16 %v2582
      %v2606 = vunpack.c.l.b16 %v2583
      %v2607 = vunpack.c.h.b16 %v2583
      %v2608 = vunpack.c.l.b16 %v2584
      %v2609 = vunpack.c.h.b16 %v2584
      %v2610 = vpack.c.b16 %v2596, %v2594
      %v2611 = vpack.c.b16 %v2597, %v2595
      %v2612 = vpack.c.b16 %v2600, %v2598
      %v2613 = vpack.c.b16 %v2601, %v2599
      %v2614 = vpack.c.b16 %v2604, %v2602
      %v2615 = vpack.c.b16 %v2605, %v2603
      %v2616 = vpack.c.b16 %v2608, %v2606
      %v2617 = vpack.c.b16 %v2609, %v2607
      %2618 = vrot.lane.b32.xlu0 %v2610, 64
      %v2619 = vpop.permute.xlu0 %2618
      %2620 = vrot.lane.b32.xlu0 %v2611, 64
      %v2621 = vpop.permute.xlu0 %2620
      %2622 = vrot.lane.b32.xlu0 %v2612, 64
      %v2623 = vpop.permute.xlu0 %2622
      %2624 = vrot.lane.b32.xlu0 %v2613, 64
      %v2625 = vpop.permute.xlu0 %2624
      %2626 = vrot.lane.b32.xlu0 %v2614, 64
      %v2627 = vpop.permute.xlu0 %2626
      %2628 = vrot.lane.b32.xlu0 %v2615, 64
      %v2629 = vpop.permute.xlu0 %2628
      %2630 = vrot.lane.b32.xlu0 %v2616, 64
      %v2631 = vpop.permute.xlu0 %2630
      %2632 = vrot.lane.b32.xlu0 %v2617, 64
      %v2633 = vpop.permute.xlu0 %2632
      %v2634 = vsel %vm919, %v2619, %v2621
      %v2635 = vsel %vm919, %v2623, %v2625
      %v2636 = vsel %vm919, %v2627, %v2629
      %v2637 = vsel %vm919, %v2631, %v2633
      %2642 = vrot.lane.b32.xlu0 %v2535, 64
      %v2643 = vpop.permute.xlu0 %2642
      %2644 = vrot.lane.b32.xlu0 %v2585, 64
      %v2645 = vpop.permute.xlu0 %2644
      %v2646 = vsel %vm432, %v2643, %v2645
      %2648 = vmatpush.bf16.msra.mxu0 0
      %2649 = vmatpush.bf16.msra.mxu0 0
      %2650 = vmatpush.bf16.msra.mxu0 0
      %2651 = vmatpush.bf16.msra.mxu0 0
      %2652 = vmatpush.bf16.msra.mxu0 %v2637
      %2653 = vmatpush.bf16.msra.mxu0 %v2636
      %2654 = vmatpush.bf16.msra.mxu0 %v2635
      %2655 = vmatpush.bf16.msra.mxu0 %v2634
      %2656 = vmatmul.bf16.gmra.mxu0 %v935
      %v2657 = vpop.f32.mrf.mxu0
      %v2658 = vadd.f32 %v2646, %v2657
      %v2659 = vpop.f32.mrf.mxu0
      %2660 = vdwg.mxu0
      %v2661 = vpack.c.bf16 %v2574, %v2574
      %v2662 = vpack.c.bf16 %v2658, %v2658
      %v2664 = vsel %vm558, %v2661, 0
      %v2667 = vsel %vm558, %v2662, 0
      %2669 = vmatpush.bf16.xpose.msra.mxu0 0
      %2670 = vmatpush.bf16.xpose.msra.mxu0 0
      %2671 = vmatpush.bf16.xpose.msra.mxu0 0
      %2672 = vmatpush.bf16.xpose.msra.mxu0 0
      %2673 = vmatpush.bf16.xpose.msra.mxu0 0
      %2674 = vmatpush.bf16.xpose.msra.mxu0 0
      %2675 = vmatpush.bf16.xpose.msra.mxu0 0
      %2676 = vmatpush.bf16.xpose.msra.mxu0 %v2667
      %2677 = vmatmul.bf16.gmra.mxu0 %v2664
      %v2678 = vpop.f32.mrf.mxu0
      %v2679 = vadd.f32 0.0, %v2678
      %v2680 = vpop.f32.mrf.mxu0
      %2681 = vdwg.mxu0
      %v2682 = vsel %vm578, %v2679, -inf
      %2683 = vmax.xlane.f32.xlu0 %v2682
      %v2684 = vpop.xlane.xlu0 %2683
      %v2685 = vsub.f32 %v2679, %v2684
      %v2686 = vmul.f32 %v2685, 1.442695
      %v2687 = vpow.pop %v2686
      %v2688 = vsel %vm578, %v2687, 0.0
      %2689 = vadd.xlane.f32.xlu0 %v2688
      %v2690 = vpop.xlane.xlu0 %2689
      %v2691 = vrcp.pop %v2690
      %v2692 = vmul.f32 %v2690, %v2691
      %v2693 = vsub.f32 1.0, %v2692
      %v2694 = vmul.f32 %v2691, %v2693
      %v2695 = vadd.f32 %v2691, %v2694
      %vm2696 = vweird.f32 %v2690
      %vm2697 = vweird.f32 %v2691
      %vm2698 = vmor %vm2696, %vm2697
      %v2699 = vsel %vm2698, %v2691, %v2695
      %v2700 = vand.u32 2147483647, %v2690
      %vm2701 = vcmp.eq.f32.partialorder %v2700, 8.507059e+37
      %v2702 = vand.u32 %v2690, 2147483648
      %v2703 = vor.u32 1.1754944e-38, %v2702
      %v2704 = vsel %vm2701, %v2703, %v2699
      %v2705 = vmul.f32 %v2687, %v2704
      %v2706 = vpack.c.bf16 %v2705, %v2705
      %2708 = vrot.lane.b32.xlu0 %v2662, 64
      %v2709 = vpop.permute.xlu0 %2708
      %v2711 = vsel %vm578, %v2706, 0
      %v2714 = vsel %vm608, %v2709, 0
      %2716 = vmatpush.bf16.msra.mxu0 0
      %2717 = vmatpush.bf16.msra.mxu0 0
      %2718 = vmatpush.bf16.msra.mxu0 0
      %2719 = vmatpush.bf16.msra.mxu0 0
      %2720 = vmatpush.bf16.msra.mxu0 0
      %2721 = vmatpush.bf16.msra.mxu0 0
      %2722 = vmatpush.bf16.msra.mxu0 0
      %2723 = vmatpush.bf16.msra.mxu0 %v2714
      %2724 = vmatmul.bf16.gmra.mxu0 %v2711
      %v2725 = vpop.f32.mrf.mxu0
      %v2726 = vadd.f32 0.0, %v2725
      %v2727 = vpop.f32.mrf.mxu0
      %2728 = vdwg.mxu0
      %v2729 = vld [vmem:[%s2524 + $0x4] sm:$0xf]
      %v2730 = vld [vmem:[%s2524 + $0xc] sm:$0xf]
      %v2731 = vld [vmem:[%s2524 + $0x14] sm:$0xf]
      %v2732 = vld [vmem:[%s2524 + $0x1c] sm:$0xf]
      %v2733 = vpack.c.bf16 %v2726, %v2726
      %2735 = vrot.lane.b32.xlu0 %v2661, 96
      %v2736 = vpop.permute.xlu0 %2735
      %2737 = vrot.lane.b32.xlu0 %v2662, 96
      %v2738 = vpop.permute.xlu0 %2737
      %v2740 = vsel %vm558, %v2736, 0
      %v2743 = vsel %vm558, %v2738, 0
      %2745 = vmatpush.bf16.xpose.msra.mxu0 0
      %2746 = vmatpush.bf16.xpose.msra.mxu0 0
      %2747 = vmatpush.bf16.xpose.msra.mxu0 0
      %2748 = vmatpush.bf16.xpose.msra.mxu0 0
      %2749 = vmatpush.bf16.xpose.msra.mxu0 0
      %2750 = vmatpush.bf16.xpose.msra.mxu0 0
      %2751 = vmatpush.bf16.xpose.msra.mxu0 0
      %2752 = vmatpush.bf16.xpose.msra.mxu0 %v2743
      %2753 = vmatmul.bf16.gmra.mxu0 %v2740
      %v2754 = vpop.f32.mrf.mxu0
      %v2755 = vadd.f32 0.0, %v2754
      %v2756 = vpop.f32.mrf.mxu0
      %2757 = vdwg.mxu0
      %v2758 = vsel %vm578, %v2755, -inf
      %2759 = vmax.xlane.f32.xlu0 %v2758
      %v2760 = vpop.xlane.xlu0 %2759
      %v2761 = vsub.f32 %v2755, %v2760
      %v2762 = vmul.f32 %v2761, 1.442695
      %v2763 = vpow.pop %v2762
      %v2764 = vsel %vm578, %v2763, 0.0
      %2765 = vadd.xlane.f32.xlu0 %v2764
      %v2766 = vpop.xlane.xlu0 %2765
      %v2767 = vrcp.pop %v2766
      %v2768 = vmul.f32 %v2766, %v2767
      %v2769 = vsub.f32 1.0, %v2768
      %v2770 = vmul.f32 %v2767, %v2769
      %v2771 = vadd.f32 %v2767, %v2770
      %vm2772 = vweird.f32 %v2766
      %vm2773 = vweird.f32 %v2767
      %vm2774 = vmor %vm2772, %vm2773
      %v2775 = vsel %vm2774, %v2767, %v2771
      %v2776 = vand.u32 2147483647, %v2766
      %vm2777 = vcmp.eq.f32.partialorder %v2776, 8.507059e+37
      %v2778 = vand.u32 %v2766, 2147483648
      %v2779 = vor.u32 1.1754944e-38, %v2778
      %v2780 = vsel %vm2777, %v2779, %v2775
      %v2781 = vmul.f32 %v2763, %v2780
      %v2782 = vpack.c.bf16 %v2781, %v2781
      %2783 = vrot.lane.b32.xlu0 %v2662, 32
      %v2784 = vpop.permute.xlu0 %2783
      %v2786 = vsel %vm578, %v2782, 0
      %v2789 = vsel %vm608, %v2784, 0
      %2791 = vmatpush.bf16.msra.mxu0 0
      %2792 = vmatpush.bf16.msra.mxu0 0
      %2793 = vmatpush.bf16.msra.mxu0 0
      %2794 = vmatpush.bf16.msra.mxu0 0
      %2795 = vmatpush.bf16.msra.mxu0 0
      %2796 = vmatpush.bf16.msra.mxu0 0
      %2797 = vmatpush.bf16.msra.mxu0 0
      %2798 = vmatpush.bf16.msra.mxu0 %v2789
      %2799 = vmatmul.bf16.gmra.mxu0 %v2786
      %v2800 = vpop.f32.mrf.mxu0
      %v2801 = vadd.f32 0.0, %v2800
      %v2802 = vpop.f32.mrf.mxu0
      %2803 = vdwg.mxu0
      %v2804 = vld [vmem:[%s2524 + $0x24] sm:$0xf]
      %v2805 = vld [vmem:[%s2524 + $0x2c] sm:$0xf]
      %v2806 = vld [vmem:[%s2524 + $0x34] sm:$0xf]
      %v2807 = vld [vmem:[%s2524 + $0x3c] sm:$0xf]
      %v2808 = vpack.c.bf16 %v2801, %v2801
      %v2813 = vunpack.c.l.b16 %v2804
      %v2814 = vunpack.c.l.b16 %v2805
      %v2815 = vunpack.c.l.b16 %v2806
      %v2816 = vunpack.c.l.b16 %v2807
      %v2817 = vpack.c.b16 %v2814, %v2813
      %v2818 = vpack.c.b16 %v2816, %v2815
      %2819 = vrot.lane.b32.xlu0 %v2817, 64
      %v2820 = vpop.permute.xlu0 %2819
      %2821 = vrot.lane.b32.xlu0 %v2818, 64
      %v2822 = vpop.permute.xlu0 %2821
      %v2826 = vsel %vm558, %v2808, 0
      %2828 = vmatpush.bf16.msra.mxu0 0
      %2829 = vmatpush.bf16.msra.mxu0 0
      %2830 = vmatpush.bf16.msra.mxu0 0
      %2831 = vmatpush.bf16.msra.mxu0 0
      %2832 = vmatpush.bf16.msra.mxu0 0
      %2833 = vmatpush.bf16.msra.mxu0 0
      %2834 = vmatpush.bf16.msra.mxu0 %v2822
      %2835 = vmatpush.bf16.msra.mxu0 %v2820
      %2836 = vmatmul.bf16.gmra.mxu0 %v2826
      %v2837 = vpop.f32.mrf.mxu0
      %v2838 = vadd.f32 0.0, %v2837
      %v2839 = vpop.f32.mrf.mxu0
      %2840 = vdwg.mxu0
      %v2845 = vunpack.c.l.b16 %v2729
      %v2846 = vunpack.c.l.b16 %v2730
      %v2847 = vunpack.c.l.b16 %v2731
      %v2848 = vunpack.c.l.b16 %v2732
      %v2849 = vpack.c.b16 %v2846, %v2845
      %v2850 = vpack.c.b16 %v2848, %v2847
      %2851 = vrot.lane.b32.xlu0 %v2849, 64
      %v2852 = vpop.permute.xlu0 %2851
      %2853 = vrot.lane.b32.xlu0 %v2850, 64
      %v2854 = vpop.permute.xlu0 %2853
      %v2858 = vsel %vm558, %v2733, 0
      %2860 = vmatpush.bf16.msra.mxu0 0
      %2861 = vmatpush.bf16.msra.mxu0 0
      %2862 = vmatpush.bf16.msra.mxu0 0
      %2863 = vmatpush.bf16.msra.mxu0 0
      %2864 = vmatpush.bf16.msra.mxu0 0
      %2865 = vmatpush.bf16.msra.mxu0 0
      %2866 = vmatpush.bf16.msra.mxu0 %v2854
      %2867 = vmatpush.bf16.msra.mxu0 %v2852
      %2868 = vmatmul.bf16.gmra.mxu0 %v2858
      %v2869 = vpop.f32.mrf.mxu0
      %v2870 = vadd.f32 %v2838, %v2869
      %v2871 = vpop.f32.mrf.mxu0
      %2872 = vdwg.mxu0
      %v2873 = vld [vmem:[%s6 + $0x2c] sm:$0x1]
      %v2875 = vperm.slane %v2873, 0
      %v2877 = vadd.f32 %v2870, %v2875
      %v2878 = vadd.f32 %v2490, %v2877
      %v2879 = vld [vmem:[%s6 + $0x1c] sm:$0x1]
      %v2880 = vld [vmem:[%s6 + $0x1d] sm:$0x1]
      %v2881 = vsel %vm432, %v2878, 0.0
      %2882 = vadd.xlane.f32.xlu0 %v2881
      %v2883 = vpop.xlane.xlu0 %2882
      %v2884 = vmul.f32 %v2883, %v442
      %v2885 = vsub.f32 %v2878, %v2884
      %v2886 = vmul.f32 %v2885, %v2885
      %v2887 = vsel %vm432, %v2886, 0.0
      %2888 = vadd.xlane.f32.xlu0 %v2887
      %v2889 = vpop.xlane.xlu0 %2888
      %v2890 = vmul.f32 %v2889, %v442
      %v2891 = vadd.f32 %v2890, 1e-05
      %v2892 = vrsqrt.pop %v2891
      %v2893 = vmul.f32 %v2892, %v2891
      %v2894 = vmul.f32 %v2893, %v2892
      %v2895 = vmul.f32 0.5, %v2894
      %v2896 = vsub.f32 1.5, %v2895
      %v2897 = vmul.f32 %v2892, %v2896
      %vm2898 = vweird.f32 %v2891
      %vm2899 = vweird.f32 %v2892
      %vm2900 = vmor %vm2898, %vm2899
      %v2901 = vsel %vm2900, %v2892, %v2897
      %v2902 = vmul.f32 %v2885, %v2901
      %v2904 = vperm.slane %v2879, 0
      %v2906 = vmul.f32 %v2902, %v2904
      %v2908 = vperm.slane %v2880, 0
      %v2910 = vadd.f32 %v2906, %v2908
      %s2911 = scalar_lea.vmem %s2, 256
      %v2912 = vld [vmem:[%s2911] sm:$0xff]
      %v2913 = vld [vmem:[%s2911 + $0x8] sm:$0xff]
      %v2914 = vld [vmem:[%s2911 + $0x10] sm:$0xff]
      %v2915 = vld [vmem:[%s2911 + $0x18] sm:$0xff]
      %v2916 = vld [vmem:[%s2911 + $0x20] sm:$0xff]
      %v2917 = vld [vmem:[%s2911 + $0x28] sm:$0xff]
      %v2918 = vld [vmem:[%s2911 + $0x30] sm:$0xff]
      %v2919 = vld [vmem:[%s2911 + $0x38] sm:$0xff]
      %v2920 = vld [vmem:[%s2911 + $0x40] sm:$0xff]
      %v2921 = vld [vmem:[%s2911 + $0x48] sm:$0xff]
      %v2922 = vld [vmem:[%s2911 + $0x50] sm:$0xff]
      %v2923 = vld [vmem:[%s2911 + $0x58] sm:$0xff]
      %v2924 = vld [vmem:[%s2911 + $0x60] sm:$0xff]
      %v2925 = vld [vmem:[%s2911 + $0x68] sm:$0xff]
      %v2926 = vld [vmem:[%s2911 + $0x70] sm:$0xff]
      %v2927 = vld [vmem:[%s2911 + $0x78] sm:$0xff]
      %v2928 = vld [vmem:[%s2911 + $0x80] sm:$0xff]
      %v2929 = vld [vmem:[%s2911 + $0x88] sm:$0xff]
      %v2930 = vld [vmem:[%s2911 + $0x90] sm:$0xff]
      %v2931 = vld [vmem:[%s2911 + $0x98] sm:$0xff]
      %v2932 = vld [vmem:[%s2911 + $0xa0] sm:$0xff]
      %v2933 = vld [vmem:[%s2911 + $0xa8] sm:$0xff]
      %v2934 = vld [vmem:[%s2911 + $0xb0] sm:$0xff]
      %v2935 = vld [vmem:[%s2911 + $0xb8] sm:$0xff]
      %v2936 = vld [vmem:[%s2911 + $0xc0] sm:$0xff]
      %v2937 = vld [vmem:[%s2911 + $0xc8] sm:$0xff]
      %v2938 = vld [vmem:[%s2911 + $0xd0] sm:$0xff]
      %v2939 = vld [vmem:[%s2911 + $0xd8] sm:$0xff]
      %v2940 = vld [vmem:[%s2911 + $0xe0] sm:$0xff]
      %v2941 = vld [vmem:[%s2911 + $0xe8] sm:$0xff]
      %v2942 = vld [vmem:[%s2911 + $0xf0] sm:$0xff]
      %v2943 = vld [vmem:[%s2911 + $0xf8] sm:$0xff]
      %v2944 = vpack.c.bf16 %v2910, %v2910
      %v2945 = vld [vmem:[%s6 + $0x1e] sm:$0xff]
      %v2947 = vperm.slane %v2945, 0
      %v2948 = vperm.slane %v2945, 1
      %v2949 = vperm.slane %v2945, 2
      %v2950 = vperm.slane %v2945, 3
      %v2951 = vperm.slane %v2945, 4
      %v2952 = vperm.slane %v2945, 5
      %v2953 = vperm.slane %v2945, 6
      %v2954 = vperm.slane %v2945, 7
      %v2995 = vunpack.c.l.b16 %v2912
      %v2996 = vunpack.c.h.b16 %v2912
      %v2997 = vunpack.c.l.b16 %v2913
      %v2998 = vunpack.c.h.b16 %v2913
      %v2999 = vunpack.c.l.b16 %v2914
      %v3000 = vunpack.c.h.b16 %v2914
      %v3001 = vunpack.c.l.b16 %v2915
      %v3002 = vunpack.c.h.b16 %v2915
      %v3003 = vunpack.c.l.b16 %v2916
      %v3004 = vunpack.c.h.b16 %v2916
      %v3005 = vunpack.c.l.b16 %v2917
      %v3006 = vunpack.c.h.b16 %v2917
      %v3007 = vunpack.c.l.b16 %v2918
      %v3008 = vunpack.c.h.b16 %v2918
      %v3009 = vunpack.c.l.b16 %v2919
      %v3010 = vunpack.c.h.b16 %v2919
      %v3011 = vunpack.c.l.b16 %v2920
      %v3012 = vunpack.c.h.b16 %v2920
      %v3013 = vunpack.c.l.b16 %v2921
      %v3014 = vunpack.c.h.b16 %v2921
      %v3015 = vunpack.c.l.b16 %v2922
      %v3016 = vunpack.c.h.b16 %v2922
      %v3017 = vunpack.c.l.b16 %v2923
      %v3018 = vunpack.c.h.b16 %v2923
      %v3019 = vunpack.c.l.b16 %v2924
      %v3020 = vunpack.c.h.b16 %v2924
      %v3021 = vunpack.c.l.b16 %v2925
      %v3022 = vunpack.c.h.b16 %v2925
      %v3023 = vunpack.c.l.b16 %v2926
      %v3024 = vunpack.c.h.b16 %v2926
      %v3025 = vunpack.c.l.b16 %v2927
      %v3026 = vunpack.c.h.b16 %v2927
      %v3027 = vunpack.c.l.b16 %v2928
      %v3028 = vunpack.c.h.b16 %v2928
      %v3029 = vunpack.c.l.b16 %v2929
      %v3030 = vunpack.c.h.b16 %v2929
      %v3031 = vunpack.c.l.b16 %v2930
      %v3032 = vunpack.c.h.b16 %v2930
      %v3033 = vunpack.c.l.b16 %v2931
      %v3034 = vunpack.c.h.b16 %v2931
      %v3035 = vunpack.c.l.b16 %v2932
      %v3036 = vunpack.c.h.b16 %v2932
      %v3037 = vunpack.c.l.b16 %v2933
      %v3038 = vunpack.c.h.b16 %v2933
      %v3039 = vunpack.c.l.b16 %v2934
      %v3040 = vunpack.c.h.b16 %v2934
      %v3041 = vunpack.c.l.b16 %v2935
      %v3042 = vunpack.c.h.b16 %v2935
      %v3043 = vunpack.c.l.b16 %v2936
      %v3044 = vunpack.c.h.b16 %v2936
      %v3045 = vunpack.c.l.b16 %v2937
      %v3046 = vunpack.c.h.b16 %v2937
      %v3047 = vunpack.c.l.b16 %v2938
      %v3048 = vunpack.c.h.b16 %v2938
      %v3049 = vunpack.c.l.b16 %v2939
      %v3050 = vunpack.c.h.b16 %v2939
      %v3051 = vunpack.c.l.b16 %v2940
      %v3052 = vunpack.c.h.b16 %v2940
      %v3053 = vunpack.c.l.b16 %v2941
      %v3054 = vunpack.c.h.b16 %v2941
      %v3055 = vunpack.c.l.b16 %v2942
      %v3056 = vunpack.c.h.b16 %v2942
      %v3057 = vunpack.c.l.b16 %v2943
      %v3058 = vunpack.c.h.b16 %v2943
      %v3059 = vpack.c.b16 %v3003, %v2995
      %v3060 = vpack.c.b16 %v3004, %v2996
      %v3061 = vpack.c.b16 %v3005, %v2997
      %v3062 = vpack.c.b16 %v3006, %v2998
      %v3063 = vpack.c.b16 %v3007, %v2999
      %v3064 = vpack.c.b16 %v3008, %v3000
      %v3065 = vpack.c.b16 %v3009, %v3001
      %v3066 = vpack.c.b16 %v3010, %v3002
      %v3067 = vpack.c.b16 %v3019, %v3011
      %v3068 = vpack.c.b16 %v3020, %v3012
      %v3069 = vpack.c.b16 %v3021, %v3013
      %v3070 = vpack.c.b16 %v3022, %v3014
      %v3071 = vpack.c.b16 %v3023, %v3015
      %v3072 = vpack.c.b16 %v3024, %v3016
      %v3073 = vpack.c.b16 %v3025, %v3017
      %v3074 = vpack.c.b16 %v3026, %v3018
      %v3075 = vpack.c.b16 %v3035, %v3027
      %v3076 = vpack.c.b16 %v3036, %v3028
      %v3077 = vpack.c.b16 %v3037, %v3029
      %v3078 = vpack.c.b16 %v3038, %v3030
      %v3079 = vpack.c.b16 %v3039, %v3031
      %v3080 = vpack.c.b16 %v3040, %v3032
      %v3081 = vpack.c.b16 %v3041, %v3033
      %v3082 = vpack.c.b16 %v3042, %v3034
      %v3083 = vpack.c.b16 %v3051, %v3043
      %v3084 = vpack.c.b16 %v3052, %v3044
      %v3085 = vpack.c.b16 %v3053, %v3045
      %v3086 = vpack.c.b16 %v3054, %v3046
      %v3087 = vpack.c.b16 %v3055, %v3047
      %v3088 = vpack.c.b16 %v3056, %v3048
      %v3089 = vpack.c.b16 %v3057, %v3049
      %v3090 = vpack.c.b16 %v3058, %v3050
      %v3124 = vsel %vm432, %v2944, 0
      %3126 = vmatpush.bf16.msra.mxu0 0
      %3127 = vmatpush.bf16.msra.mxu0 0
      %3128 = vmatpush.bf16.msra.mxu0 0
      %3129 = vmatpush.bf16.msra.mxu0 0
      %3130 = vmatpush.bf16.msra.mxu0 %v3083
      %3131 = vmatpush.bf16.msra.mxu0 %v3075
      %3132 = vmatpush.bf16.msra.mxu0 %v3067
      %3133 = vmatpush.bf16.msra.mxu0 %v3059
      %3134 = vmatmul.bf16.gmra.mxu0 %v3124
      %v3135 = vpop.f32.mrf.mxu0
      %v3136 = vadd.f32 %v2947, %v3135
      %v3137 = vpop.f32.mrf.mxu0
      %3138 = vdwg.mxu0
      %3139 = vmatpush.bf16.msra.mxu0 0
      %3140 = vmatpush.bf16.msra.mxu0 0
      %3141 = vmatpush.bf16.msra.mxu0 0
      %3142 = vmatpush.bf16.msra.mxu0 0
      %3143 = vmatpush.bf16.msra.mxu0 %v3084
      %3144 = vmatpush.bf16.msra.mxu0 %v3076
      %3145 = vmatpush.bf16.msra.mxu0 %v3068
      %3146 = vmatpush.bf16.msra.mxu0 %v3060
      %3147 = vmatmul.bf16.gmra.mxu0 %v3124
      %v3148 = vpop.f32.mrf.mxu0
      %v3149 = vadd.f32 %v2948, %v3148
      %v3150 = vpop.f32.mrf.mxu0
      %3151 = vdwg.mxu0
      %3152 = vmatpush.bf16.msra.mxu0 0
      %3153 = vmatpush.bf16.msra.mxu0 0
      %3154 = vmatpush.bf16.msra.mxu0 0
      %3155 = vmatpush.bf16.msra.mxu0 0
      %3156 = vmatpush.bf16.msra.mxu0 %v3085
      %3157 = vmatpush.bf16.msra.mxu0 %v3077
      %3158 = vmatpush.bf16.msra.mxu0 %v3069
      %3159 = vmatpush.bf16.msra.mxu0 %v3061
      %3160 = vmatmul.bf16.gmra.mxu0 %v3124
      %v3161 = vpop.f32.mrf.mxu0
      %v3162 = vadd.f32 %v2949, %v3161
      %v3163 = vpop.f32.mrf.mxu0
      %3164 = vdwg.mxu0
      %3165 = vmatpush.bf16.msra.mxu0 0
      %3166 = vmatpush.bf16.msra.mxu0 0
      %3167 = vmatpush.bf16.msra.mxu0 0
      %3168 = vmatpush.bf16.msra.mxu0 0
      %3169 = vmatpush.bf16.msra.mxu0 %v3086
      %3170 = vmatpush.bf16.msra.mxu0 %v3078
      %3171 = vmatpush.bf16.msra.mxu0 %v3070
      %3172 = vmatpush.bf16.msra.mxu0 %v3062
      %3173 = vmatmul.bf16.gmra.mxu0 %v3124
      %v3174 = vpop.f32.mrf.mxu0
      %v3175 = vadd.f32 %v2950, %v3174
      %v3176 = vpop.f32.mrf.mxu0
      %3177 = vdwg.mxu0
      %3178 = vmatpush.bf16.msra.mxu0 0
      %3179 = vmatpush.bf16.msra.mxu0 0
      %3180 = vmatpush.bf16.msra.mxu0 0
      %3181 = vmatpush.bf16.msra.mxu0 0
      %3182 = vmatpush.bf16.msra.mxu0 %v3087
      %3183 = vmatpush.bf16.msra.mxu0 %v3079
      %3184 = vmatpush.bf16.msra.mxu0 %v3071
      %3185 = vmatpush.bf16.msra.mxu0 %v3063
      %3186 = vmatmul.bf16.gmra.mxu0 %v3124
      %v3187 = vpop.f32.mrf.mxu0
      %v3188 = vadd.f32 %v2951, %v3187
      %v3189 = vpop.f32.mrf.mxu0
      %3190 = vdwg.mxu0
      %3191 = vmatpush.bf16.msra.mxu0 0
      %3192 = vmatpush.bf16.msra.mxu0 0
      %3193 = vmatpush.bf16.msra.mxu0 0
      %3194 = vmatpush.bf16.msra.mxu0 0
      %3195 = vmatpush.bf16.msra.mxu0 %v3088
      %3196 = vmatpush.bf16.msra.mxu0 %v3080
      %3197 = vmatpush.bf16.msra.mxu0 %v3072
      %3198 = vmatpush.bf16.msra.mxu0 %v3064
      %3199 = vmatmul.bf16.gmra.mxu0 %v3124
      %v3200 = vpop.f32.mrf.mxu0
      %v3201 = vadd.f32 %v2952, %v3200
      %v3202 = vpop.f32.mrf.mxu0
      %3203 = vdwg.mxu0
      %3204 = vmatpush.bf16.msra.mxu0 0
      %3205 = vmatpush.bf16.msra.mxu0 0
      %3206 = vmatpush.bf16.msra.mxu0 0
      %3207 = vmatpush.bf16.msra.mxu0 0
      %3208 = vmatpush.bf16.msra.mxu0 %v3089
      %3209 = vmatpush.bf16.msra.mxu0 %v3081
      %3210 = vmatpush.bf16.msra.mxu0 %v3073
      %3211 = vmatpush.bf16.msra.mxu0 %v3065
      %3212 = vmatmul.bf16.gmra.mxu0 %v3124
      %v3213 = vpop.f32.mrf.mxu0
      %v3214 = vadd.f32 %v2953, %v3213
      %v3215 = vpop.f32.mrf.mxu0
      %3216 = vdwg.mxu0
      %3217 = vmatpush.bf16.msra.mxu0 0
      %3218 = vmatpush.bf16.msra.mxu0 0
      %3219 = vmatpush.bf16.msra.mxu0 0
      %3220 = vmatpush.bf16.msra.mxu0 0
      %3221 = vmatpush.bf16.msra.mxu0 %v3090
      %3222 = vmatpush.bf16.msra.mxu0 %v3082
      %3223 = vmatpush.bf16.msra.mxu0 %v3074
      %3224 = vmatpush.bf16.msra.mxu0 %v3066
      %3225 = vmatmul.bf16.gmra.mxu0 %v3124
      %v3226 = vpop.f32.mrf.mxu0
      %v3227 = vadd.f32 %v2954, %v3226
      %v3228 = vpop.f32.mrf.mxu0
      %3229 = vdwg.mxu0
      %v3230 = vmax.f32 %v3136, 0.0
      %v3231 = vmax.f32 %v3149, 0.0
      %v3232 = vmax.f32 %v3162, 0.0
      %v3233 = vmax.f32 %v3175, 0.0
      %v3234 = vmax.f32 %v3188, 0.0
      %v3235 = vmax.f32 %v3201, 0.0
      %v3236 = vmax.f32 %v3214, 0.0
      %v3237 = vmax.f32 %v3227, 0.0
      %s3238 = scalar_lea.vmem %s3, 512
      %v3239 = vld [vmem:[%s3238] sm:$0xf]
      %v3240 = vld [vmem:[%s3238 + $0x4] sm:$0xf]
      %v3241 = vld [vmem:[%s3238 + $0x8] sm:$0xf]
      %v3242 = vld [vmem:[%s3238 + $0xc] sm:$0xf]
      %v3243 = vld [vmem:[%s3238 + $0x10] sm:$0xf]
      %v3244 = vld [vmem:[%s3238 + $0x14] sm:$0xf]
      %v3245 = vld [vmem:[%s3238 + $0x18] sm:$0xf]
      %v3246 = vld [vmem:[%s3238 + $0x1c] sm:$0xf]
      %v3247 = vld [vmem:[%s3238 + $0x20] sm:$0xf]
      %v3248 = vld [vmem:[%s3238 + $0x24] sm:$0xf]
      %v3249 = vld [vmem:[%s3238 + $0x28] sm:$0xf]
      %v3250 = vld [vmem:[%s3238 + $0x2c] sm:$0xf]
      %v3251 = vld [vmem:[%s3238 + $0x30] sm:$0xf]
      %v3252 = vld [vmem:[%s3238 + $0x34] sm:$0xf]
      %v3253 = vld [vmem:[%s3238 + $0x38] sm:$0xf]
      %v3254 = vld [vmem:[%s3238 + $0x3c] sm:$0xf]
      %v3255 = vld [vmem:[%s3238 + $0x40] sm:$0xf]
      %v3256 = vld [vmem:[%s3238 + $0x44] sm:$0xf]
      %v3257 = vld [vmem:[%s3238 + $0x48] sm:$0xf]
      %v3258 = vld [vmem:[%s3238 + $0x4c] sm:$0xf]
      %v3259 = vld [vmem:[%s3238 + $0x50] sm:$0xf]
      %v3260 = vld [vmem:[%s3238 + $0x54] sm:$0xf]
      %v3261 = vld [vmem:[%s3238 + $0x58] sm:$0xf]
      %v3262 = vld [vmem:[%s3238 + $0x5c] sm:$0xf]
      %v3263 = vld [vmem:[%s3238 + $0x60] sm:$0xf]
      %v3264 = vld [vmem:[%s3238 + $0x64] sm:$0xf]
      %v3265 = vld [vmem:[%s3238 + $0x68] sm:$0xf]
      %v3266 = vld [vmem:[%s3238 + $0x6c] sm:$0xf]
      %v3267 = vld [vmem:[%s3238 + $0x70] sm:$0xf]
      %v3268 = vld [vmem:[%s3238 + $0x74] sm:$0xf]
      %v3269 = vld [vmem:[%s3238 + $0x78] sm:$0xf]
      %v3270 = vld [vmem:[%s3238 + $0x7c] sm:$0xf]
      %v3271 = vld [vmem:[%s3238 + $0x80] sm:$0xf]
      %v3272 = vld [vmem:[%s3238 + $0x84] sm:$0xf]
      %v3273 = vld [vmem:[%s3238 + $0x88] sm:$0xf]
      %v3274 = vld [vmem:[%s3238 + $0x8c] sm:$0xf]
      %v3275 = vld [vmem:[%s3238 + $0x90] sm:$0xf]
      %v3276 = vld [vmem:[%s3238 + $0x94] sm:$0xf]
      %v3277 = vld [vmem:[%s3238 + $0x98] sm:$0xf]
      %v3278 = vld [vmem:[%s3238 + $0x9c] sm:$0xf]
      %v3279 = vld [vmem:[%s3238 + $0xa0] sm:$0xf]
      %v3280 = vld [vmem:[%s3238 + $0xa4] sm:$0xf]
      %v3281 = vld [vmem:[%s3238 + $0xa8] sm:$0xf]
      %v3282 = vld [vmem:[%s3238 + $0xac] sm:$0xf]
      %v3283 = vld [vmem:[%s3238 + $0xb0] sm:$0xf]
      %v3284 = vld [vmem:[%s3238 + $0xb4] sm:$0xf]
      %v3285 = vld [vmem:[%s3238 + $0xb8] sm:$0xf]
      %v3286 = vld [vmem:[%s3238 + $0xbc] sm:$0xf]
      %v3287 = vld [vmem:[%s3238 + $0xc0] sm:$0xf]
      %v3288 = vld [vmem:[%s3238 + $0xc4] sm:$0xf]
      %v3289 = vld [vmem:[%s3238 + $0xc8] sm:$0xf]
      %v3290 = vld [vmem:[%s3238 + $0xcc] sm:$0xf]
      %v3291 = vld [vmem:[%s3238 + $0xd0] sm:$0xf]
      %v3292 = vld [vmem:[%s3238 + $0xd4] sm:$0xf]
      %v3293 = vld [vmem:[%s3238 + $0xd8] sm:$0xf]
      %v3294 = vld [vmem:[%s3238 + $0xdc] sm:$0xf]
      %v3295 = vld [vmem:[%s3238 + $0xe0] sm:$0xf]
      %v3296 = vld [vmem:[%s3238 + $0xe4] sm:$0xf]
      %v3297 = vld [vmem:[%s3238 + $0xe8] sm:$0xf]
      %v3298 = vld [vmem:[%s3238 + $0xec] sm:$0xf]
      %v3299 = vld [vmem:[%s3238 + $0xf0] sm:$0xf]
      %v3300 = vld [vmem:[%s3238 + $0xf4] sm:$0xf]
      %v3301 = vld [vmem:[%s3238 + $0xf8] sm:$0xf]
      %v3302 = vld [vmem:[%s3238 + $0xfc] sm:$0xf]
      %v3303 = vld [vmem:[%s3238 + $0x100] sm:$0xf]
      %v3304 = vld [vmem:[%s3238 + $0x104] sm:$0xf]
      %v3305 = vld [vmem:[%s3238 + $0x108] sm:$0xf]
      %v3306 = vld [vmem:[%s3238 + $0x10c] sm:$0xf]
      %v3307 = vld [vmem:[%s3238 + $0x110] sm:$0xf]
      %v3308 = vld [vmem:[%s3238 + $0x114] sm:$0xf]
      %v3309 = vld [vmem:[%s3238 + $0x118] sm:$0xf]
      %v3310 = vld [vmem:[%s3238 + $0x11c] sm:$0xf]
      %v3311 = vld [vmem:[%s3238 + $0x120] sm:$0xf]
      %v3312 = vld [vmem:[%s3238 + $0x124] sm:$0xf]
      %v3313 = vld [vmem:[%s3238 + $0x128] sm:$0xf]
      %v3314 = vld [vmem:[%s3238 + $0x12c] sm:$0xf]
      %v3315 = vld [vmem:[%s3238 + $0x130] sm:$0xf]
      %v3316 = vld [vmem:[%s3238 + $0x134] sm:$0xf]
      %v3317 = vld [vmem:[%s3238 + $0x138] sm:$0xf]
      %v3318 = vld [vmem:[%s3238 + $0x13c] sm:$0xf]
      %v3319 = vld [vmem:[%s3238 + $0x140] sm:$0xf]
      %v3320 = vld [vmem:[%s3238 + $0x144] sm:$0xf]
      %v3321 = vld [vmem:[%s3238 + $0x148] sm:$0xf]
      %v3322 = vld [vmem:[%s3238 + $0x14c] sm:$0xf]
      %v3323 = vld [vmem:[%s3238 + $0x150] sm:$0xf]
      %v3324 = vld [vmem:[%s3238 + $0x154] sm:$0xf]
      %v3325 = vld [vmem:[%s3238 + $0x158] sm:$0xf]
      %v3326 = vld [vmem:[%s3238 + $0x15c] sm:$0xf]
      %v3327 = vld [vmem:[%s3238 + $0x160] sm:$0xf]
      %v3328 = vld [vmem:[%s3238 + $0x164] sm:$0xf]
      %v3329 = vld [vmem:[%s3238 + $0x168] sm:$0xf]
      %v3330 = vld [vmem:[%s3238 + $0x16c] sm:$0xf]
      %v3331 = vld [vmem:[%s3238 + $0x170] sm:$0xf]
      %v3332 = vld [vmem:[%s3238 + $0x174] sm:$0xf]
      %v3333 = vld [vmem:[%s3238 + $0x178] sm:$0xf]
      %v3334 = vld [vmem:[%s3238 + $0x17c] sm:$0xf]
      %v3335 = vld [vmem:[%s3238 + $0x180] sm:$0xf]
      %v3336 = vld [vmem:[%s3238 + $0x184] sm:$0xf]
      %v3337 = vld [vmem:[%s3238 + $0x188] sm:$0xf]
      %v3338 = vld [vmem:[%s3238 + $0x18c] sm:$0xf]
      %v3339 = vld [vmem:[%s3238 + $0x190] sm:$0xf]
      %v3340 = vld [vmem:[%s3238 + $0x194] sm:$0xf]
      %v3341 = vld [vmem:[%s3238 + $0x198] sm:$0xf]
      %v3342 = vld [vmem:[%s3238 + $0x19c] sm:$0xf]
      %v3343 = vld [vmem:[%s3238 + $0x1a0] sm:$0xf]
      %v3344 = vld [vmem:[%s3238 + $0x1a4] sm:$0xf]
      %v3345 = vld [vmem:[%s3238 + $0x1a8] sm:$0xf]
      %v3346 = vld [vmem:[%s3238 + $0x1ac] sm:$0xf]
      %v3347 = vld [vmem:[%s3238 + $0x1b0] sm:$0xf]
      %v3348 = vld [vmem:[%s3238 + $0x1b4] sm:$0xf]
      %v3349 = vld [vmem:[%s3238 + $0x1b8] sm:$0xf]
      %v3350 = vld [vmem:[%s3238 + $0x1bc] sm:$0xf]
      %v3351 = vld [vmem:[%s3238 + $0x1c0] sm:$0xf]
      %v3352 = vld [vmem:[%s3238 + $0x1c4] sm:$0xf]
      %v3353 = vld [vmem:[%s3238 + $0x1c8] sm:$0xf]
      %v3354 = vld [vmem:[%s3238 + $0x1cc] sm:$0xf]
      %v3355 = vld [vmem:[%s3238 + $0x1d0] sm:$0xf]
      %v3356 = vld [vmem:[%s3238 + $0x1d4] sm:$0xf]
      %v3357 = vld [vmem:[%s3238 + $0x1d8] sm:$0xf]
      %v3358 = vld [vmem:[%s3238 + $0x1dc] sm:$0xf]
      %v3359 = vld [vmem:[%s3238 + $0x1e0] sm:$0xf]
      %v3360 = vld [vmem:[%s3238 + $0x1e4] sm:$0xf]
      %v3361 = vld [vmem:[%s3238 + $0x1e8] sm:$0xf]
      %v3362 = vld [vmem:[%s3238 + $0x1ec] sm:$0xf]
      %v3363 = vld [vmem:[%s3238 + $0x1f0] sm:$0xf]
      %v3364 = vld [vmem:[%s3238 + $0x1f4] sm:$0xf]
      %v3365 = vld [vmem:[%s3238 + $0x1f8] sm:$0xf]
      %v3366 = vld [vmem:[%s3238 + $0x1fc] sm:$0xf]
      %v3367 = vpack.c.bf16 %v3230, %v3230
      %v3368 = vpack.c.bf16 %v3231, %v3231
      %v3369 = vpack.c.bf16 %v3232, %v3232
      %v3370 = vpack.c.bf16 %v3233, %v3233
      %v3371 = vpack.c.bf16 %v3234, %v3234
      %v3372 = vpack.c.bf16 %v3235, %v3235
      %v3373 = vpack.c.bf16 %v3236, %v3236
      %v3374 = vpack.c.bf16 %v3237, %v3237
      %v3503 = vunpack.c.l.b16 %v3239
      %v3504 = vunpack.c.l.b16 %v3240
      %v3505 = vunpack.c.l.b16 %v3241
      %v3506 = vunpack.c.l.b16 %v3242
      %v3507 = vunpack.c.l.b16 %v3243
      %v3508 = vunpack.c.l.b16 %v3244
      %v3509 = vunpack.c.l.b16 %v3245
      %v3510 = vunpack.c.l.b16 %v3246
      %v3511 = vunpack.c.l.b16 %v3247
      %v3512 = vunpack.c.l.b16 %v3248
      %v3513 = vunpack.c.l.b16 %v3249
      %v3514 = vunpack.c.l.b16 %v3250
      %v3515 = vunpack.c.l.b16 %v3251
      %v3516 = vunpack.c.l.b16 %v3252
      %v3517 = vunpack.c.l.b16 %v3253
      %v3518 = vunpack.c.l.b16 %v3254
      %v3519 = vunpack.c.l.b16 %v3255
      %v3520 = vunpack.c.l.b16 %v3256
      %v3521 = vunpack.c.l.b16 %v3257
      %v3522 = vunpack.c.l.b16 %v3258
      %v3523 = vunpack.c.l.b16 %v3259
      %v3524 = vunpack.c.l.b16 %v3260
      %v3525 = vunpack.c.l.b16 %v3261
      %v3526 = vunpack.c.l.b16 %v3262
      %v3527 = vunpack.c.l.b16 %v3263
      %v3528 = vunpack.c.l.b16 %v3264
      %v3529 = vunpack.c.l.b16 %v3265
      %v3530 = vunpack.c.l.b16 %v3266
      %v3531 = vunpack.c.l.b16 %v3267
      %v3532 = vunpack.c.l.b16 %v3268
      %v3533 = vunpack.c.l.b16 %v3269
      %v3534 = vunpack.c.l.b16 %v3270
      %v3535 = vunpack.c.l.b16 %v3271
      %v3536 = vunpack.c.l.b16 %v3272
      %v3537 = vunpack.c.l.b16 %v3273
      %v3538 = vunpack.c.l.b16 %v3274
      %v3539 = vunpack.c.l.b16 %v3275
      %v3540 = vunpack.c.l.b16 %v3276
      %v3541 = vunpack.c.l.b16 %v3277
      %v3542 = vunpack.c.l.b16 %v3278
      %v3543 = vunpack.c.l.b16 %v3279
      %v3544 = vunpack.c.l.b16 %v3280
      %v3545 = vunpack.c.l.b16 %v3281
      %v3546 = vunpack.c.l.b16 %v3282
      %v3547 = vunpack.c.l.b16 %v3283
      %v3548 = vunpack.c.l.b16 %v3284
      %v3549 = vunpack.c.l.b16 %v3285
      %v3550 = vunpack.c.l.b16 %v3286
      %v3551 = vunpack.c.l.b16 %v3287
      %v3552 = vunpack.c.l.b16 %v3288
      %v3553 = vunpack.c.l.b16 %v3289
      %v3554 = vunpack.c.l.b16 %v3290
      %v3555 = vunpack.c.l.b16 %v3291
      %v3556 = vunpack.c.l.b16 %v3292
      %v3557 = vunpack.c.l.b16 %v3293
      %v3558 = vunpack.c.l.b16 %v3294
      %v3559 = vunpack.c.l.b16 %v3295
      %v3560 = vunpack.c.l.b16 %v3296
      %v3561 = vunpack.c.l.b16 %v3297
      %v3562 = vunpack.c.l.b16 %v3298
      %v3563 = vunpack.c.l.b16 %v3299
      %v3564 = vunpack.c.l.b16 %v3300
      %v3565 = vunpack.c.l.b16 %v3301
      %v3566 = vunpack.c.l.b16 %v3302
      %v3567 = vunpack.c.l.b16 %v3303
      %v3568 = vunpack.c.l.b16 %v3304
      %v3569 = vunpack.c.l.b16 %v3305
      %v3570 = vunpack.c.l.b16 %v3306
      %v3571 = vunpack.c.l.b16 %v3307
      %v3572 = vunpack.c.l.b16 %v3308
      %v3573 = vunpack.c.l.b16 %v3309
      %v3574 = vunpack.c.l.b16 %v3310
      %v3575 = vunpack.c.l.b16 %v3311
      %v3576 = vunpack.c.l.b16 %v3312
      %v3577 = vunpack.c.l.b16 %v3313
      %v3578 = vunpack.c.l.b16 %v3314
      %v3579 = vunpack.c.l.b16 %v3315
      %v3580 = vunpack.c.l.b16 %v3316
      %v3581 = vunpack.c.l.b16 %v3317
      %v3582 = vunpack.c.l.b16 %v3318
      %v3583 = vunpack.c.l.b16 %v3319
      %v3584 = vunpack.c.l.b16 %v3320
      %v3585 = vunpack.c.l.b16 %v3321
      %v3586 = vunpack.c.l.b16 %v3322
      %v3587 = vunpack.c.l.b16 %v3323
      %v3588 = vunpack.c.l.b16 %v3324
      %v3589 = vunpack.c.l.b16 %v3325
      %v3590 = vunpack.c.l.b16 %v3326
      %v3591 = vunpack.c.l.b16 %v3327
      %v3592 = vunpack.c.l.b16 %v3328
      %v3593 = vunpack.c.l.b16 %v3329
      %v3594 = vunpack.c.l.b16 %v3330
      %v3595 = vunpack.c.l.b16 %v3331
      %v3596 = vunpack.c.l.b16 %v3332
      %v3597 = vunpack.c.l.b16 %v3333
      %v3598 = vunpack.c.l.b16 %v3334
      %v3599 = vunpack.c.l.b16 %v3335
      %v3600 = vunpack.c.l.b16 %v3336
      %v3601 = vunpack.c.l.b16 %v3337
      %v3602 = vunpack.c.l.b16 %v3338
      %v3603 = vunpack.c.l.b16 %v3339
      %v3604 = vunpack.c.l.b16 %v3340
      %v3605 = vunpack.c.l.b16 %v3341
      %v3606 = vunpack.c.l.b16 %v3342
      %v3607 = vunpack.c.l.b16 %v3343
      %v3608 = vunpack.c.l.b16 %v3344
      %v3609 = vunpack.c.l.b16 %v3345
      %v3610 = vunpack.c.l.b16 %v3346
      %v3611 = vunpack.c.l.b16 %v3347
      %v3612 = vunpack.c.l.b16 %v3348
      %v3613 = vunpack.c.l.b16 %v3349
      %v3614 = vunpack.c.l.b16 %v3350
      %v3615 = vunpack.c.l.b16 %v3351
      %v3616 = vunpack.c.l.b16 %v3352
      %v3617 = vunpack.c.l.b16 %v3353
      %v3618 = vunpack.c.l.b16 %v3354
      %v3619 = vunpack.c.l.b16 %v3355
      %v3620 = vunpack.c.l.b16 %v3356
      %v3621 = vunpack.c.l.b16 %v3357
      %v3622 = vunpack.c.l.b16 %v3358
      %v3623 = vunpack.c.l.b16 %v3359
      %v3624 = vunpack.c.l.b16 %v3360
      %v3625 = vunpack.c.l.b16 %v3361
      %v3626 = vunpack.c.l.b16 %v3362
      %v3627 = vunpack.c.l.b16 %v3363
      %v3628 = vunpack.c.l.b16 %v3364
      %v3629 = vunpack.c.l.b16 %v3365
      %v3630 = vunpack.c.l.b16 %v3366
      %v3631 = vpack.c.b16 %v3504, %v3503
      %v3632 = vpack.c.b16 %v3506, %v3505
      %v3633 = vpack.c.b16 %v3508, %v3507
      %v3634 = vpack.c.b16 %v3510, %v3509
      %v3635 = vpack.c.b16 %v3512, %v3511
      %v3636 = vpack.c.b16 %v3514, %v3513
      %v3637 = vpack.c.b16 %v3516, %v3515
      %v3638 = vpack.c.b16 %v3518, %v3517
      %v3639 = vpack.c.b16 %v3520, %v3519
      %v3640 = vpack.c.b16 %v3522, %v3521
      %v3641 = vpack.c.b16 %v3524, %v3523
      %v3642 = vpack.c.b16 %v3526, %v3525
      %v3643 = vpack.c.b16 %v3528, %v3527
      %v3644 = vpack.c.b16 %v3530, %v3529
      %v3645 = vpack.c.b16 %v3532, %v3531
      %v3646 = vpack.c.b16 %v3534, %v3533
      %v3647 = vpack.c.b16 %v3536, %v3535
      %v3648 = vpack.c.b16 %v3538, %v3537
      %v3649 = vpack.c.b16 %v3540, %v3539
      %v3650 = vpack.c.b16 %v3542, %v3541
      %v3651 = vpack.c.b16 %v3544, %v3543
      %v3652 = vpack.c.b16 %v3546, %v3545
      %v3653 = vpack.c.b16 %v3548, %v3547
      %v3654 = vpack.c.b16 %v3550, %v3549
      %v3655 = vpack.c.b16 %v3552, %v3551
      %v3656 = vpack.c.b16 %v3554, %v3553
      %v3657 = vpack.c.b16 %v3556, %v3555
      %v3658 = vpack.c.b16 %v3558, %v3557
      %v3659 = vpack.c.b16 %v3560, %v3559
      %v3660 = vpack.c.b16 %v3562, %v3561
      %v3661 = vpack.c.b16 %v3564, %v3563
      %v3662 = vpack.c.b16 %v3566, %v3565
      %v3663 = vpack.c.b16 %v3568, %v3567
      %v3664 = vpack.c.b16 %v3570, %v3569
      %v3665 = vpack.c.b16 %v3572, %v3571
      %v3666 = vpack.c.b16 %v3574, %v3573
      %v3667 = vpack.c.b16 %v3576, %v3575
      %v3668 = vpack.c.b16 %v3578, %v3577
      %v3669 = vpack.c.b16 %v3580, %v3579
      %v3670 = vpack.c.b16 %v3582, %v3581
      %v3671 = vpack.c.b16 %v3584, %v3583
      %v3672 = vpack.c.b16 %v3586, %v3585
      %v3673 = vpack.c.b16 %v3588, %v3587
      %v3674 = vpack.c.b16 %v3590, %v3589
      %v3675 = vpack.c.b16 %v3592, %v3591
      %v3676 = vpack.c.b16 %v3594, %v3593
      %v3677 = vpack.c.b16 %v3596, %v3595
      %v3678 = vpack.c.b16 %v3598, %v3597
      %v3679 = vpack.c.b16 %v3600, %v3599
      %v3680 = vpack.c.b16 %v3602, %v3601
      %v3681 = vpack.c.b16 %v3604, %v3603
      %v3682 = vpack.c.b16 %v3606, %v3605
      %v3683 = vpack.c.b16 %v3608, %v3607
      %v3684 = vpack.c.b16 %v3610, %v3609
      %v3685 = vpack.c.b16 %v3612, %v3611
      %v3686 = vpack.c.b16 %v3614, %v3613
      %v3687 = vpack.c.b16 %v3616, %v3615
      %v3688 = vpack.c.b16 %v3618, %v3617
      %v3689 = vpack.c.b16 %v3620, %v3619
      %v3690 = vpack.c.b16 %v3622, %v3621
      %v3691 = vpack.c.b16 %v3624, %v3623
      %v3692 = vpack.c.b16 %v3626, %v3625
      %v3693 = vpack.c.b16 %v3628, %v3627
      %v3694 = vpack.c.b16 %v3630, %v3629
      %3759 = vmatpush.bf16.msra.mxu0 %v3638
      %3760 = vmatpush.bf16.msra.mxu0 %v3637
      %3761 = vmatpush.bf16.msra.mxu0 %v3636
      %3762 = vmatpush.bf16.msra.mxu0 %v3635
      %3763 = vmatpush.bf16.msra.mxu0 %v3634
      %3764 = vmatpush.bf16.msra.mxu0 %v3633
      %3765 = vmatpush.bf16.msra.mxu0 %v3632
      %3766 = vmatpush.bf16.msra.mxu0 %v3631
      %3767 = vmatmul.bf16.gmra.mxu0 %v3367
      %v3768 = vpop.f32.mrf.mxu0
      %v3769 = vadd.f32 0.0, %v3768
      %v3770 = vpop.f32.mrf.mxu0
      %3771 = vdwg.mxu0
      %3772 = vmatpush.bf16.msra.mxu0 %v3646
      %3773 = vmatpush.bf16.msra.mxu0 %v3645
      %3774 = vmatpush.bf16.msra.mxu0 %v3644
      %3775 = vmatpush.bf16.msra.mxu0 %v3643
      %3776 = vmatpush.bf16.msra.mxu0 %v3642
      %3777 = vmatpush.bf16.msra.mxu0 %v3641
      %3778 = vmatpush.bf16.msra.mxu0 %v3640
      %3779 = vmatpush.bf16.msra.mxu0 %v3639
      %3780 = vmatmul.bf16.gmra.mxu0 %v3368
      %v3781 = vpop.f32.mrf.mxu0
      %v3782 = vadd.f32 %v3769, %v3781
      %v3783 = vpop.f32.mrf.mxu0
      %3784 = vdwg.mxu0
      %3785 = vmatpush.bf16.msra.mxu0 %v3654
      %3786 = vmatpush.bf16.msra.mxu0 %v3653
      %3787 = vmatpush.bf16.msra.mxu0 %v3652
      %3788 = vmatpush.bf16.msra.mxu0 %v3651
      %3789 = vmatpush.bf16.msra.mxu0 %v3650
      %3790 = vmatpush.bf16.msra.mxu0 %v3649
      %3791 = vmatpush.bf16.msra.mxu0 %v3648
      %3792 = vmatpush.bf16.msra.mxu0 %v3647
      %3793 = vmatmul.bf16.gmra.mxu0 %v3369
      %v3794 = vpop.f32.mrf.mxu0
      %v3795 = vadd.f32 %v3782, %v3794
      %v3796 = vpop.f32.mrf.mxu0
      %3797 = vdwg.mxu0
      %3798 = vmatpush.bf16.msra.mxu0 %v3662
      %3799 = vmatpush.bf16.msra.mxu0 %v3661
      %3800 = vmatpush.bf16.msra.mxu0 %v3660
      %3801 = vmatpush.bf16.msra.mxu0 %v3659
      %3802 = vmatpush.bf16.msra.mxu0 %v3658
      %3803 = vmatpush.bf16.msra.mxu0 %v3657
      %3804 = vmatpush.bf16.msra.mxu0 %v3656
      %3805 = vmatpush.bf16.msra.mxu0 %v3655
      %3806 = vmatmul.bf16.gmra.mxu0 %v3370
      %v3807 = vpop.f32.mrf.mxu0
      %v3808 = vadd.f32 %v3795, %v3807
      %v3809 = vpop.f32.mrf.mxu0
      %3810 = vdwg.mxu0
      %3811 = vmatpush.bf16.msra.mxu0 %v3670
      %3812 = vmatpush.bf16.msra.mxu0 %v3669
      %3813 = vmatpush.bf16.msra.mxu0 %v3668
      %3814 = vmatpush.bf16.msra.mxu0 %v3667
      %3815 = vmatpush.bf16.msra.mxu0 %v3666
      %3816 = vmatpush.bf16.msra.mxu0 %v3665
      %3817 = vmatpush.bf16.msra.mxu0 %v3664
      %3818 = vmatpush.bf16.msra.mxu0 %v3663
      %3819 = vmatmul.bf16.gmra.mxu0 %v3371
      %v3820 = vpop.f32.mrf.mxu0
      %v3821 = vadd.f32 %v3808, %v3820
      %v3822 = vpop.f32.mrf.mxu0
      %3823 = vdwg.mxu0
      %3824 = vmatpush.bf16.msra.mxu0 %v3678
      %3825 = vmatpush.bf16.msra.mxu0 %v3677
      %3826 = vmatpush.bf16.msra.mxu0 %v3676
      %3827 = vmatpush.bf16.msra.mxu0 %v3675
      %3828 = vmatpush.bf16.msra.mxu0 %v3674
      %3829 = vmatpush.bf16.msra.mxu0 %v3673
      %3830 = vmatpush.bf16.msra.mxu0 %v3672
      %3831 = vmatpush.bf16.msra.mxu0 %v3671
      %3832 = vmatmul.bf16.gmra.mxu0 %v3372
      %v3833 = vpop.f32.mrf.mxu0
      %v3834 = vadd.f32 %v3821, %v3833
      %v3835 = vpop.f32.mrf.mxu0
      %3836 = vdwg.mxu0
      %3837 = vmatpush.bf16.msra.mxu0 %v3686
      %3838 = vmatpush.bf16.msra.mxu0 %v3685
      %3839 = vmatpush.bf16.msra.mxu0 %v3684
      %3840 = vmatpush.bf16.msra.mxu0 %v3683
      %3841 = vmatpush.bf16.msra.mxu0 %v3682
      %3842 = vmatpush.bf16.msra.mxu0 %v3681
      %3843 = vmatpush.bf16.msra.mxu0 %v3680
      %3844 = vmatpush.bf16.msra.mxu0 %v3679
      %3845 = vmatmul.bf16.gmra.mxu0 %v3373
      %v3846 = vpop.f32.mrf.mxu0
      %v3847 = vadd.f32 %v3834, %v3846
      %v3848 = vpop.f32.mrf.mxu0
      %3849 = vdwg.mxu0
      %3850 = vmatpush.bf16.msra.mxu0 %v3694
      %3851 = vmatpush.bf16.msra.mxu0 %v3693
      %3852 = vmatpush.bf16.msra.mxu0 %v3692
      %3853 = vmatpush.bf16.msra.mxu0 %v3691
      %3854 = vmatpush.bf16.msra.mxu0 %v3690
      %3855 = vmatpush.bf16.msra.mxu0 %v3689
      %3856 = vmatpush.bf16.msra.mxu0 %v3688
      %3857 = vmatpush.bf16.msra.mxu0 %v3687
      %3858 = vmatmul.bf16.gmra.mxu0 %v3374
      %v3859 = vpop.f32.mrf.mxu0
      %v3860 = vadd.f32 %v3847, %v3859
      %v3861 = vpop.f32.mrf.mxu0
      %3862 = vdwg.mxu0
      %v3863 = vadd.f32 %v2878, %v3860
      %v3864 = vld [vmem:[%s6 + $0x26] sm:$0x1]
      %v3866 = vperm.slane %v3864, 0
      %v3868 = vadd.f32 %v3863, %v3866
      %v3869 = vpack.c.bf16 %v3868, %v3868
      %v3870 = vld [vmem:[%s5] sm:$0xf]
      %v3871 = vld [vmem:[%s5 + $0x4] sm:$0xf]
      %v3872 = vld [vmem:[%s5 + $0x8] sm:$0xf]
      %v3873 = vld [vmem:[%s5 + $0xc] sm:$0xf]
      %v3874 = vld [vmem:[%s5 + $0x10] sm:$0xf]
      %v3875 = vld [vmem:[%s5 + $0x14] sm:$0xf]
      %v3876 = vld [vmem:[%s5 + $0x18] sm:$0xf]
      %v3877 = vld [vmem:[%s5 + $0x1c] sm:$0xf]
      %v3878 = vld [vmem:[%s6 + $0x2d] sm:$0x1]
      %v3880 = vperm.slane %v3878, 0
      %v3890 = vunpack.c.l.b16 %v3870
      %v3891 = vunpack.c.l.b16 %v3871
      %v3892 = vunpack.c.l.b16 %v3872
      %v3893 = vunpack.c.l.b16 %v3873
      %v3894 = vunpack.c.l.b16 %v3874
      %v3895 = vunpack.c.l.b16 %v3875
      %v3896 = vunpack.c.l.b16 %v3876
      %v3897 = vunpack.c.l.b16 %v3877
      %v3898 = vpack.c.b16 %v3891, %v3890
      %v3899 = vpack.c.b16 %v3893, %v3892
      %v3900 = vpack.c.b16 %v3895, %v3894
      %v3901 = vpack.c.b16 %v3897, %v3896
      %v3907 = vsel %vm432, %v3869, 0
      %3909 = vmatpush.bf16.msra.mxu0 0
      %3910 = vmatpush.bf16.msra.mxu0 0
      %3911 = vmatpush.bf16.msra.mxu0 0
      %3912 = vmatpush.bf16.msra.mxu0 0
      %3913 = vmatpush.bf16.msra.mxu0 %v3901
      %3914 = vmatpush.bf16.msra.mxu0 %v3900
      %3915 = vmatpush.bf16.msra.mxu0 %v3899
      %3916 = vmatpush.bf16.msra.mxu0 %v3898
      %3917 = vmatmul.bf16.gmra.mxu0 %v3907
      %v3918 = vpop.f32.mrf.mxu0
      %v3919 = vadd.f32 %v3880, %v3918
      %v3920 = vpop.f32.mrf.mxu0
      %3921 = vdwg.mxu0
      %v3922 = vmul.f32 %v3919, 0.5
      %v3923 = vmul.f32 %v3919, 0.70710677
      %v3924 = vand.u32 2147483647, %v3923
      %v3925 = vmul.f32 %v3924, 0.3275911
      %v3926 = vadd.f32 %v3925, 1.0
      %v3927 = vrcp.pop %v3926
      %v3928 = vmul.f32 %v3926, %v3927
      %v3929 = vsub.f32 1.0, %v3928
      %v3930 = vmul.f32 %v3927, %v3929
      %v3931 = vadd.f32 %v3927, %v3930
      %vm3932 = vweird.f32 %v3926
      %vm3933 = vweird.f32 %v3927
      %vm3934 = vmor %vm3932, %vm3933
      %v3935 = vsel %vm3934, %v3927, %v3931
      %v3936 = vand.u32 2147483647, %v3926
      %vm3937 = vcmp.eq.f32.partialorder %v3936, 8.507059e+37
      %v3938 = vand.u32 %v3926, 2147483648
      %v3939 = vor.u32 1.1754944e-38, %v3938
      %v3940 = vsel %vm3937, %v3939, %v3935
      %v3941 = vmul.f32 1.0, %v3940
      %v3942 = vmul.f32 %v3941, 1.0614054
      %v3943 = vsub.f32 %v3942, 1.4531521
      %v3944 = vmul.f32 %v3943, %v3941
      %v3945 = vadd.f32 %v3944, 1.4214138
      %v3946 = vmul.f32 %v3945, %v3941
      %v3947 = vsub.f32 %v3946, 0.28449672
      %v3948 = vmul.f32 %v3947, %v3941
      %v3949 = vadd.f32 %v3948, 0.2548296
      %v3950 = vmul.f32 %v3949, %v3941
      %v3951 = vsub.f32 0.0, %v3924
      %v3952 = vmul.f32 %v3951, %v3924
      %v3953 = vmul.f32 %v3952, 1.442695
      %v3954 = vpow.pop %v3953
      %v3955 = vmul.f32 %v3950, %v3954
      %v3956 = vsub.f32 1.0, %v3955
      %vm3957 = vcmp.lt.f32.partialorder %v3923, 0.0
      %v3958 = vsub.f32 0.0, %v3956
      %v3959 = vsel %vm3957, %v3958, %v3956
      %v3960 = vadd.f32 %v3959, 1.0
      %v3961 = vmul.f32 %v3922, %v3960
      %v3962 = vld [vmem:[%s5 + $0x20] sm:$0xf]
      %v3963 = vld [vmem:[%s5 + $0x24] sm:$0xf]
      %v3964 = vld [vmem:[%s5 + $0x28] sm:$0xf]
      %v3965 = vld [vmem:[%s5 + $0x2c] sm:$0xf]
      %v3966 = vld [vmem:[%s5 + $0x30] sm:$0xf]
      %v3967 = vld [vmem:[%s5 + $0x34] sm:$0xf]
      %v3968 = vld [vmem:[%s5 + $0x38] sm:$0xf]
      %v3969 = vld [vmem:[%s5 + $0x3c] sm:$0xf]
      %v3970 = vld [vmem:[%s5 + $0x40] sm:$0xf]
      %v3971 = vld [vmem:[%s5 + $0x44] sm:$0xf]
      %v3972 = vld [vmem:[%s5 + $0x48] sm:$0xf]
      %v3973 = vld [vmem:[%s5 + $0x4c] sm:$0xf]
      %v3974 = vld [vmem:[%s5 + $0x50] sm:$0xf]
      %v3975 = vld [vmem:[%s5 + $0x54] sm:$0xf]
      %v3976 = vld [vmem:[%s5 + $0x58] sm:$0xf]
      %v3977 = vld [vmem:[%s5 + $0x5c] sm:$0xf]
      %v3978 = vpack.c.bf16 %v3961, %v3961
      %v3979 = vld [vmem:[%s6 + $0x2e] sm:$0x1]
      %v3981 = vperm.slane %v3979, 0
      %v3999 = vunpack.c.l.b16 %v3962
      %v4000 = vunpack.c.l.b16 %v3963
      %v4001 = vunpack.c.l.b16 %v3964
      %v4002 = vunpack.c.l.b16 %v3965
      %v4003 = vunpack.c.l.b16 %v3966
      %v4004 = vunpack.c.l.b16 %v3967
      %v4005 = vunpack.c.l.b16 %v3968
      %v4006 = vunpack.c.l.b16 %v3969
      %v4007 = vunpack.c.l.b16 %v3970
      %v4008 = vunpack.c.l.b16 %v3971
      %v4009 = vunpack.c.l.b16 %v3972
      %v4010 = vunpack.c.l.b16 %v3973
      %v4011 = vunpack.c.l.b16 %v3974
      %v4012 = vunpack.c.l.b16 %v3975
      %v4013 = vunpack.c.l.b16 %v3976
      %v4014 = vunpack.c.l.b16 %v3977
      %v4015 = vpack.c.b16 %v4000, %v3999
      %v4016 = vpack.c.b16 %v4002, %v4001
      %v4017 = vpack.c.b16 %v4004, %v4003
      %v4018 = vpack.c.b16 %v4006, %v4005
      %v4019 = vpack.c.b16 %v4008, %v4007
      %v4020 = vpack.c.b16 %v4010, %v4009
      %v4021 = vpack.c.b16 %v4012, %v4011
      %v4022 = vpack.c.b16 %v4014, %v4013
      %4031 = vmatpush.bf16.msra.mxu0 %v4022
      %4032 = vmatpush.bf16.msra.mxu0 %v4021
      %4033 = vmatpush.bf16.msra.mxu0 %v4020
      %4034 = vmatpush.bf16.msra.mxu0 %v4019
      %4035 = vmatpush.bf16.msra.mxu0 %v4018
      %4036 = vmatpush.bf16.msra.mxu0 %v4017
      %4037 = vmatpush.bf16.msra.mxu0 %v4016
      %4038 = vmatpush.bf16.msra.mxu0 %v4015
      %4039 = vmatmul.bf16.gmra.mxu0 %v3978
      %v4040 = vpop.f32.mrf.mxu0
      %v4041 = vadd.f32 %v3981, %v4040
      %v4042 = vpop.f32.mrf.mxu0
      %4043 = vdwg.mxu0
      %v4044 = vmul.f32 %v4041, 0.5
      %v4045 = vmul.f32 %v4041, 0.70710677
      %v4046 = vand.u32 2147483647, %v4045
      %v4047 = vmul.f32 %v4046, 0.3275911
      %v4048 = vadd.f32 %v4047, 1.0
      %v4049 = vrcp.pop %v4048
      %v4050 = vmul.f32 %v4048, %v4049
      %v4051 = vsub.f32 1.0, %v4050
      %v4052 = vmul.f32 %v4049, %v4051
      %v4053 = vadd.f32 %v4049, %v4052
      %vm4054 = vweird.f32 %v4048
      %vm4055 = vweird.f32 %v4049
      %vm4056 = vmor %vm4054, %vm4055
      %v4057 = vsel %vm4056, %v4049, %v4053
      %v4058 = vand.u32 2147483647, %v4048
      %vm4059 = vcmp.eq.f32.partialorder %v4058, 8.507059e+37
      %v4060 = vand.u32 %v4048, 2147483648
      %v4061 = vor.u32 1.1754944e-38, %v4060
      %v4062 = vsel %vm4059, %v4061, %v4057
      %v4063 = vmul.f32 1.0, %v4062
      %v4064 = vmul.f32 %v4063, 1.0614054
      %v4065 = vsub.f32 %v4064, 1.4531521
      %v4066 = vmul.f32 %v4065, %v4063
      %v4067 = vadd.f32 %v4066, 1.4214138
      %v4068 = vmul.f32 %v4067, %v4063
      %v4069 = vsub.f32 %v4068, 0.28449672
      %v4070 = vmul.f32 %v4069, %v4063
      %v4071 = vadd.f32 %v4070, 0.2548296
      %v4072 = vmul.f32 %v4071, %v4063
      %v4073 = vsub.f32 0.0, %v4046
      %v4074 = vmul.f32 %v4073, %v4046
      %v4075 = vmul.f32 %v4074, 1.442695
      %v4076 = vpow.pop %v4075
      %v4077 = vmul.f32 %v4072, %v4076
      %v4078 = vsub.f32 1.0, %v4077
      %vm4079 = vcmp.lt.f32.partialorder %v4045, 0.0
      %v4080 = vsub.f32 0.0, %v4078
      %v4081 = vsel %vm4079, %v4080, %v4078
      %v4082 = vadd.f32 %v4081, 1.0
      %v4083 = vmul.f32 %v4044, %v4082
      %v4084 = vld [vmem:[%s6 + $0x2f] sm:$0x1]
      %v4085 = vld [vmem:[%s6 + $0x30] sm:$0x1]
      %4086 = vadd.xlane.f32.xlu0 %v4083
      %v4087 = vpop.xlane.xlu0 %4086
      %v4088 = vrcp.pop 128.0
      %v4089 = vmul.f32 128.0, %v4088
      %v4090 = vsub.f32 1.0, %v4089
      %v4091 = vmul.f32 %v4088, %v4090
      %v4092 = vadd.f32 %v4088, %v4091
      %vm4093 = vweird.f32 %v4088
      %v4094 = vsel %vm4093, %v4088, %v4092
      %v4095 = vmul.f32 %v4087, %v4094
      %v4096 = vsub.f32 %v4083, %v4095
      %v4097 = vmul.f32 %v4096, %v4096
      %4098 = vadd.xlane.f32.xlu0 %v4097
      %v4099 = vpop.xlane.xlu0 %4098
      %v4100 = vmul.f32 %v4099, %v4094
      %v4101 = vadd.f32 %v4100, 1e-05
      %v4102 = vrsqrt.pop %v4101
      %v4103 = vmul.f32 %v4102, %v4101
      %v4104 = vmul.f32 %v4103, %v4102
      %v4105 = vmul.f32 0.5, %v4104
      %v4106 = vsub.f32 1.5, %v4105
      %v4107 = vmul.f32 %v4102, %v4106
      %vm4108 = vweird.f32 %v4101
      %vm4109 = vweird.f32 %v4102
      %vm4110 = vmor %vm4108, %vm4109
      %v4111 = vsel %vm4110, %v4102, %v4107
      %v4112 = vmul.f32 %v4096, %v4111
      %v4114 = vperm.slane %v4084, 0
      %v4116 = vmul.f32 %v4112, %v4114
      %v4118 = vperm.slane %v4085, 0
      %v4120 = vadd.f32 %v4116, %v4118
      %v4121 = vld [vmem:[%s5 + $0xc0] sm:$0xf]
      %v4122 = vld [vmem:[%s5 + $0xc4] sm:$0xf]
      %v4123 = vld [vmem:[%s5 + $0xc8] sm:$0xf]
      %v4124 = vld [vmem:[%s5 + $0xcc] sm:$0xf]
      %v4125 = vld [vmem:[%s5 + $0xd0] sm:$0xf]
      %v4126 = vld [vmem:[%s5 + $0xd4] sm:$0xf]
      %v4127 = vld [vmem:[%s5 + $0xd8] sm:$0xf]
      %v4128 = vld [vmem:[%s5 + $0xdc] sm:$0xf]
      %v4129 = vld [vmem:[%s5 + $0xe0] sm:$0xf]
      %v4130 = vld [vmem:[%s5 + $0xe4] sm:$0xf]
      %v4131 = vld [vmem:[%s5 + $0xe8] sm:$0xf]
      %v4132 = vld [vmem:[%s5 + $0xec] sm:$0xf]
      %v4133 = vld [vmem:[%s5 + $0xf0] sm:$0xf]
      %v4134 = vld [vmem:[%s5 + $0xf4] sm:$0xf]
      %v4135 = vld [vmem:[%s5 + $0xf8] sm:$0xf]
      %v4136 = vld [vmem:[%s5 + $0xfc] sm:$0xf]
      %v4137 = vpack.c.bf16 %v4120, %v4120
      %v4138 = vld [vmem:[%s6 + $0x31] sm:$0x1]
      %v4140 = vperm.slane %v4138, 0
      %v4158 = vunpack.c.l.b16 %v4121
      %v4159 = vunpack.c.l.b16 %v4122
      %v4160 = vunpack.c.l.b16 %v4123
      %v4161 = vunpack.c.l.b16 %v4124
      %v4162 = vunpack.c.l.b16 %v4125
      %v4163 = vunpack.c.l.b16 %v4126
      %v4164 = vunpack.c.l.b16 %v4127
      %v4165 = vunpack.c.l.b16 %v4128
      %v4166 = vunpack.c.l.b16 %v4129
      %v4167 = vunpack.c.l.b16 %v4130
      %v4168 = vunpack.c.l.b16 %v4131
      %v4169 = vunpack.c.l.b16 %v4132
      %v4170 = vunpack.c.l.b16 %v4133
      %v4171 = vunpack.c.l.b16 %v4134
      %v4172 = vunpack.c.l.b16 %v4135
      %v4173 = vunpack.c.l.b16 %v4136
      %v4174 = vpack.c.b16 %v4159, %v4158
      %v4175 = vpack.c.b16 %v4161, %v4160
      %v4176 = vpack.c.b16 %v4163, %v4162
      %v4177 = vpack.c.b16 %v4165, %v4164
      %v4178 = vpack.c.b16 %v4167, %v4166
      %v4179 = vpack.c.b16 %v4169, %v4168
      %v4180 = vpack.c.b16 %v4171, %v4170
      %v4181 = vpack.c.b16 %v4173, %v4172
      %4190 = vmatpush.bf16.msra.mxu0 %v4181
      %4191 = vmatpush.bf16.msra.mxu0 %v4180
      %4192 = vmatpush.bf16.msra.mxu0 %v4179
      %4193 = vmatpush.bf16.msra.mxu0 %v4178
      %4194 = vmatpush.bf16.msra.mxu0 %v4177
      %4195 = vmatpush.bf16.msra.mxu0 %v4176
      %4196 = vmatpush.bf16.msra.mxu0 %v4175
      %4197 = vmatpush.bf16.msra.mxu0 %v4174
      %4198 = vmatmul.bf16.gmra.mxu0 %v4137
      %v4199 = vpop.f32.mrf.mxu0
      %v4200 = vadd.f32 %v4140, %v4199
      %v4201 = vpop.f32.mrf.mxu0
      %4202 = vdwg.mxu0
      %vm4203 = vcmask 23552
      %4204 = vst.msk [vmem:[%s306] sm:$0xff] %vm4203, %v4200
      %v4205 = vld [vmem:[%s4 + $0x4] sm:$0x4]
      %v4206 = vld [vmem:[%s6 + $0x37] sm:$0x1]
      %4208 = vset.pattern.permute.xlu0 0
      %4209 = vperm.xlu0 %4208, %v4206
      %v4210 = vpop.permute.xlu0 %4209
      %v4212 = vperm.slane %v4210, 0
      %v4214 = vunpack.c.l.b16 %v4205
      %v4215 = vpack.c.b16 %v4214, %v4214
      %v4216 = vrot.slane %v4215, 2
      %v4218 = vsel %vm432, %v4216, 0
      %4220 = vmatpush.bf16.xpose.msra.mxu0 0
      %4221 = vmatpush.bf16.xpose.msra.mxu0 0
      %4222 = vmatpush.bf16.xpose.msra.mxu0 0
      %4223 = vmatpush.bf16.xpose.msra.mxu0 0
      %4224 = vmatpush.bf16.xpose.msra.mxu0 0
      %4225 = vmatpush.bf16.xpose.msra.mxu0 0
      %4226 = vmatpush.bf16.xpose.msra.mxu0 0
      %4227 = vmatpush.bf16.xpose.msra.mxu0 %v3907
      %4228 = vmatmul.bf16.gmra.mxu0 %v4218
      %v4229 = vpop.f32.mrf.mxu0
      %v4230 = vadd.f32 %v4212, %v4229
      %v4231 = vpop.f32.mrf.mxu0
      %4232 = vdwg.mxu0
      %vm4233 = vcmask 57344
      %v4234 = vsel %vm4233, %v4230, -inf
      %4235 = vmax.xlane.f32.xlu0 %v4234
      %v4236 = vpop.xlane.xlu0 %4235
      %v4237 = vsub.f32 %v4230, %v4236
      %v4238 = vmul.f32 %v4237, 1.442695
      %v4239 = vpow.pop %v4238
      %v4240 = vsel %vm4233, %v4239, 0.0
      %4241 = vadd.xlane.f32.xlu0 %v4240
      %v4242 = vpop.xlane.xlu0 %4241
      %v4243 = vrcp.pop %v4242
      %v4244 = vmul.f32 %v4242, %v4243
      %v4245 = vsub.f32 1.0, %v4244
      %v4246 = vmul.f32 %v4243, %v4245
      %v4247 = vadd.f32 %v4243, %v4246
      %vm4248 = vweird.f32 %v4242
      %vm4249 = vweird.f32 %v4243
      %vm4250 = vmor %vm4248, %vm4249
      %v4251 = vsel %vm4250, %v4243, %v4247
      %v4252 = vand.u32 2147483647, %v4242
      %vm4253 = vcmp.eq.f32.partialorder %v4252, 8.507059e+37
      %v4254 = vand.u32 %v4242, 2147483648
      %v4255 = vor.u32 1.1754944e-38, %v4254
      %v4256 = vsel %vm4253, %v4255, %v4251
      %v4257 = vmul.f32 %v4239, %v4256
      %v4258 = vpack.c.bf16 %v4257, %v4257
      %v4260 = vsel %vm578, %v4258, 0
      %v4262 = vsel %vm608, %v3869, 0
      %4264 = vmatpush.bf16.msra.mxu0 0
      %4265 = vmatpush.bf16.msra.mxu0 0
      %4266 = vmatpush.bf16.msra.mxu0 0
      %4267 = vmatpush.bf16.msra.mxu0 0
      %4268 = vmatpush.bf16.msra.mxu0 0
      %4269 = vmatpush.bf16.msra.mxu0 0
      %4270 = vmatpush.bf16.msra.mxu0 0
      %4271 = vmatpush.bf16.msra.mxu0 %v4262
      %4272 = vmatmul.bf16.gmra.mxu0 %v4260
      %v4273 = vpop.f32.mrf.mxu0
      %v4274 = vadd.f32 0.0, %v4273
      %v4275 = vpop.f32.mrf.mxu0
      %4276 = vdwg.mxu0
      %v4277 = vld [vmem:[%s5 + $0x60] sm:$0xf]
      %v4278 = vld [vmem:[%s5 + $0x64] sm:$0xf]
      %v4279 = vld [vmem:[%s5 + $0x68] sm:$0xf]
      %v4280 = vld [vmem:[%s5 + $0x6c] sm:$0xf]
      %v4281 = vld [vmem:[%s5 + $0x70] sm:$0xf]
      %v4282 = vld [vmem:[%s5 + $0x74] sm:$0xf]
      %v4283 = vld [vmem:[%s5 + $0x78] sm:$0xf]
      %v4284 = vld [vmem:[%s5 + $0x7c] sm:$0xf]
      %v4285 = vpack.c.bf16 %v4274, %v4274
      %v4286 = vld [vmem:[%s6 + $0x32] sm:$0x1]
      %v4295 = vunpack.c.l.b16 %v4277
      %v4296 = vunpack.c.l.b16 %v4278
      %v4297 = vunpack.c.l.b16 %v4279
      %v4298 = vunpack.c.l.b16 %v4280
      %v4299 = vunpack.c.l.b16 %v4281
      %v4300 = vunpack.c.l.b16 %v4282
      %v4301 = vunpack.c.l.b16 %v4283
      %v4302 = vunpack.c.l.b16 %v4284
      %v4303 = vpack.c.b16 %v4296, %v4295
      %v4304 = vpack.c.b16 %v4298, %v4297
      %v4305 = vpack.c.b16 %v4300, %v4299
      %v4306 = vpack.c.b16 %v4302, %v4301
      %v4312 = vsel %vm432, %v4285, 0
      %4314 = vmatpush.bf16.msra.mxu0 0
      %4315 = vmatpush.bf16.msra.mxu0 0
      %4316 = vmatpush.bf16.msra.mxu0 0
      %4317 = vmatpush.bf16.msra.mxu0 0
      %4318 = vmatpush.bf16.msra.mxu0 %v4306
      %4319 = vmatpush.bf16.msra.mxu0 %v4305
      %4320 = vmatpush.bf16.msra.mxu0 %v4304
      %4321 = vmatpush.bf16.msra.mxu0 %v4303
      %4322 = vmatmul.bf16.gmra.mxu0 %v4312
      %v4323 = vpop.f32.mrf.mxu0
      %v4324 = vadd.f32 %v4286, %v4323
      %v4325 = vpop.f32.mrf.mxu0
      %4326 = vdwg.mxu0
      %v4327 = vmul.f32 %v4324, 0.5
      %v4328 = vmul.f32 %v4324, 0.70710677
      %v4329 = vand.u32 2147483647, %v4328
      %v4330 = vmul.f32 %v4329, 0.3275911
      %v4331 = vadd.f32 %v4330, 1.0
      %v4332 = vrcp.pop %v4331
      %v4333 = vmul.f32 %v4331, %v4332
      %v4334 = vsub.f32 1.0, %v4333
      %v4335 = vmul.f32 %v4332, %v4334
      %v4336 = vadd.f32 %v4332, %v4335
      %vm4337 = vweird.f32 %v4331
      %vm4338 = vweird.f32 %v4332
      %vm4339 = vmor %vm4337, %vm4338
      %v4340 = vsel %vm4339, %v4332, %v4336
      %v4341 = vand.u32 2147483647, %v4331
      %vm4342 = vcmp.eq.f32.partialorder %v4341, 8.507059e+37
      %v4343 = vand.u32 %v4331, 2147483648
      %v4344 = vor.u32 1.1754944e-38, %v4343
      %v4345 = vsel %vm4342, %v4344, %v4340
      %v4346 = vmul.f32 1.0, %v4345
      %v4347 = vmul.f32 %v4346, 1.0614054
      %v4348 = vsub.f32 %v4347, 1.4531521
      %v4349 = vmul.f32 %v4348, %v4346
      %v4350 = vadd.f32 %v4349, 1.4214138
      %v4351 = vmul.f32 %v4350, %v4346
      %v4352 = vsub.f32 %v4351, 0.28449672
      %v4353 = vmul.f32 %v4352, %v4346
      %v4354 = vadd.f32 %v4353, 0.2548296
      %v4355 = vmul.f32 %v4354, %v4346
      %v4356 = vsub.f32 0.0, %v4329
      %v4357 = vmul.f32 %v4356, %v4329
      %v4358 = vmul.f32 %v4357, 1.442695
      %v4359 = vpow.pop %v4358
      %v4360 = vmul.f32 %v4355, %v4359
      %v4361 = vsub.f32 1.0, %v4360
      %vm4362 = vcmp.lt.f32.partialorder %v4328, 0.0
      %v4363 = vsub.f32 0.0, %v4361
      %v4364 = vsel %vm4362, %v4363, %v4361
      %v4365 = vadd.f32 %v4364, 1.0
      %v4366 = vmul.f32 %v4327, %v4365
      %v4367 = vld [vmem:[%s5 + $0x80] sm:$0xf]
      %v4368 = vld [vmem:[%s5 + $0x84] sm:$0xf]
      %v4369 = vld [vmem:[%s5 + $0x88] sm:$0xf]
      %v4370 = vld [vmem:[%s5 + $0x8c] sm:$0xf]
      %v4371 = vld [vmem:[%s5 + $0x90] sm:$0xf]
      %v4372 = vld [vmem:[%s5 + $0x94] sm:$0xf]
      %v4373 = vld [vmem:[%s5 + $0x98] sm:$0xf]
      %v4374 = vld [vmem:[%s5 + $0x9c] sm:$0xf]
      %v4375 = vld [vmem:[%s5 + $0xa0] sm:$0xf]
      %v4376 = vld [vmem:[%s5 + $0xa4] sm:$0xf]
      %v4377 = vld [vmem:[%s5 + $0xa8] sm:$0xf]
      %v4378 = vld [vmem:[%s5 + $0xac] sm:$0xf]
      %v4379 = vld [vmem:[%s5 + $0xb0] sm:$0xf]
      %v4380 = vld [vmem:[%s5 + $0xb4] sm:$0xf]
      %v4381 = vld [vmem:[%s5 + $0xb8] sm:$0xf]
      %v4382 = vld [vmem:[%s5 + $0xbc] sm:$0xf]
      %v4383 = vpack.c.bf16 %v4366, %v4366
      %v4384 = vld [vmem:[%s6 + $0x33] sm:$0x1]
      %v4401 = vunpack.c.l.b16 %v4367
      %v4402 = vunpack.c.l.b16 %v4368
      %v4403 = vunpack.c.l.b16 %v4369
      %v4404 = vunpack.c.l.b16 %v4370
      %v4405 = vunpack.c.l.b16 %v4371
      %v4406 = vunpack.c.l.b16 %v4372
      %v4407 = vunpack.c.l.b16 %v4373
      %v4408 = vunpack.c.l.b16 %v4374
      %v4409 = vunpack.c.l.b16 %v4375
      %v4410 = vunpack.c.l.b16 %v4376
      %v4411 = vunpack.c.l.b16 %v4377
      %v4412 = vunpack.c.l.b16 %v4378
      %v4413 = vunpack.c.l.b16 %v4379
      %v4414 = vunpack.c.l.b16 %v4380
      %v4415 = vunpack.c.l.b16 %v4381
      %v4416 = vunpack.c.l.b16 %v4382
      %v4417 = vpack.c.b16 %v4402, %v4401
      %v4418 = vpack.c.b16 %v4404, %v4403
      %v4419 = vpack.c.b16 %v4406, %v4405
      %v4420 = vpack.c.b16 %v4408, %v4407
      %v4421 = vpack.c.b16 %v4410, %v4409
      %v4422 = vpack.c.b16 %v4412, %v4411
      %v4423 = vpack.c.b16 %v4414, %v4413
      %v4424 = vpack.c.b16 %v4416, %v4415
      %4433 = vmatpush.bf16.msra.mxu0 %v4424
      %4434 = vmatpush.bf16.msra.mxu0 %v4423
      %4435 = vmatpush.bf16.msra.mxu0 %v4422
      %4436 = vmatpush.bf16.msra.mxu0 %v4421
      %4437 = vmatpush.bf16.msra.mxu0 %v4420
      %4438 = vmatpush.bf16.msra.mxu0 %v4419
      %4439 = vmatpush.bf16.msra.mxu0 %v4418
      %4440 = vmatpush.bf16.msra.mxu0 %v4417
      %4441 = vmatmul.bf16.gmra.mxu0 %v4383
      %v4442 = vpop.f32.mrf.mxu0
      %v4443 = vadd.f32 %v4384, %v4442
      %v4444 = vpop.f32.mrf.mxu0
      %4445 = vdwg.mxu0
      %v4446 = vmul.f32 %v4443, 0.5
      %v4447 = vmul.f32 %v4443, 0.70710677
      %v4448 = vand.u32 2147483647, %v4447
      %v4449 = vmul.f32 %v4448, 0.3275911
      %v4450 = vadd.f32 %v4449, 1.0
      %v4451 = vrcp.pop %v4450
      %v4452 = vmul.f32 %v4450, %v4451
      %v4453 = vsub.f32 1.0, %v4452
      %v4454 = vmul.f32 %v4451, %v4453
      %v4455 = vadd.f32 %v4451, %v4454
      %vm4456 = vweird.f32 %v4450
      %vm4457 = vweird.f32 %v4451
      %vm4458 = vmor %vm4456, %vm4457
      %v4459 = vsel %vm4458, %v4451, %v4455
      %v4460 = vand.u32 2147483647, %v4450
      %vm4461 = vcmp.eq.f32.partialorder %v4460, 8.507059e+37
      %v4462 = vand.u32 %v4450, 2147483648
      %v4463 = vor.u32 1.1754944e-38, %v4462
      %v4464 = vsel %vm4461, %v4463, %v4459
      %v4465 = vmul.f32 1.0, %v4464
      %v4466 = vmul.f32 %v4465, 1.0614054
      %v4467 = vsub.f32 %v4466, 1.4531521
      %v4468 = vmul.f32 %v4467, %v4465
      %v4469 = vadd.f32 %v4468, 1.4214138
      %v4470 = vmul.f32 %v4469, %v4465
      %v4471 = vsub.f32 %v4470, 0.28449672
      %v4472 = vmul.f32 %v4471, %v4465
      %v4473 = vadd.f32 %v4472, 0.2548296
      %v4474 = vmul.f32 %v4473, %v4465
      %v4475 = vsub.f32 0.0, %v4448
      %v4476 = vmul.f32 %v4475, %v4448
      %v4477 = vmul.f32 %v4476, 1.442695
      %v4478 = vpow.pop %v4477
      %v4479 = vmul.f32 %v4474, %v4478
      %v4480 = vsub.f32 1.0, %v4479
      %vm4481 = vcmp.lt.f32.partialorder %v4447, 0.0
      %v4482 = vsub.f32 0.0, %v4480
      %v4483 = vsel %vm4481, %v4482, %v4480
      %v4484 = vadd.f32 %v4483, 1.0
      %v4485 = vmul.f32 %v4446, %v4484
      %v4486 = vld [vmem:[%s6 + $0x34] sm:$0x1]
      %v4487 = vld [vmem:[%s6 + $0x35] sm:$0x1]
      %vm4488 = vcmask 1040384
      %v4489 = vsel %vm4488, %v4485, 0.0
      %4490 = vadd.xlane.f32.xlu0 %v4489
      %v4491 = vpop.xlane.xlu0 %4490
      %v4492 = vmul.f32 %v4491, %v4094
      %v4493 = vsub.f32 %v4485, %v4492
      %v4494 = vmul.f32 %v4493, %v4493
      %v4495 = vsel %vm4488, %v4494, 0.0
      %4496 = vadd.xlane.f32.xlu0 %v4495
      %v4497 = vpop.xlane.xlu0 %4496
      %v4498 = vmul.f32 %v4497, %v4094
      %v4499 = vadd.f32 %v4498, 1e-05
      %v4500 = vrsqrt.pop %v4499
      %v4501 = vmul.f32 %v4500, %v4499
      %v4502 = vmul.f32 %v4501, %v4500
      %v4503 = vmul.f32 0.5, %v4502
      %v4504 = vsub.f32 1.5, %v4503
      %v4505 = vmul.f32 %v4500, %v4504
      %vm4506 = vweird.f32 %v4499
      %vm4507 = vweird.f32 %v4500
      %vm4508 = vmor %vm4506, %vm4507
      %v4509 = vsel %vm4508, %v4500, %v4505
      %v4510 = vmul.f32 %v4493, %v4509
      %v4511 = vmul.f32 %v4510, %v4486
      %v4512 = vadd.f32 %v4511, %v4487
      %v4513 = vld [vmem:[%s5 + $0xc0] sm:$0xf]
      %v4514 = vld [vmem:[%s5 + $0xc4] sm:$0xf]
      %v4515 = vld [vmem:[%s5 + $0xc8] sm:$0xf]
      %v4516 = vld [vmem:[%s5 + $0xcc] sm:$0xf]
      %v4517 = vld [vmem:[%s5 + $0xd0] sm:$0xf]
      %v4518 = vld [vmem:[%s5 + $0xd4] sm:$0xf]
      %v4519 = vld [vmem:[%s5 + $0xd8] sm:$0xf]
      %v4520 = vld [vmem:[%s5 + $0xdc] sm:$0xf]
      %v4521 = vld [vmem:[%s5 + $0xe0] sm:$0xf]
      %v4522 = vld [vmem:[%s5 + $0xe4] sm:$0xf]
      %v4523 = vld [vmem:[%s5 + $0xe8] sm:$0xf]
      %v4524 = vld [vmem:[%s5 + $0xec] sm:$0xf]
      %v4525 = vld [vmem:[%s5 + $0xf0] sm:$0xf]
      %v4526 = vld [vmem:[%s5 + $0xf4] sm:$0xf]
      %v4527 = vld [vmem:[%s5 + $0xf8] sm:$0xf]
      %v4528 = vld [vmem:[%s5 + $0xfc] sm:$0xf]
      %v4529 = vpack.c.bf16 %v4512, %v4512
      %v4530 = vld [vmem:[%s6 + $0x36] sm:$0x1]
      %v4547 = vunpack.c.l.b16 %v4513
      %v4548 = vunpack.c.l.b16 %v4514
      %v4549 = vunpack.c.l.b16 %v4515
      %v4550 = vunpack.c.l.b16 %v4516
      %v4551 = vunpack.c.l.b16 %v4517
      %v4552 = vunpack.c.l.b16 %v4518
      %v4553 = vunpack.c.l.b16 %v4519
      %v4554 = vunpack.c.l.b16 %v4520
      %v4555 = vunpack.c.l.b16 %v4521
      %v4556 = vunpack.c.l.b16 %v4522
      %v4557 = vunpack.c.l.b16 %v4523
      %v4558 = vunpack.c.l.b16 %v4524
      %v4559 = vunpack.c.l.b16 %v4525
      %v4560 = vunpack.c.l.b16 %v4526
      %v4561 = vunpack.c.l.b16 %v4527
      %v4562 = vunpack.c.l.b16 %v4528
      %v4563 = vpack.c.b16 %v4548, %v4547
      %v4564 = vpack.c.b16 %v4550, %v4549
      %v4565 = vpack.c.b16 %v4552, %v4551
      %v4566 = vpack.c.b16 %v4554, %v4553
      %v4567 = vpack.c.b16 %v4556, %v4555
      %v4568 = vpack.c.b16 %v4558, %v4557
      %v4569 = vpack.c.b16 %v4560, %v4559
      %v4570 = vpack.c.b16 %v4562, %v4561
      %4571 = vrot.lane.b32.xlu0 %v4563, 125
      %v4572 = vpop.permute.xlu0 %4571
      %4573 = vrot.lane.b32.xlu0 %v4564, 125
      %v4574 = vpop.permute.xlu0 %4573
      %4575 = vrot.lane.b32.xlu0 %v4565, 125
      %v4576 = vpop.permute.xlu0 %4575
      %4577 = vrot.lane.b32.xlu0 %v4566, 125
      %v4578 = vpop.permute.xlu0 %4577
      %4579 = vrot.lane.b32.xlu0 %v4567, 125
      %v4580 = vpop.permute.xlu0 %4579
      %4581 = vrot.lane.b32.xlu0 %v4568, 125
      %v4582 = vpop.permute.xlu0 %4581
      %4583 = vrot.lane.b32.xlu0 %v4569, 125
      %v4584 = vpop.permute.xlu0 %4583
      %4585 = vrot.lane.b32.xlu0 %v4570, 125
      %v4586 = vpop.permute.xlu0 %4585
      %4595 = vmatpush.bf16.msra.mxu0 %v4586
      %4596 = vmatpush.bf16.msra.mxu0 %v4584
      %4597 = vmatpush.bf16.msra.mxu0 %v4582
      %4598 = vmatpush.bf16.msra.mxu0 %v4580
      %4599 = vmatpush.bf16.msra.mxu0 %v4578
      %4600 = vmatpush.bf16.msra.mxu0 %v4576
      %4601 = vmatpush.bf16.msra.mxu0 %v4574
      %4602 = vmatpush.bf16.msra.mxu0 %v4572
      %4603 = vmatmul.bf16.gmra.mxu0 %v4529
      %v4604 = vpop.f32.mrf.mxu0
      %v4605 = vadd.f32 %v4530, %v4604
      %v4606 = vpop.f32.mrf.mxu0
      %4607 = vdwg.mxu0
      %vm4608 = vcmask 0
      %4609 = vst.msk [vmem:[%s309] sm:$0x1] %vm4608, %v4605
      %p4610 = scmp.lt.s32.totalorder %s20, 1
      %s4611 = scalar_select %p4610, %s20, 1
      %s4612 = smul.addr %s4611, 8
      %s4613 = scalar_lea.vmem %s7, %s4612
      %p4614 = scmp.lt.s32.totalorder %s20, 1
      %s4615 = scalar_select %p4614, %s20, 1
      %s4616 = scalar_lea.vmem %s8, %s4615
      // Predicated region
      $region49: #{tpu_custom_call.1} parent=47 // pred_check
        %p4617 = pneg %p190
      $region50: #{tpu_custom_call.1} parent=47 // pred_check_branch
        %4619 = sbr.rel (%p4617) target = $region52
      $region51: #{tpu_custom_call.1} parent=47 // pred_region
        _
      $region52: #{tpu_custom_call.1} parent=47 // pred_fallthru
        _
      // Predicated region
      $region53: #{tpu_custom_call.1} parent=47 // pred_check
        %p4620 = pneg %p216
      $region54: #{tpu_custom_call.1} parent=47 // pred_check_branch
        %4622 = sbr.rel (%p4620) target = $region56
      $region55: #{tpu_custom_call.1} parent=47 // pred_region
        _
      $region56: #{tpu_custom_call.1} parent=47 // pred_fallthru
        _
    $region48: #{tpu_custom_call.1} parent=5 // pred_fallthru
      _
    %p4623 = scmp.le.s32.totalorder 2, %s15
    // Predicated region
    $region57: #{tpu_custom_call.1} parent=5 // pred_check
      %p4624 = pneg %p4623
    $region58: #{tpu_custom_call.1} parent=5 // pred_check_branch
      %4626 = sbr.rel (%p4624) target = $region60
    $region59: #{tpu_custom_call.1} parent=5 // pred_region
      %s4627 = ssub.s32 %s15, 2
      // Predicated region
      $region61: #{tpu_custom_call.1} parent=59 // pred_check
        %p4628 = pneg %p196
      $region62: #{tpu_custom_call.1} parent=59 // pred_check_branch
        %4630 = sbr.rel (%p4628) target = $region64
      $region63: #{tpu_custom_call.1} parent=59 // pred_region
        %p4631 = scmp.lt.s32.totalorder %s21, 1
        %s4632 = scalar_select %p4631, %s21, 1
        %s4633 = smul.addr %s4632, 8
        %s4634 = scalar_lea.vmem %s7, %s4633
      $region64: #{tpu_custom_call.1} parent=59 // pred_fallthru
        _
      // Predicated region
      $region65: #{tpu_custom_call.1} parent=59 // pred_check
        %p4635 = pneg %p222
      $region66: #{tpu_custom_call.1} parent=59 // pred_check_branch
        %4637 = sbr.rel (%p4635) target = $region68
      $region67: #{tpu_custom_call.1} parent=59 // pred_region
        %p4638 = scmp.lt.s32.totalorder %s21, 1
        %s4639 = scalar_select %p4638, %s21, 1
        %s4640 = scalar_lea.vmem %s8, %s4639
      $region68: #{tpu_custom_call.1} parent=59 // pred_fallthru
        _
    $region60: #{tpu_custom_call.1} parent=5 // pred_fallthru
      _
  $region6: #{tpu_custom_call.1} parent=0 // loop_footer
    %s19 = sadd.s32 1, %s15
  $region7: #{tpu_custom_call.1} parent=0 // loop_footer_branch
    %14 = sbr.rel target = $region3
  $region8: #{tpu_custom_call.1} parent=0 // loop_exit
    _

</llo_original>
